<compile_context>
chip_gen: v6e
topology: v6e:2x2x1
jax: 0.10.0
libtpu: 0.0.40
codegen_flags: <defaults>
</compile_context>

<pallas_src>
import jax
import jax.numpy as jnp
from jax import lax
from jax.experimental import pallas as pl
from jax.experimental.pallas import tpu as pltpu
import numpy as np

# ----------------------------- sizes ----------------------------------------
B, T = 16, 8          # batch, question length
NTOKEN, E = 32, 32    # vocab size, word-embedding dim
K, V = 16, 32         # num objects, visual feature dim
H = 32                # hidden / num_hid
H2 = 2 * H            # classifier hidden
C = 16                # num answer classes
G = 3 * H             # fused GRU gate width (z|r|n)

# weight-slab layout (rows; all rows padded to WCOLS=128 lanes)
WCOLS = 128
R_EWX = 0             # folded emb_table @ Wx   [NTOKEN, 3H]
R_UH = R_EWX + NTOKEN  # GRU hidden weights     [H, 3H]
R_WVP = R_UH + H       # v_att v-projection     [V, H]
R_WQ2 = R_WVP + V      # fused [wqp | wq]       [H, 2H]
R_WV = R_WQ2 + H       # v_net                  [V, H]
R_WC1 = R_WV + V       # classifier fc1         [H, H2]
R_WC2 = R_WC1 + H      # classifier fc2         [H2, C]
WROWS = R_WC2 + H2     # 256
BROWS = 8              # bias slab rows


# ----------------------------- Pallas kernel --------------------------------
def vqa_kernel(tok_ref, v_ref, labels_ref, w_ref, b_ref, out_ref, loss_ref):
    f32 = jnp.float32

    # ---- fused embedding gather + GRU input projection -----------------------
    # xp = one_hot(q) @ (emb_table @ Wx) + bg   (emb@Wx pre-folded in the slab)
    tok = tok_ref[...]                                       # [T*B, 1] int32, time-major
    iota = lax.broadcasted_iota(jnp.int32, (T * B, NTOKEN), 1)
    onehot = (iota == tok).astype(f32)                       # [T*B, NTOKEN]
    ewx = w_ref[R_EWX:R_EWX + NTOKEN, 0:G]                   # [NTOKEN, 3H]
    bg = b_ref[0:1, 0:G]                                     # [1, 3H] (bz|br|bh)
    xp = (jnp.dot(onehot, ewx, preferred_element_type=f32) + bg).reshape(T, B, G)

    # ---- question encoder: fused-gate GRU over T steps ------------------------
    uh = w_ref[R_UH:R_UH + H, 0:G]                           # [H, 3H]
    h = jnp.zeros((B, H), f32)
    for t in range(T):                                       # static unroll (T small)
        gx = xp[t]                                           # [B, 3H] contiguous slab
        gh = jnp.dot(h, uh, preferred_element_type=f32)      # [B, 3H]
        z = jax.nn.sigmoid(gx[:, 0:H] + gh[:, 0:H])
        r = jax.nn.sigmoid(gx[:, H:2 * H] + gh[:, H:2 * H])
        n = jnp.tanh(gx[:, 2 * H:G] + r * gh[:, 2 * H:G])
        h = (1.0 - z) * n + z * h
    q_emb = h                                                # [B, H]

    # ---- v_att ----------------------------------------------------------------
    v = v_ref[...]                                           # [B, K, V]
    wvp = w_ref[R_WVP:R_WVP + V, 0:H]
    bvp = b_ref[2:3, 0:H]
    v_proj = jnp.maximum(
        jnp.dot(v.reshape(B * K, V), wvp, preferred_element_type=f32) + bvp, 0.0
    ).reshape(B, K, H)

    # fused q-projections: [wqp | wq] in one matmul, then split
    wq2 = w_ref[R_WQ2:R_WQ2 + H, 0:2 * H]
    bq2 = b_ref[3:4, 0:2 * H]
    q_both = jnp.maximum(
        jnp.dot(q_emb, wq2, preferred_element_type=f32) + bq2, 0.0)   # [B, 2H]
    q_proj = q_both[:, 0:H]
    q_repr = q_both[:, H:2 * H]

    # attention logits as a lane reduction (no N=1 matmul)
    watt = b_ref[1:2, 0:H]                                   # [1, H]
    batt = b_ref[7:8, 0:1]                                   # [1, 1]
    joint_att = v_proj * q_proj[:, None, :]                  # [B, K, H]
    att_logits = jnp.sum(joint_att * watt[None, :, :], axis=-1) + batt  # [B, K]

    # softmax over objects (lane axis)
    m = jnp.max(att_logits, axis=-1, keepdims=True)
    e = jnp.exp(att_logits - m)
    att = e / jnp.sum(e, axis=-1, keepdims=True)             # [B, K]

    # v_emb = (att * v).sum over objects
    v_emb = jnp.sum(att[:, :, None] * v, axis=1)             # [B, V]

    # ---- v_net, joint, classifier ----------------------------------------------
    wv = w_ref[R_WV:R_WV + V, 0:H]
    bv = b_ref[4:5, 0:H]
    v_repr = jnp.maximum(
        jnp.dot(v_emb, wv, preferred_element_type=f32) + bv, 0.0)
    joint_repr = v_repr * q_repr                             # [B, H]

    wc1 = w_ref[R_WC1:R_WC1 + H, 0:H2]
    bc1 = b_ref[5:6, 0:H2]
    hdn = jnp.maximum(
        jnp.dot(joint_repr, wc1, preferred_element_type=f32) + bc1, 0.0)
    wc2 = w_ref[R_WC2:R_WC2 + H2, 0:C]
    bc2 = b_ref[6:7, 0:C]
    logits = jnp.dot(hdn, wc2, preferred_element_type=f32) + bc2      # [B, C]

    # single lane-dense output slab: [logits | att]
    out_ref[...] = jnp.concatenate([logits, att], axis=1)    # [B, C+K]

    # TODO(synk): c_1/c_2 (q_pred/q_out) only feed the 'iter_*'/'reg_*' loss
    # variants; omitted for loss_type='base' (dead compute + extra DMAs).
    # vision_lin/question_lin are never used in forward().

    # base BCE-with-logits: mean(-1).mean(0) * C == sum / B, emitted in-kernel
    y = labels_ref[...]
    bce = (jnp.maximum(logits, 0.0) - logits * y
           + jnp.log(1.0 + jnp.exp(-jnp.abs(logits))))
    loss_ref[0] = jnp.sum(bce) * (1.0 / B)


@jax.jit
def run_base_model(q_tokens, v, labels, wslab, bslab):
    # time-major flatten (row = t*B + b) so each GRU step reads contiguous rows
    tok_tm = q_tokens.T.reshape(T * B, 1).astype(jnp.int32)

    out_shape = (
        jax.ShapeDtypeStruct((B, C + K), jnp.float32),        # [logits | att]
        jax.ShapeDtypeStruct((1,), jnp.float32),               # loss scalar
    )
    fn = pl.pallas_call(
        vqa_kernel,
        out_shape=out_shape,
        grid=(1,),
        in_specs=[
            pl.BlockSpec((T * B, 1), lambda i: (0, 0)),
            pl.BlockSpec((B, K, V), lambda i: (0, 0, 0)),
            pl.BlockSpec((B, C), lambda i: (0, 0)),
            pl.BlockSpec((WROWS, WCOLS), lambda i: (0, 0)),
            pl.BlockSpec((BROWS, WCOLS), lambda i: (0, 0)),
        ],
        out_specs=(
            pl.BlockSpec((B, C + K), lambda i: (0, 0)),
            pl.BlockSpec((1,), lambda i: (0,),
                         memory_space=pltpu.MemorySpace.SMEM),
        ),
        compiler_params=pltpu.CompilerParams(
            dimension_semantics=("arbitrary",)),
    )
    out_la, lvec = fn(tok_tm, v, labels, wslab, bslab)
    logits = out_la[:, 0:C]
    att = out_la[:, C:C + K][:, :, None]    # att as [B, K, 1] like the module
    loss = lvec[0]
    return logits, loss, att


# ----------------------------- weight packing --------------------------------
def build_slabs(emb_table, gru_p, p):
    (Wz, Uz, bz, Wr, Ur, br, Wh, Uh, bh) = gru_p
    (wvp, bvp, wqp, bqp, watt, batt, wq, bq, wv, bv, wc1, bc1, wc2, bc2) = p
    hi = lax.Precision.HIGHEST   # one-time packing; keep the fold near-exact
    wx = jnp.concatenate([Wz, Wr, Wh], axis=1)       # [E, 3H]
    ewx = jnp.dot(emb_table, wx, precision=hi)       # folded emb @ Wx [NTOKEN, 3H]
    uh = jnp.concatenate([Uz, Ur, Uh], axis=1)       # [H, 3H]
    bg = jnp.concatenate([bz, br, bh], axis=1)       # [1, 3H]
    wq2 = jnp.concatenate([wqp, wq], axis=1)         # [H, 2H]
    bq2 = jnp.concatenate([bqp, bq], axis=1)         # [1, 2H]

    wslab = jnp.zeros((WROWS, WCOLS), jnp.float32)
    wslab = wslab.at[R_EWX:R_EWX + NTOKEN, 0:G].set(ewx)
    wslab = wslab.at[R_UH:R_UH + H, 0:G].set(uh)
    wslab = wslab.at[R_WVP:R_WVP + V, 0:H].set(wvp)
    wslab = wslab.at[R_WQ2:R_WQ2 + H, 0:2 * H].set(wq2)
    wslab = wslab.at[R_WV:R_WV + V, 0:H].set(wv)
    wslab = wslab.at[R_WC1:R_WC1 + H, 0:H2].set(wc1)
    wslab = wslab.at[R_WC2:R_WC2 + H2, 0:C].set(wc2)

    bslab = jnp.zeros((BROWS, WCOLS), jnp.float32)
    bslab = bslab.at[0, 0:G].set(bg[0])
    bslab = bslab.at[1, 0:H].set(watt[:, 0])         # attention row vector
    bslab = bslab.at[2, 0:H].set(bvp[0])
    bslab = bslab.at[3, 0:2 * H].set(bq2[0])
    bslab = bslab.at[4, 0:H].set(bv[0])
    bslab = bslab.at[5, 0:H2].set(bc1[0])
    bslab = bslab.at[6, 0:C].set(bc2[0])
    bslab = bslab.at[7, 0].set(batt[0, 0])
    return wslab, bslab


# ----------------------------- reference (plain JAX) -------------------------
def gru_q_emb(x, gru_params):
    Wz, Uz, bz, Wr, Ur, br, Wh, Uh, bh = gru_params
    h0 = jnp.zeros((x.shape[0], H), jnp.float32)

    def step(h, x_t):
        z = jax.nn.sigmoid(x_t @ Wz + h @ Uz + bz)
        r = jax.nn.sigmoid(x_t @ Wr + h @ Ur + br)
        n = jnp.tanh(x_t @ Wh + r * (h @ Uh) + bh)
        h_new = (1.0 - z) * n + z * h
        return h_new, h_new

    xs = jnp.transpose(x, (1, 0, 2))
    h_last, outs = lax.scan(step, h0, xs)
    return h_last, outs


def reference(v, q_tokens, labels, emb_table, gru_p, p):
    (wvp, bvp, wqp, bqp, watt, batt, wq, bq, wv, bv, wc1, bc1, wc2, bc2) = p
    w_emb = emb_table[q_tokens]
    q_emb, _ = gru_q_emb(w_emb, gru_p)
    v_proj = jnp.maximum(v.reshape(B * K, V) @ wvp + bvp, 0.0).reshape(B, K, H)
    q_proj = jnp.maximum(q_emb @ wqp + bqp, 0.0)
    att_logits = ((v_proj * q_proj[:, None, :]).reshape(B * K, H) @ watt
                  + batt).reshape(B, K, 1)
    att = jax.nn.softmax(att_logits, axis=1)
    v_emb = jnp.sum(att * v, axis=1)
    q_repr = jnp.maximum(q_emb @ wq + bq, 0.0)
    v_repr = jnp.maximum(v_emb @ wv + bv, 0.0)
    joint = v_repr * q_repr
    hdn = jnp.maximum(joint @ wc1 + bc1, 0.0)
    logits = hdn @ wc2 + bc2
    x = logits
    bce = jnp.maximum(x, 0.0) - x * labels + jnp.log(1.0 + jnp.exp(-jnp.abs(x)))
    loss = jnp.mean(bce) * labels.shape[1]
    return logits, loss, att


# ----------------------------- main ------------------------------------------
if __name__ == "__main__":
    key = jax.random.PRNGKey(0)
    ks = jax.random.split(key, 32)

    def u(k, shape, scale=0.1):
        return (jax.random.uniform(k, shape, jnp.float32) - 0.5) * 2.0 * scale

    # inputs (bias arg of the torch forward is unused for loss_type='base')
    v = u(ks[0], (B, K, V), 1.0)
    q_tokens = jax.random.randint(ks[1], (B, T), 0, NTOKEN)
    labels = (jax.random.uniform(ks[2], (B, C)) > 0.7).astype(jnp.float32)

    # w_emb + GRU params
    emb_table = u(ks[3], (NTOKEN, E), 0.5)
    gru_params = (
        u(ks[4], (E, H)), u(ks[5], (H, H)), u(ks[6], (1, H)),
        u(ks[7], (E, H)), u(ks[8], (H, H)), u(ks[9], (1, H)),
        u(ks[10], (E, H)), u(ks[11], (H, H)), u(ks[12], (1, H)),
    )

    # head params (v_att, q_net, v_net, classifier)
    head_params = (
        u(ks[13], (V, H)), u(ks[14], (1, H)),     # v_att: v_proj
        u(ks[15], (H, H)), u(ks[16], (1, H)),     # v_att: q_proj
        u(ks[17], (H, 1)), u(ks[18], (1, 1)),     # v_att: linear -> 1
        u(ks[19], (H, H)), u(ks[20], (1, H)),     # q_net
        u(ks[21], (V, H)), u(ks[22], (1, H)),     # v_net
        u(ks[23], (H, H2)), u(ks[24], (1, H2)),   # classifier fc1
        u(ks[25], (H2, C)), u(ks[26], (1, C)),    # classifier fc2
    )

    wslab, bslab = build_slabs(emb_table, gru_params, head_params)

    logits, loss, att = run_base_model(q_tokens, v, labels, wslab, bslab)
    jax.block_until_ready((logits, loss, att))

    ref_logits, ref_loss, ref_att = reference(
        v, q_tokens, labels, emb_table, gru_params, head_params)

    # Tolerances loosened vs the previous version: matmuls now run at default
    # (single-pass bf16-input) MXU precision instead of the forced 'highest'
    # f32 emulation, so kernel and f32 reference differ at the ~1e-3 level.
    np.testing.assert_allclose(np.asarray(logits), np.asarray(ref_logits),
                               rtol=5e-2, atol=1e-2)
    np.testing.assert_allclose(np.asarray(att), np.asarray(ref_att),
                               rtol=5e-2, atol=2e-3)
    np.testing.assert_allclose(np.asarray(loss), np.asarray(ref_loss),
                               rtol=2e-2, atol=1e-2)

    print("KERNEL_OK")
</pallas_src>

<mosaic_0001>
module attributes {stable_mosaic.version = 11 : i64} {
  func.func @vqa_kernel(%arg0: i32, %arg1: memref<128x1xi32, #tpu.memory_space<vmem>>, %arg2: memref<16x16x32xf32, #tpu.memory_space<vmem>>, %arg3: memref<16x16xf32, #tpu.memory_space<vmem>>, %arg4: memref<256x128xf32, #tpu.memory_space<vmem>>, %arg5: memref<8x128xf32, #tpu.memory_space<vmem>>, %arg6: memref<16x32xf32, #tpu.memory_space<vmem>>, %arg7: memref<1xf32, #tpu.memory_space<smem>>) attributes {dimension_semantics = [#tpu.dimension_semantics<arbitrary>], iteration_bounds = array<i64: 1>, scalar_prefetch = 0 : i64, scratch_operands = 0 : i64, tpu.core_type = #tpu.core_type<tc>, window_params = [{pipeline_mode = #tpu.pipeline_mode<synchronous>, transform_indices = @transform_0, window_bounds = array<i64: 128, 1>}, {pipeline_mode = #tpu.pipeline_mode<synchronous>, transform_indices = @transform_1, window_bounds = array<i64: 16, 16, 32>}, {pipeline_mode = #tpu.pipeline_mode<synchronous>, transform_indices = @transform_2, window_bounds = array<i64: 16, 16>}, {pipeline_mode = #tpu.pipeline_mode<synchronous>, transform_indices = @transform_3, window_bounds = array<i64: 256, 128>}, {pipeline_mode = #tpu.pipeline_mode<synchronous>, transform_indices = @transform_4, window_bounds = array<i64: 8, 128>}, {pipeline_mode = #tpu.pipeline_mode<synchronous>, transform_indices = @transform_5, window_bounds = array<i64: 16, 32>}, {transform_indices = @transform_6, window_bounds = array<i64: 1>}]} {
    %c0 = arith.constant 0 : index
    %c0_0 = arith.constant 0 : index
    %0 = vector.load %arg1[%c0, %c0_0] : memref<128x1xi32, #tpu.memory_space<vmem>>, vector<128x1xi32>
    %1 = tpu.iota {dimensions = array<i32: 1>} : vector<128x32xi32>
    %2 = vector.broadcast %0 : vector<128x1xi32> to vector<128x32xi32>
    %3 = arith.cmpi eq, %1, %2 : vector<128x32xi32>
    %4 = arith.extui %3 : vector<128x32xi1> to vector<128x32xi32>
    %5 = arith.sitofp %4 : vector<128x32xi32> to vector<128x32xf32>
    %c0_1 = arith.constant 0 : index
    %c0_2 = arith.constant 0 : index
    %6 = vector.load %arg4[%c0_1, %c0_2] : memref<256x128xf32, #tpu.memory_space<vmem>>, vector<32x96xf32>
    %c0_3 = arith.constant 0 : index
    %c0_4 = arith.constant 0 : index
    %7 = vector.load %arg5[%c0_3, %c0_4] : memref<8x128xf32, #tpu.memory_space<vmem>>, vector<1x96xf32>
    %cst = arith.constant dense<0.000000e+00> : vector<128x96xf32>
    %8 = tpu.matmul %5, %6, %cst {dimension_numbers = #tpu.dot_dimension_numbers<[1], [0], [0], [1], [0, 0, 1, 1], [], []>} : vector<128x32xf32>, vector<32x96xf32>, vector<128x96xf32> -> vector<128x96xf32>
    %9 = vector.broadcast %7 : vector<1x96xf32> to vector<128x96xf32>
    %10 = arith.addf %8, %9 : vector<128x96xf32>
    %11 = vector.shape_cast %10 : vector<128x96xf32> to vector<8x16x96xf32>
    %c32 = arith.constant 32 : index
    %c0_5 = arith.constant 0 : index
    %12 = vector.load %arg4[%c32, %c0_5] : memref<256x128xf32, #tpu.memory_space<vmem>>, vector<32x96xf32>
    %cst_6 = arith.constant 0.000000e+00 : f32
    %13 = vector.broadcast %cst_6 : f32 to vector<16x32xf32>
    %14 = vector.extract_strided_slice %11 {offsets = [0, 0, 0], sizes = [1, 16, 96], strides = [1, 1, 1]} : vector<8x16x96xf32> to vector<1x16x96xf32>
    %15 = vector.shape_cast %14 : vector<1x16x96xf32> to vector<16x96xf32>
    %cst_7 = arith.constant dense<0.000000e+00> : vector<16x96xf32>
    %16 = tpu.matmul %13, %12, %cst_7 {dimension_numbers = #tpu.dot_dimension_numbers<[1], [0], [0], [1], [0, 0, 1, 1], [], []>} : vector<16x32xf32>, vector<32x96xf32>, vector<16x96xf32> -> vector<16x96xf32>
    %17 = vector.extract_strided_slice %15 {offsets = [0, 0], sizes = [16, 32], strides = [1, 1]} : vector<16x96xf32> to vector<16x32xf32>
    %18 = vector.extract_strided_slice %16 {offsets = [0, 0], sizes = [16, 32], strides = [1, 1]} : vector<16x96xf32> to vector<16x32xf32>
    %19 = arith.addf %17, %18 : vector<16x32xf32>
    %20 = arith.negf %19 : vector<16x32xf32>
    %21 = math.exp %20 : vector<16x32xf32>
    %cst_8 = arith.constant 1.000000e+00 : f32
    %22 = vector.broadcast %cst_8 : f32 to vector<16x32xf32>
    %23 = arith.addf %22, %21 : vector<16x32xf32>
    %24 = arith.divf %22, %23 : vector<16x32xf32>
    %25 = vector.extract_strided_slice %15 {offsets = [0, 32], sizes = [16, 32], strides = [1, 1]} : vector<16x96xf32> to vector<16x32xf32>
    %26 = vector.extract_strided_slice %16 {offsets = [0, 32], sizes = [16, 32], strides = [1, 1]} : vector<16x96xf32> to vector<16x32xf32>
    %27 = arith.addf %25, %26 : vector<16x32xf32>
    %28 = arith.negf %27 : vector<16x32xf32>
    %29 = math.exp %28 : vector<16x32xf32>
    %cst_9 = arith.constant 1.000000e+00 : f32
    %30 = vector.broadcast %cst_9 : f32 to vector<16x32xf32>
    %31 = arith.addf %30, %29 : vector<16x32xf32>
    %32 = arith.divf %30, %31 : vector<16x32xf32>
    %33 = vector.extract_strided_slice %15 {offsets = [0, 64], sizes = [16, 32], strides = [1, 1]} : vector<16x96xf32> to vector<16x32xf32>
    %34 = vector.extract_strided_slice %16 {offsets = [0, 64], sizes = [16, 32], strides = [1, 1]} : vector<16x96xf32> to vector<16x32xf32>
    %35 = arith.mulf %32, %34 : vector<16x32xf32>
    %36 = arith.addf %33, %35 : vector<16x32xf32>
    %37 = math.tanh %36 : vector<16x32xf32>
    %cst_10 = arith.constant 1.000000e+00 : f32
    %38 = vector.broadcast %cst_10 : f32 to vector<16x32xf32>
    %39 = arith.subf %38, %24 : vector<16x32xf32>
    %40 = arith.mulf %39, %37 : vector<16x32xf32>
    %41 = arith.mulf %24, %13 : vector<16x32xf32>
    %42 = arith.addf %40, %41 : vector<16x32xf32>
    %43 = vector.extract_strided_slice %11 {offsets = [1, 0, 0], sizes = [1, 16, 96], strides = [1, 1, 1]} : vector<8x16x96xf32> to vector<1x16x96xf32>
    %44 = vector.shape_cast %43 : vector<1x16x96xf32> to vector<16x96xf32>
    %cst_11 = arith.constant dense<0.000000e+00> : vector<16x96xf32>
    %45 = tpu.matmul %42, %12, %cst_11 {dimension_numbers = #tpu.dot_dimension_numbers<[1], [0], [0], [1], [0, 0, 1, 1], [], []>} : vector<16x32xf32>, vector<32x96xf32>, vector<16x96xf32> -> vector<16x96xf32>
    %46 = vector.extract_strided_slice %44 {offsets = [0, 0], sizes = [16, 32], strides = [1, 1]} : vector<16x96xf32> to vector<16x32xf32>
    %47 = vector.extract_strided_slice %45 {offsets = [0, 0], sizes = [16, 32], strides = [1, 1]} : vector<16x96xf32> to vector<16x32xf32>
    %48 = arith.addf %46, %47 : vector<16x32xf32>
    %49 = arith.negf %48 : vector<16x32xf32>
    %50 = math.exp %49 : vector<16x32xf32>
    %cst_12 = arith.constant 1.000000e+00 : f32
    %51 = vector.broadcast %cst_12 : f32 to vector<16x32xf32>
    %52 = arith.addf %51, %50 : vector<16x32xf32>
    %53 = arith.divf %51, %52 : vector<16x32xf32>
    %54 = vector.extract_strided_slice %44 {offsets = [0, 32], sizes = [16, 32], strides = [1, 1]} : vector<16x96xf32> to vector<16x32xf32>
    %55 = vector.extract_strided_slice %45 {offsets = [0, 32], sizes = [16, 32], strides = [1, 1]} : vector<16x96xf32> to vector<16x32xf32>
    %56 = arith.addf %54, %55 : vector<16x32xf32>
    %57 = arith.negf %56 : vector<16x32xf32>
    %58 = math.exp %57 : vector<16x32xf32>
    %cst_13 = arith.constant 1.000000e+00 : f32
    %59 = vector.broadcast %cst_13 : f32 to vector<16x32xf32>
    %60 = arith.addf %59, %58 : vector<16x32xf32>
    %61 = arith.divf %59, %60 : vector<16x32xf32>
    %62 = vector.extract_strided_slice %44 {offsets = [0, 64], sizes = [16, 32], strides = [1, 1]} : vector<16x96xf32> to vector<16x32xf32>
    %63 = vector.extract_strided_slice %45 {offsets = [0, 64], sizes = [16, 32], strides = [1, 1]} : vector<16x96xf32> to vector<16x32xf32>
    %64 = arith.mulf %61, %63 : vector<16x32xf32>
    %65 = arith.addf %62, %64 : vector<16x32xf32>
    %66 = math.tanh %65 : vector<16x32xf32>
    %cst_14 = arith.constant 1.000000e+00 : f32
    %67 = vector.broadcast %cst_14 : f32 to vector<16x32xf32>
    %68 = arith.subf %67, %53 : vector<16x32xf32>
    %69 = arith.mulf %68, %66 : vector<16x32xf32>
    %70 = arith.mulf %53, %42 : vector<16x32xf32>
    %71 = arith.addf %69, %70 : vector<16x32xf32>
    %72 = vector.extract_strided_slice %11 {offsets = [2, 0, 0], sizes = [1, 16, 96], strides = [1, 1, 1]} : vector<8x16x96xf32> to vector<1x16x96xf32>
    %73 = vector.shape_cast %72 : vector<1x16x96xf32> to vector<16x96xf32>
    %cst_15 = arith.constant dense<0.000000e+00> : vector<16x96xf32>
    %74 = tpu.matmul %71, %12, %cst_15 {dimension_numbers = #tpu.dot_dimension_numbers<[1], [0], [0], [1], [0, 0, 1, 1], [], []>} : vector<16x32xf32>, vector<32x96xf32>, vector<16x96xf32> -> vector<16x96xf32>
    %75 = vector.extract_strided_slice %73 {offsets = [0, 0], sizes = [16, 32], strides = [1, 1]} : vector<16x96xf32> to vector<16x32xf32>
    %76 = vector.extract_strided_slice %74 {offsets = [0, 0], sizes = [16, 32], strides = [1, 1]} : vector<16x96xf32> to vector<16x32xf32>
    %77 = arith.addf %75, %76 : vector<16x32xf32>
    %78 = arith.negf %77 : vector<16x32xf32>
    %79 = math.exp %78 : vector<16x32xf32>
    %cst_16 = arith.constant 1.000000e+00 : f32
    %80 = vector.broadcast %cst_16 : f32 to vector<16x32xf32>
    %81 = arith.addf %80, %79 : vector<16x32xf32>
    %82 = arith.divf %80, %81 : vector<16x32xf32>
    %83 = vector.extract_strided_slice %73 {offsets = [0, 32], sizes = [16, 32], strides = [1, 1]} : vector<16x96xf32> to vector<16x32xf32>
    %84 = vector.extract_strided_slice %74 {offsets = [0, 32], sizes = [16, 32], strides = [1, 1]} : vector<16x96xf32> to vector<16x32xf32>
    %85 = arith.addf %83, %84 : vector<16x32xf32>
    %86 = arith.negf %85 : vector<16x32xf32>
    %87 = math.exp %86 : vector<16x32xf32>
    %cst_17 = arith.constant 1.000000e+00 : f32
    %88 = vector.broadcast %cst_17 : f32 to vector<16x32xf32>
    %89 = arith.addf %88, %87 : vector<16x32xf32>
    %90 = arith.divf %88, %89 : vector<16x32xf32>
    %91 = vector.extract_strided_slice %73 {offsets = [0, 64], sizes = [16, 32], strides = [1, 1]} : vector<16x96xf32> to vector<16x32xf32>
    %92 = vector.extract_strided_slice %74 {offsets = [0, 64], sizes = [16, 32], strides = [1, 1]} : vector<16x96xf32> to vector<16x32xf32>
    %93 = arith.mulf %90, %92 : vector<16x32xf32>
    %94 = arith.addf %91, %93 : vector<16x32xf32>
    %95 = math.tanh %94 : vector<16x32xf32>
    %cst_18 = arith.constant 1.000000e+00 : f32
    %96 = vector.broadcast %cst_18 : f32 to vector<16x32xf32>
    %97 = arith.subf %96, %82 : vector<16x32xf32>
    %98 = arith.mulf %97, %95 : vector<16x32xf32>
    %99 = arith.mulf %82, %71 : vector<16x32xf32>
    %100 = arith.addf %98, %99 : vector<16x32xf32>
    %101 = vector.extract_strided_slice %11 {offsets = [3, 0, 0], sizes = [1, 16, 96], strides = [1, 1, 1]} : vector<8x16x96xf32> to vector<1x16x96xf32>
    %102 = vector.shape_cast %101 : vector<1x16x96xf32> to vector<16x96xf32>
    %cst_19 = arith.constant dense<0.000000e+00> : vector<16x96xf32>
    %103 = tpu.matmul %100, %12, %cst_19 {dimension_numbers = #tpu.dot_dimension_numbers<[1], [0], [0], [1], [0, 0, 1, 1], [], []>} : vector<16x32xf32>, vector<32x96xf32>, vector<16x96xf32> -> vector<16x96xf32>
    %104 = vector.extract_strided_slice %102 {offsets = [0, 0], sizes = [16, 32], strides = [1, 1]} : vector<16x96xf32> to vector<16x32xf32>
    %105 = vector.extract_strided_slice %103 {offsets = [0, 0], sizes = [16, 32], strides = [1, 1]} : vector<16x96xf32> to vector<16x32xf32>
    %106 = arith.addf %104, %105 : vector<16x32xf32>
    %107 = arith.negf %106 : vector<16x32xf32>
    %108 = math.exp %107 : vector<16x32xf32>
    %cst_20 = arith.constant 1.000000e+00 : f32
    %109 = vector.broadcast %cst_20 : f32 to vector<16x32xf32>
    %110 = arith.addf %109, %108 : vector<16x32xf32>
    %111 = arith.divf %109, %110 : vector<16x32xf32>
    %112 = vector.extract_strided_slice %102 {offsets = [0, 32], sizes = [16, 32], strides = [1, 1]} : vector<16x96xf32> to vector<16x32xf32>
    %113 = vector.extract_strided_slice %103 {offsets = [0, 32], sizes = [16, 32], strides = [1, 1]} : vector<16x96xf32> to vector<16x32xf32>
    %114 = arith.addf %112, %113 : vector<16x32xf32>
    %115 = arith.negf %114 : vector<16x32xf32>
    %116 = math.exp %115 : vector<16x32xf32>
    %cst_21 = arith.constant 1.000000e+00 : f32
    %117 = vector.broadcast %cst_21 : f32 to vector<16x32xf32>
    %118 = arith.addf %117, %116 : vector<16x32xf32>
    %119 = arith.divf %117, %118 : vector<16x32xf32>
    %120 = vector.extract_strided_slice %102 {offsets = [0, 64], sizes = [16, 32], strides = [1, 1]} : vector<16x96xf32> to vector<16x32xf32>
    %121 = vector.extract_strided_slice %103 {offsets = [0, 64], sizes = [16, 32], strides = [1, 1]} : vector<16x96xf32> to vector<16x32xf32>
    %122 = arith.mulf %119, %121 : vector<16x32xf32>
    %123 = arith.addf %120, %122 : vector<16x32xf32>
    %124 = math.tanh %123 : vector<16x32xf32>
    %cst_22 = arith.constant 1.000000e+00 : f32
    %125 = vector.broadcast %cst_22 : f32 to vector<16x32xf32>
    %126 = arith.subf %125, %111 : vector<16x32xf32>
    %127 = arith.mulf %126, %124 : vector<16x32xf32>
    %128 = arith.mulf %111, %100 : vector<16x32xf32>
    %129 = arith.addf %127, %128 : vector<16x32xf32>
    %130 = vector.extract_strided_slice %11 {offsets = [4, 0, 0], sizes = [1, 16, 96], strides = [1, 1, 1]} : vector<8x16x96xf32> to vector<1x16x96xf32>
    %131 = vector.shape_cast %130 : vector<1x16x96xf32> to vector<16x96xf32>
    %cst_23 = arith.constant dense<0.000000e+00> : vector<16x96xf32>
    %132 = tpu.matmul %129, %12, %cst_23 {dimension_numbers = #tpu.dot_dimension_numbers<[1], [0], [0], [1], [0, 0, 1, 1], [], []>} : vector<16x32xf32>, vector<32x96xf32>, vector<16x96xf32> -> vector<16x96xf32>
    %133 = vector.extract_strided_slice %131 {offsets = [0, 0], sizes = [16, 32], strides = [1, 1]} : vector<16x96xf32> to vector<16x32xf32>
    %134 = vector.extract_strided_slice %132 {offsets = [0, 0], sizes = [16, 32], strides = [1, 1]} : vector<16x96xf32> to vector<16x32xf32>
    %135 = arith.addf %133, %134 : vector<16x32xf32>
    %136 = arith.negf %135 : vector<16x32xf32>
    %137 = math.exp %136 : vector<16x32xf32>
    %cst_24 = arith.constant 1.000000e+00 : f32
    %138 = vector.broadcast %cst_24 : f32 to vector<16x32xf32>
    %139 = arith.addf %138, %137 : vector<16x32xf32>
    %140 = arith.divf %138, %139 : vector<16x32xf32>
    %141 = vector.extract_strided_slice %131 {offsets = [0, 32], sizes = [16, 32], strides = [1, 1]} : vector<16x96xf32> to vector<16x32xf32>
    %142 = vector.extract_strided_slice %132 {offsets = [0, 32], sizes = [16, 32], strides = [1, 1]} : vector<16x96xf32> to vector<16x32xf32>
    %143 = arith.addf %141, %142 : vector<16x32xf32>
    %144 = arith.negf %143 : vector<16x32xf32>
    %145 = math.exp %144 : vector<16x32xf32>
    %cst_25 = arith.constant 1.000000e+00 : f32
    %146 = vector.broadcast %cst_25 : f32 to vector<16x32xf32>
    %147 = arith.addf %146, %145 : vector<16x32xf32>
    %148 = arith.divf %146, %147 : vector<16x32xf32>
    %149 = vector.extract_strided_slice %131 {offsets = [0, 64], sizes = [16, 32], strides = [1, 1]} : vector<16x96xf32> to vector<16x32xf32>
    %150 = vector.extract_strided_slice %132 {offsets = [0, 64], sizes = [16, 32], strides = [1, 1]} : vector<16x96xf32> to vector<16x32xf32>
    %151 = arith.mulf %148, %150 : vector<16x32xf32>
    %152 = arith.addf %149, %151 : vector<16x32xf32>
    %153 = math.tanh %152 : vector<16x32xf32>
    %cst_26 = arith.constant 1.000000e+00 : f32
    %154 = vector.broadcast %cst_26 : f32 to vector<16x32xf32>
    %155 = arith.subf %154, %140 : vector<16x32xf32>
    %156 = arith.mulf %155, %153 : vector<16x32xf32>
    %157 = arith.mulf %140, %129 : vector<16x32xf32>
    %158 = arith.addf %156, %157 : vector<16x32xf32>
    %159 = vector.extract_strided_slice %11 {offsets = [5, 0, 0], sizes = [1, 16, 96], strides = [1, 1, 1]} : vector<8x16x96xf32> to vector<1x16x96xf32>
    %160 = vector.shape_cast %159 : vector<1x16x96xf32> to vector<16x96xf32>
    %cst_27 = arith.constant dense<0.000000e+00> : vector<16x96xf32>
    %161 = tpu.matmul %158, %12, %cst_27 {dimension_numbers = #tpu.dot_dimension_numbers<[1], [0], [0], [1], [0, 0, 1, 1], [], []>} : vector<16x32xf32>, vector<32x96xf32>, vector<16x96xf32> -> vector<16x96xf32>
    %162 = vector.extract_strided_slice %160 {offsets = [0, 0], sizes = [16, 32], strides = [1, 1]} : vector<16x96xf32> to vector<16x32xf32>
    %163 = vector.extract_strided_slice %161 {offsets = [0, 0], sizes = [16, 32], strides = [1, 1]} : vector<16x96xf32> to vector<16x32xf32>
    %164 = arith.addf %162, %163 : vector<16x32xf32>
    %165 = arith.negf %164 : vector<16x32xf32>
    %166 = math.exp %165 : vector<16x32xf32>
    %cst_28 = arith.constant 1.000000e+00 : f32
    %167 = vector.broadcast %cst_28 : f32 to vector<16x32xf32>
    %168 = arith.addf %167, %166 : vector<16x32xf32>
    %169 = arith.divf %167, %168 : vector<16x32xf32>
    %170 = vector.extract_strided_slice %160 {offsets = [0, 32], sizes = [16, 32], strides = [1, 1]} : vector<16x96xf32> to vector<16x32xf32>
    %171 = vector.extract_strided_slice %161 {offsets = [0, 32], sizes = [16, 32], strides = [1, 1]} : vector<16x96xf32> to vector<16x32xf32>
    %172 = arith.addf %170, %171 : vector<16x32xf32>
    %173 = arith.negf %172 : vector<16x32xf32>
    %174 = math.exp %173 : vector<16x32xf32>
    %cst_29 = arith.constant 1.000000e+00 : f32
    %175 = vector.broadcast %cst_29 : f32 to vector<16x32xf32>
    %176 = arith.addf %175, %174 : vector<16x32xf32>
    %177 = arith.divf %175, %176 : vector<16x32xf32>
    %178 = vector.extract_strided_slice %160 {offsets = [0, 64], sizes = [16, 32], strides = [1, 1]} : vector<16x96xf32> to vector<16x32xf32>
    %179 = vector.extract_strided_slice %161 {offsets = [0, 64], sizes = [16, 32], strides = [1, 1]} : vector<16x96xf32> to vector<16x32xf32>
    %180 = arith.mulf %177, %179 : vector<16x32xf32>
    %181 = arith.addf %178, %180 : vector<16x32xf32>
    %182 = math.tanh %181 : vector<16x32xf32>
    %cst_30 = arith.constant 1.000000e+00 : f32
    %183 = vector.broadcast %cst_30 : f32 to vector<16x32xf32>
    %184 = arith.subf %183, %169 : vector<16x32xf32>
    %185 = arith.mulf %184, %182 : vector<16x32xf32>
    %186 = arith.mulf %169, %158 : vector<16x32xf32>
    %187 = arith.addf %185, %186 : vector<16x32xf32>
    %188 = vector.extract_strided_slice %11 {offsets = [6, 0, 0], sizes = [1, 16, 96], strides = [1, 1, 1]} : vector<8x16x96xf32> to vector<1x16x96xf32>
    %189 = vector.shape_cast %188 : vector<1x16x96xf32> to vector<16x96xf32>
    %cst_31 = arith.constant dense<0.000000e+00> : vector<16x96xf32>
    %190 = tpu.matmul %187, %12, %cst_31 {dimension_numbers = #tpu.dot_dimension_numbers<[1], [0], [0], [1], [0, 0, 1, 1], [], []>} : vector<16x32xf32>, vector<32x96xf32>, vector<16x96xf32> -> vector<16x96xf32>
    %191 = vector.extract_strided_slice %189 {offsets = [0, 0], sizes = [16, 32], strides = [1, 1]} : vector<16x96xf32> to vector<16x32xf32>
    %192 = vector.extract_strided_slice %190 {offsets = [0, 0], sizes = [16, 32], strides = [1, 1]} : vector<16x96xf32> to vector<16x32xf32>
    %193 = arith.addf %191, %192 : vector<16x32xf32>
    %194 = arith.negf %193 : vector<16x32xf32>
    %195 = math.exp %194 : vector<16x32xf32>
    %cst_32 = arith.constant 1.000000e+00 : f32
    %196 = vector.broadcast %cst_32 : f32 to vector<16x32xf32>
    %197 = arith.addf %196, %195 : vector<16x32xf32>
    %198 = arith.divf %196, %197 : vector<16x32xf32>
    %199 = vector.extract_strided_slice %189 {offsets = [0, 32], sizes = [16, 32], strides = [1, 1]} : vector<16x96xf32> to vector<16x32xf32>
    %200 = vector.extract_strided_slice %190 {offsets = [0, 32], sizes = [16, 32], strides = [1, 1]} : vector<16x96xf32> to vector<16x32xf32>
    %201 = arith.addf %199, %200 : vector<16x32xf32>
    %202 = arith.negf %201 : vector<16x32xf32>
    %203 = math.exp %202 : vector<16x32xf32>
    %cst_33 = arith.constant 1.000000e+00 : f32
    %204 = vector.broadcast %cst_33 : f32 to vector<16x32xf32>
    %205 = arith.addf %204, %203 : vector<16x32xf32>
    %206 = arith.divf %204, %205 : vector<16x32xf32>
    %207 = vector.extract_strided_slice %189 {offsets = [0, 64], sizes = [16, 32], strides = [1, 1]} : vector<16x96xf32> to vector<16x32xf32>
    %208 = vector.extract_strided_slice %190 {offsets = [0, 64], sizes = [16, 32], strides = [1, 1]} : vector<16x96xf32> to vector<16x32xf32>
    %209 = arith.mulf %206, %208 : vector<16x32xf32>
    %210 = arith.addf %207, %209 : vector<16x32xf32>
    %211 = math.tanh %210 : vector<16x32xf32>
    %cst_34 = arith.constant 1.000000e+00 : f32
    %212 = vector.broadcast %cst_34 : f32 to vector<16x32xf32>
    %213 = arith.subf %212, %198 : vector<16x32xf32>
    %214 = arith.mulf %213, %211 : vector<16x32xf32>
    %215 = arith.mulf %198, %187 : vector<16x32xf32>
    %216 = arith.addf %214, %215 : vector<16x32xf32>
    %217 = vector.extract_strided_slice %11 {offsets = [7, 0, 0], sizes = [1, 16, 96], strides = [1, 1, 1]} : vector<8x16x96xf32> to vector<1x16x96xf32>
    %218 = vector.shape_cast %217 : vector<1x16x96xf32> to vector<16x96xf32>
    %cst_35 = arith.constant dense<0.000000e+00> : vector<16x96xf32>
    %219 = tpu.matmul %216, %12, %cst_35 {dimension_numbers = #tpu.dot_dimension_numbers<[1], [0], [0], [1], [0, 0, 1, 1], [], []>} : vector<16x32xf32>, vector<32x96xf32>, vector<16x96xf32> -> vector<16x96xf32>
    %220 = vector.extract_strided_slice %218 {offsets = [0, 0], sizes = [16, 32], strides = [1, 1]} : vector<16x96xf32> to vector<16x32xf32>
    %221 = vector.extract_strided_slice %219 {offsets = [0, 0], sizes = [16, 32], strides = [1, 1]} : vector<16x96xf32> to vector<16x32xf32>
    %222 = arith.addf %220, %221 : vector<16x32xf32>
    %223 = arith.negf %222 : vector<16x32xf32>
    %224 = math.exp %223 : vector<16x32xf32>
    %cst_36 = arith.constant 1.000000e+00 : f32
    %225 = vector.broadcast %cst_36 : f32 to vector<16x32xf32>
    %226 = arith.addf %225, %224 : vector<16x32xf32>
    %227 = arith.divf %225, %226 : vector<16x32xf32>
    %228 = vector.extract_strided_slice %218 {offsets = [0, 32], sizes = [16, 32], strides = [1, 1]} : vector<16x96xf32> to vector<16x32xf32>
    %229 = vector.extract_strided_slice %219 {offsets = [0, 32], sizes = [16, 32], strides = [1, 1]} : vector<16x96xf32> to vector<16x32xf32>
    %230 = arith.addf %228, %229 : vector<16x32xf32>
    %231 = arith.negf %230 : vector<16x32xf32>
    %232 = math.exp %231 : vector<16x32xf32>
    %cst_37 = arith.constant 1.000000e+00 : f32
    %233 = vector.broadcast %cst_37 : f32 to vector<16x32xf32>
    %234 = arith.addf %233, %232 : vector<16x32xf32>
    %235 = arith.divf %233, %234 : vector<16x32xf32>
    %236 = vector.extract_strided_slice %218 {offsets = [0, 64], sizes = [16, 32], strides = [1, 1]} : vector<16x96xf32> to vector<16x32xf32>
    %237 = vector.extract_strided_slice %219 {offsets = [0, 64], sizes = [16, 32], strides = [1, 1]} : vector<16x96xf32> to vector<16x32xf32>
    %238 = arith.mulf %235, %237 : vector<16x32xf32>
    %239 = arith.addf %236, %238 : vector<16x32xf32>
    %240 = math.tanh %239 : vector<16x32xf32>
    %cst_38 = arith.constant 1.000000e+00 : f32
    %241 = vector.broadcast %cst_38 : f32 to vector<16x32xf32>
    %242 = arith.subf %241, %227 : vector<16x32xf32>
    %243 = arith.mulf %242, %240 : vector<16x32xf32>
    %244 = arith.mulf %227, %216 : vector<16x32xf32>
    %245 = arith.addf %243, %244 : vector<16x32xf32>
    %c0_39 = arith.constant 0 : index
    %c0_40 = arith.constant 0 : index
    %c0_41 = arith.constant 0 : index
    %246 = vector.load %arg2[%c0_39, %c0_40, %c0_41] : memref<16x16x32xf32, #tpu.memory_space<vmem>>, vector<16x16x32xf32>
    %c64 = arith.constant 64 : index
    %c0_42 = arith.constant 0 : index
    %247 = vector.load %arg4[%c64, %c0_42] : memref<256x128xf32, #tpu.memory_space<vmem>>, vector<32x32xf32>
    %c2 = arith.constant 2 : index
    %c0_43 = arith.constant 0 : index
    %248 = vector.load %arg5[%c2, %c0_43] : memref<8x128xf32, #tpu.memory_space<vmem>>, vector<1x32xf32>
    %249 = vector.shape_cast %246 : vector<16x16x32xf32> to vector<256x32xf32>
    %cst_44 = arith.constant dense<0.000000e+00> : vector<256x32xf32>
    %250 = tpu.matmul %249, %247, %cst_44 {dimension_numbers = #tpu.dot_dimension_numbers<[1], [0], [0], [1], [0, 0, 1, 1], [], []>} : vector<256x32xf32>, vector<32x32xf32>, vector<256x32xf32> -> vector<256x32xf32>
    %251 = vector.broadcast %248 : vector<1x32xf32> to vector<256x32xf32>
    %252 = arith.addf %250, %251 : vector<256x32xf32>
    %cst_45 = arith.constant 0.000000e+00 : f32
    %253 = vector.broadcast %cst_45 : f32 to vector<256x32xf32>
    %254 = arith.maximumf %252, %253 : vector<256x32xf32>
    %255 = vector.shape_cast %254 : vector<256x32xf32> to vector<16x16x32xf32>
    %c96 = arith.constant 96 : index
    %c0_46 = arith.constant 0 : index
    %256 = vector.load %arg4[%c96, %c0_46] : memref<256x128xf32, #tpu.memory_space<vmem>>, vector<32x64xf32>
    %c3 = arith.constant 3 : index
    %c0_47 = arith.constant 0 : index
    %257 = vector.load %arg5[%c3, %c0_47] : memref<8x128xf32, #tpu.memory_space<vmem>>, vector<1x64xf32>
    %cst_48 = arith.constant dense<0.000000e+00> : vector<16x64xf32>
    %258 = tpu.matmul %245, %256, %cst_48 {dimension_numbers = #tpu.dot_dimension_numbers<[1], [0], [0], [1], [0, 0, 1, 1], [], []>} : vector<16x32xf32>, vector<32x64xf32>, vector<16x64xf32> -> vector<16x64xf32>
    %259 = vector.broadcast %257 : vector<1x64xf32> to vector<16x64xf32>
    %260 = arith.addf %258, %259 : vector<16x64xf32>
    %cst_49 = arith.constant 0.000000e+00 : f32
    %261 = vector.broadcast %cst_49 : f32 to vector<16x64xf32>
    %262 = arith.maximumf %260, %261 : vector<16x64xf32>
    %263 = vector.extract_strided_slice %262 {offsets = [0, 0], sizes = [16, 32], strides = [1, 1]} : vector<16x64xf32> to vector<16x32xf32>
    %264 = vector.extract_strided_slice %262 {offsets = [0, 32], sizes = [16, 32], strides = [1, 1]} : vector<16x64xf32> to vector<16x32xf32>
    %c1 = arith.constant 1 : index
    %c0_50 = arith.constant 0 : index
    %265 = vector.load %arg5[%c1, %c0_50] : memref<8x128xf32, #tpu.memory_space<vmem>>, vector<1x32xf32>
    %c7 = arith.constant 7 : index
    %c0_51 = arith.constant 0 : index
    %266 = vector.load %arg5[%c7, %c0_51] : memref<8x128xf32, #tpu.memory_space<vmem>>, vector<1x1xf32>
    %267 = vector.shape_cast %263 : vector<16x32xf32> to vector<16x1x32xf32>
    %268 = vector.broadcast %267 : vector<16x1x32xf32> to vector<16x16x32xf32>
    %269 = arith.mulf %255, %268 : vector<16x16x32xf32>
    %270 = vector.shape_cast %265 : vector<1x32xf32> to vector<1x1x32xf32>
    %271 = vector.broadcast %270 : vector<1x1x32xf32> to vector<16x16x32xf32>
    %272 = arith.mulf %269, %271 : vector<16x16x32xf32>
    %cst_52 = arith.constant dense<0.000000e+00> : vector<16x16xf32>
    %273 = vector.multi_reduction <add>, %272, %cst_52 [2] : vector<16x16x32xf32> to vector<16x16xf32>
    %274 = vector.broadcast %266 : vector<1x1xf32> to vector<16x16xf32>
    %275 = arith.addf %273, %274 : vector<16x16xf32>
    %cst_53 = arith.constant dense<0xFF800000> : vector<16xf32>
    %276 = vector.multi_reduction <maximumf>, %275, %cst_53 [1] : vector<16x16xf32> to vector<16xf32>
    %277 = vector.shape_cast %276 : vector<16xf32> to vector<16x1xf32>
    %278 = vector.broadcast %277 : vector<16x1xf32> to vector<16x16xf32>
    %279 = arith.subf %275, %278 : vector<16x16xf32>
    %280 = math.exp %279 : vector<16x16xf32>
    %cst_54 = arith.constant dense<0.000000e+00> : vector<16xf32>
    %281 = vector.multi_reduction <add>, %280, %cst_54 [1] : vector<16x16xf32> to vector<16xf32>
    %282 = vector.shape_cast %281 : vector<16xf32> to vector<16x1xf32>
    %283 = vector.broadcast %282 : vector<16x1xf32> to vector<16x16xf32>
    %284 = arith.divf %280, %283 : vector<16x16xf32>
    %285 = vector.shape_cast %284 : vector<16x16xf32> to vector<16x16x1xf32>
    %286 = vector.broadcast %285 : vector<16x16x1xf32> to vector<16x16x32xf32>
    %287 = arith.mulf %286, %246 : vector<16x16x32xf32>
    %cst_55 = arith.constant dense<0.000000e+00> : vector<16x32xf32>
    %288 = vector.multi_reduction <add>, %287, %cst_55 [1] : vector<16x16x32xf32> to vector<16x32xf32>
    %c128 = arith.constant 128 : index
    %c0_56 = arith.constant 0 : index
    %289 = vector.load %arg4[%c128, %c0_56] : memref<256x128xf32, #tpu.memory_space<vmem>>, vector<32x32xf32>
    %c4 = arith.constant 4 : index
    %c0_57 = arith.constant 0 : index
    %290 = vector.load %arg5[%c4, %c0_57] : memref<8x128xf32, #tpu.memory_space<vmem>>, vector<1x32xf32>
    %cst_58 = arith.constant dense<0.000000e+00> : vector<16x32xf32>
    %291 = tpu.matmul %288, %289, %cst_58 {dimension_numbers = #tpu.dot_dimension_numbers<[1], [0], [0], [1], [0, 0, 1, 1], [], []>} : vector<16x32xf32>, vector<32x32xf32>, vector<16x32xf32> -> vector<16x32xf32>
    %292 = vector.broadcast %290 : vector<1x32xf32> to vector<16x32xf32>
    %293 = arith.addf %291, %292 : vector<16x32xf32>
    %cst_59 = arith.constant 0.000000e+00 : f32
    %294 = vector.broadcast %cst_59 : f32 to vector<16x32xf32>
    %295 = arith.maximumf %293, %294 : vector<16x32xf32>
    %296 = arith.mulf %295, %264 : vector<16x32xf32>
    %c160 = arith.constant 160 : index
    %c0_60 = arith.constant 0 : index
    %297 = vector.load %arg4[%c160, %c0_60] : memref<256x128xf32, #tpu.memory_space<vmem>>, vector<32x64xf32>
    %c5 = arith.constant 5 : index
    %c0_61 = arith.constant 0 : index
    %298 = vector.load %arg5[%c5, %c0_61] : memref<8x128xf32, #tpu.memory_space<vmem>>, vector<1x64xf32>
    %cst_62 = arith.constant dense<0.000000e+00> : vector<16x64xf32>
    %299 = tpu.matmul %296, %297, %cst_62 {dimension_numbers = #tpu.dot_dimension_numbers<[1], [0], [0], [1], [0, 0, 1, 1], [], []>} : vector<16x32xf32>, vector<32x64xf32>, vector<16x64xf32> -> vector<16x64xf32>
    %300 = vector.broadcast %298 : vector<1x64xf32> to vector<16x64xf32>
    %301 = arith.addf %299, %300 : vector<16x64xf32>
    %cst_63 = arith.constant 0.000000e+00 : f32
    %302 = vector.broadcast %cst_63 : f32 to vector<16x64xf32>
    %303 = arith.maximumf %301, %302 : vector<16x64xf32>
    %c192 = arith.constant 192 : index
    %c0_64 = arith.constant 0 : index
    %304 = vector.load %arg4[%c192, %c0_64] : memref<256x128xf32, #tpu.memory_space<vmem>>, vector<64x16xf32>
    %c6 = arith.constant 6 : index
    %c0_65 = arith.constant 0 : index
    %305 = vector.load %arg5[%c6, %c0_65] : memref<8x128xf32, #tpu.memory_space<vmem>>, vector<1x16xf32>
    %cst_66 = arith.constant dense<0.000000e+00> : vector<16x16xf32>
    %306 = tpu.matmul %303, %304, %cst_66 {dimension_numbers = #tpu.dot_dimension_numbers<[1], [0], [0], [1], [0, 0, 1, 1], [], []>} : vector<16x64xf32>, vector<64x16xf32>, vector<16x16xf32> -> vector<16x16xf32>
    %307 = vector.broadcast %305 : vector<1x16xf32> to vector<16x16xf32>
    %308 = arith.addf %306, %307 : vector<16x16xf32>
    %309 = tpu.concatenate %308, %284 in 1 : vector<16x16xf32>, vector<16x16xf32> -> vector<16x32xf32>
    %c0_67 = arith.constant 0 : index
    %c0_68 = arith.constant 0 : index
    %310 = vector.load %arg6[%c0_67, %c0_68] : memref<16x32xf32, #tpu.memory_space<vmem>>, vector<16x32xf32>
    tpu.vector_store %arg6[%c0_67, %c0_68], %309 {strides = array<i32>} : memref<16x32xf32, #tpu.memory_space<vmem>>, vector<16x32xf32>,
    %c0_69 = arith.constant 0 : index
    %c0_70 = arith.constant 0 : index
    %311 = vector.load %arg3[%c0_69, %c0_70] : memref<16x16xf32, #tpu.memory_space<vmem>>, vector<16x16xf32>
    %cst_71 = arith.constant 0.000000e+00 : f32
    %312 = vector.broadcast %cst_71 : f32 to vector<16x16xf32>
    %313 = arith.maximumf %308, %312 : vector<16x16xf32>
    %314 = arith.mulf %308, %311 : vector<16x16xf32>
    %315 = arith.subf %313, %314 : vector<16x16xf32>
    %316 = math.absf %308 : vector<16x16xf32>
    %cst_72 = arith.constant 0.000000e+00 : f32
    %317 = vector.broadcast %cst_72 : f32 to vector<16x16xf32>
    %318 = arith.subf %317, %316 : vector<16x16xf32>
    %319 = math.exp %318 : vector<16x16xf32>
    %cst_73 = arith.constant 1.000000e+00 : f32
    %320 = vector.broadcast %cst_73 : f32 to vector<16x16xf32>
    %321 = arith.addf %320, %319 : vector<16x16xf32>
    %322 = math.log %321 : vector<16x16xf32>
    %323 = arith.addf %315, %322 : vector<16x16xf32>
    %324 = vector.shape_cast %323 : vector<16x16xf32> to vector<1x16x16xf32>
    %cst_74 = arith.constant dense<0.000000e+00> : vector<1xf32>
    %325 = vector.multi_reduction <add>, %324, %cst_74 [1, 2] : vector<1x16x16xf32> to vector<1xf32>
    %326 = vector.shape_cast %325 : vector<1xf32> to vector<1x1x1xf32>
    %327 = vector.extract %326[0, 0, 0] : f32 from vector<1x1x1xf32>
    %cst_75 = arith.constant 6.250000e-02 : f32
    %328 = arith.mulf %327, %cst_75 : f32
    %c0_76 = arith.constant 0 : index
    %329 = memref.load %arg7[%c0_76] : memref<1xf32, #tpu.memory_space<smem>>
    memref.store %328, %arg7[%c0_76] : memref<1xf32, #tpu.memory_space<smem>>
    return
  }
  func.func @transform_0(%arg0: i32) -> (i32, i32) {
    %c0_i32 = arith.constant 0 : i32
    %c0_i32_0 = arith.constant 0 : i32
    %c0_i32_1 = arith.constant 0 : i32
    return %c0_i32, %c0_i32_0 : i32, i32
  }
  func.func @transform_1(%arg0: i32) -> (i32, i32, i32) {
    %c0_i32 = arith.constant 0 : i32
    %c0_i32_0 = arith.constant 0 : i32
    %c0_i32_1 = arith.constant 0 : i32
    %c0_i32_2 = arith.constant 0 : i32
    return %c0_i32, %c0_i32_0, %c0_i32_1 : i32, i32, i32
  }
  func.func @transform_2(%arg0: i32) -> (i32, i32) {
    %c0_i32 = arith.constant 0 : i32
    %c0_i32_0 = arith.constant 0 : i32
    %c0_i32_1 = arith.constant 0 : i32
    return %c0_i32, %c0_i32_0 : i32, i32
  }
  func.func @transform_3(%arg0: i32) -> (i32, i32) {
    %c0_i32 = arith.constant 0 : i32
    %c0_i32_0 = arith.constant 0 : i32
    %c0_i32_1 = arith.constant 0 : i32
    return %c0_i32, %c0_i32_0 : i32, i32
  }
  func.func @transform_4(%arg0: i32) -> (i32, i32) {
    %c0_i32 = arith.constant 0 : i32
    %c0_i32_0 = arith.constant 0 : i32
    %c0_i32_1 = arith.constant 0 : i32
    return %c0_i32, %c0_i32_0 : i32, i32
  }
  func.func @transform_5(%arg0: i32) -> (i32, i32) {
    %c0_i32 = arith.constant 0 : i32
    %c0_i32_0 = arith.constant 0 : i32
    %c0_i32_1 = arith.constant 0 : i32
    return %c0_i32, %c0_i32_0 : i32, i32
  }
  func.func @transform_6(%arg0: i32) -> i32 {
    %c0_i32 = arith.constant 0 : i32
    %c0_i32_0 = arith.constant 0 : i32
    return %c0_i32 : i32
  }
}

</mosaic_0001>

<llo_original>
// kernel: run_base_model.1
$region0: #{run_base_model.1}
  #allocation0 [shape = 'u32[]', space=smem, size = 0x4, offset = 0x4, fixed_abs, tag = 'smem constant byte address 0x4 - core index']
  #allocation1 [shape = 'u32[144,128]{1,0:T(1,128)}', space=vmem, size = 0x12000, scoped, tag = 'internal scratch']
  %s0 = inlined_call_operand.vmem [shape: s32[128,1], index: 0, kind: input, shape index: {}]
  %s1 = inlined_call_operand.hbm [shape: f32[16,16,32], index: 1, kind: input, shape index: {}]
  %s2 = inlined_call_operand.vmem [shape: f32[16,16], index: 2, kind: input, shape index: {}]
  %s3 = inlined_call_operand.hbm [shape: f32[256,128], index: 3, kind: input, shape index: {}]
  %s4 = inlined_call_operand.vmem [shape: f32[8,128], index: 4, kind: input, shape index: {}]
  %s5 = inlined_call_operand.vmem [shape: f32[16,32], index: 5, kind: output, shape index: {0}]
  %s6 = inlined_call_operand.hbm [shape: f32[1], index: 6, kind: output, shape index: {1}]
  %7 = xla_tuple %s5, %s6
  %s8 = sld [smem:[#allocation0]]
  $region46: #{run_base_model.1} parent=0
    _
  %s10 = ssub.s32 1, %s8
  %s11 = scalar_select 0, %s10, %s8
  $region1: #{run_base_model.1} parent=0
    #allocation2 [shape = 'u8[131072]{0}', space=vmem, size = 0x20000, scoped, tag = 'input window, operand 1, single buffered']
    #allocation3 [shape = 's32[1]{0}', space=sflag, size = 0x4, scoped, tag = 'scoped memory for run_base_model.1']
    #allocation4 [shape = 's32[1]{0}', space=sflag, size = 0x4, scoped, tag = 'scoped memory for run_base_model.1']
    #allocation5 [shape = 'u8[131072]{0}', space=vmem, size = 0x20000, scoped, tag = 'input window, operand 3, single buffered']
    #allocation6 [shape = 's32[1]{0}', space=sflag, size = 0x4, scoped, tag = 'scoped memory for run_base_model.1']
    #allocation7 [shape = 'u8[512]{0}', space=smem, size = 0x200, scoped, tag = 'output window, operand 1, single buffered']
    %12 = vsyncpa [#allocation3], 0
    %13 = vsyncpa [#allocation6], 0
    %14 = vsyncpa [#allocation4], 0
    // Predicated region
    $region2: #{run_base_model.1} parent=1 // pred_check
      _
    $region3: #{run_base_model.1} parent=1 // pred_check_branch
      %16 = sbr.rel (0) target = $region5
    $region4: #{run_base_model.1} parent=1 // pred_region
      _
    $region5: #{run_base_model.1} parent=1 // pred_fallthru
      _
    // Predicated region
    $region6: #{run_base_model.1} parent=1 // pred_check
      _
    $region7: #{run_base_model.1} parent=1 // pred_check_branch
      %18 = sbr.rel (0) target = $region9
    $region8: #{run_base_model.1} parent=1 // pred_region
      %s20 = ssub.s32 4096, 4096
      %21 = vsyncadd [#allocation3], %s20
      %s22 = sshll.u32 [#allocation2], 4
      %s23 = int_to_ptr.vmem [resolvable:$true] %s22
      %28 = dma.hbm_to_vmem [thread:$0]  %s1, 4096, %s23, [#allocation3], 128, 128, 8
    $region9: #{run_base_model.1} parent=1 // pred_fallthru
      _
    // Predicated region
    $region10: #{run_base_model.1} parent=1 // pred_check
      _
    $region11: #{run_base_model.1} parent=1 // pred_check_branch
      %30 = sbr.rel (0) target = $region13
    $region12: #{run_base_model.1} parent=1 // pred_region
      _
    $region13: #{run_base_model.1} parent=1 // pred_fallthru
      _
    // Predicated region
    $region14: #{run_base_model.1} parent=1 // pred_check
      _
    $region15: #{run_base_model.1} parent=1 // pred_check_branch
      %32 = sbr.rel (0) target = $region17
    $region16: #{run_base_model.1} parent=1 // pred_region
      %s34 = ssub.s32 4096, 4096
      %35 = vsyncadd [#allocation6], %s34
      %s36 = sshll.u32 [#allocation5], 4
      %s37 = int_to_ptr.vmem [resolvable:$true] %s36
      %42 = dma.hbm_to_vmem [thread:$0]  %s3, 4096, %s37, [#allocation6], 128, 128, 8
    $region17: #{run_base_model.1} parent=1 // pred_fallthru
      _
    // Predicated region
    $region18: #{run_base_model.1} parent=1 // pred_check
      _
    $region19: #{run_base_model.1} parent=1 // pred_check_branch
      %44 = sbr.rel (0) target = $region21
    $region20: #{run_base_model.1} parent=1 // pred_region
      _
    $region21: #{run_base_model.1} parent=1 // pred_fallthru
      _
    // Predicated region
    $region22: #{run_base_model.1} parent=1 // pred_check
      _
    $region23: #{run_base_model.1} parent=1 // pred_check_branch
      %46 = sbr.rel (0) target = $region25
    $region24: #{run_base_model.1} parent=1 // pred_region
      %47 = dma.done [#allocation3], 4096
    $region25: #{run_base_model.1} parent=1 // pred_fallthru
      _
    // Predicated region
    $region26: #{run_base_model.1} parent=1 // pred_check
      _
    $region27: #{run_base_model.1} parent=1 // pred_check_branch
      %49 = sbr.rel (0) target = $region29
    $region28: #{run_base_model.1} parent=1 // pred_region
      %50 = dma.done [#allocation6], 4096
    $region29: #{run_base_model.1} parent=1 // pred_fallthru
      _
    %v51 = vld [vmem:[%s0] sm:$0xff]
    %v52 = vld [vmem:[%s0 + $0x8] sm:$0xff]
    %v53 = vld [vmem:[%s0 + $0x10] sm:$0xff]
    %v54 = vld [vmem:[%s0 + $0x18] sm:$0xff]
    %v55 = vld [vmem:[%s0 + $0x20] sm:$0xff]
    %v56 = vld [vmem:[%s0 + $0x28] sm:$0xff]
    %v57 = vld [vmem:[%s0 + $0x30] sm:$0xff]
    %v58 = vld [vmem:[%s0 + $0x38] sm:$0xff]
    %v59 = vld [vmem:[%s0 + $0x40] sm:$0xff]
    %v60 = vld [vmem:[%s0 + $0x48] sm:$0xff]
    %v61 = vld [vmem:[%s0 + $0x50] sm:$0xff]
    %v62 = vld [vmem:[%s0 + $0x58] sm:$0xff]
    %v63 = vld [vmem:[%s0 + $0x60] sm:$0xff]
    %v64 = vld [vmem:[%s0 + $0x68] sm:$0xff]
    %v65 = vld [vmem:[%s0 + $0x70] sm:$0xff]
    %v66 = vld [vmem:[%s0 + $0x78] sm:$0xff]
    %v67 = vlaneseq
    %v68 = vand.u32 %v67, 127
    %69 = vset.pattern.permute.xlu0 0
    %70 = vperm.xlu0 %69, %v51
    %v71 = vpop.permute.xlu0 %70
    %72 = vset.pattern.permute.xlu0 0
    %73 = vperm.xlu0 %72, %v52
    %v74 = vpop.permute.xlu0 %73
    %75 = vset.pattern.permute.xlu0 0
    %76 = vperm.xlu0 %75, %v53
    %v77 = vpop.permute.xlu0 %76
    %78 = vset.pattern.permute.xlu0 0
    %79 = vperm.xlu0 %78, %v54
    %v80 = vpop.permute.xlu0 %79
    %81 = vset.pattern.permute.xlu0 0
    %82 = vperm.xlu0 %81, %v55
    %v83 = vpop.permute.xlu0 %82
    %84 = vset.pattern.permute.xlu0 0
    %85 = vperm.xlu0 %84, %v56
    %v86 = vpop.permute.xlu0 %85
    %87 = vset.pattern.permute.xlu0 0
    %88 = vperm.xlu0 %87, %v57
    %v89 = vpop.permute.xlu0 %88
    %90 = vset.pattern.permute.xlu0 0
    %91 = vperm.xlu0 %90, %v58
    %v92 = vpop.permute.xlu0 %91
    %93 = vset.pattern.permute.xlu0 0
    %94 = vperm.xlu0 %93, %v59
    %v95 = vpop.permute.xlu0 %94
    %96 = vset.pattern.permute.xlu0 0
    %97 = vperm.xlu0 %96, %v60
    %v98 = vpop.permute.xlu0 %97
    %99 = vset.pattern.permute.xlu0 0
    %100 = vperm.xlu0 %99, %v61
    %v101 = vpop.permute.xlu0 %100
    %102 = vset.pattern.permute.xlu0 0
    %103 = vperm.xlu0 %102, %v62
    %v104 = vpop.permute.xlu0 %103
    %105 = vset.pattern.permute.xlu0 0
    %106 = vperm.xlu0 %105, %v63
    %v107 = vpop.permute.xlu0 %106
    %108 = vset.pattern.permute.xlu0 0
    %109 = vperm.xlu0 %108, %v64
    %v110 = vpop.permute.xlu0 %109
    %111 = vset.pattern.permute.xlu0 0
    %112 = vperm.xlu0 %111, %v65
    %v113 = vpop.permute.xlu0 %112
    %114 = vset.pattern.permute.xlu0 0
    %115 = vperm.xlu0 %114, %v66
    %v116 = vpop.permute.xlu0 %115
    %vm117 = vcmp.eq.s32.totalorder %v68, %v71
    %vm118 = vcmp.eq.s32.totalorder %v68, %v74
    %vm119 = vcmp.eq.s32.totalorder %v68, %v77
    %vm120 = vcmp.eq.s32.totalorder %v68, %v80
    %vm121 = vcmp.eq.s32.totalorder %v68, %v83
    %vm122 = vcmp.eq.s32.totalorder %v68, %v86
    %vm123 = vcmp.eq.s32.totalorder %v68, %v89
    %vm124 = vcmp.eq.s32.totalorder %v68, %v92
    %vm125 = vcmp.eq.s32.totalorder %v68, %v95
    %vm126 = vcmp.eq.s32.totalorder %v68, %v98
    %vm127 = vcmp.eq.s32.totalorder %v68, %v101
    %vm128 = vcmp.eq.s32.totalorder %v68, %v104
    %vm129 = vcmp.eq.s32.totalorder %v68, %v107
    %vm130 = vcmp.eq.s32.totalorder %v68, %v110
    %vm131 = vcmp.eq.s32.totalorder %v68, %v113
    %vm132 = vcmp.eq.s32.totalorder %v68, %v116
    %v133 = vsel %vm117, 1, 0
    %v134 = vsel %vm118, 1, 0
    %v135 = vsel %vm119, 1, 0
    %v136 = vsel %vm120, 1, 0
    %v137 = vsel %vm121, 1, 0
    %v138 = vsel %vm122, 1, 0
    %v139 = vsel %vm123, 1, 0
    %v140 = vsel %vm124, 1, 0
    %v141 = vsel %vm125, 1, 0
    %v142 = vsel %vm126, 1, 0
    %v143 = vsel %vm127, 1, 0
    %v144 = vsel %vm128, 1, 0
    %v145 = vsel %vm129, 1, 0
    %v146 = vsel %vm130, 1, 0
    %v147 = vsel %vm131, 1, 0
    %v148 = vsel %vm132, 1, 0
    %v149 = vcvt.s32.f32 %v133
    %v150 = vcvt.s32.f32 %v134
    %v151 = vcvt.s32.f32 %v135
    %v152 = vcvt.s32.f32 %v136
    %v153 = vcvt.s32.f32 %v137
    %v154 = vcvt.s32.f32 %v138
    %v155 = vcvt.s32.f32 %v139
    %v156 = vcvt.s32.f32 %v140
    %v157 = vcvt.s32.f32 %v141
    %v158 = vcvt.s32.f32 %v142
    %v159 = vcvt.s32.f32 %v143
    %v160 = vcvt.s32.f32 %v144
    %v161 = vcvt.s32.f32 %v145
    %v162 = vcvt.s32.f32 %v146
    %v163 = vcvt.s32.f32 %v147
    %v164 = vcvt.s32.f32 %v148
    %v165 = vld [vmem:[#allocation5] sm:$0xff]
    %v166 = vld [vmem:[#allocation5 + $0x8] sm:$0xff]
    %v167 = vld [vmem:[#allocation5 + $0x10] sm:$0xff]
    %v168 = vld [vmem:[#allocation5 + $0x18] sm:$0xff]
    %v169 = vld [vmem:[%s4] sm:$0x1]
    %v170 = vlaneseq
    %v171 = vshrl.u32 %v170, 7
    %v172 = vsub.s32 0, %v171
    %v173 = vrot.slane %v169, %v172
    %vm174 = vcmask 261120
    %v176 = vsel %vm174, %v149, 0
    %v179 = vsel %vm174, %v150, 0
    %v182 = vsel %vm174, %v151, 0
    %v185 = vsel %vm174, %v152, 0
    %v188 = vsel %vm174, %v153, 0
    %v191 = vsel %vm174, %v154, 0
    %v194 = vsel %vm174, %v155, 0
    %v197 = vsel %vm174, %v156, 0
    %v200 = vsel %vm174, %v157, 0
    %v203 = vsel %vm174, %v158, 0
    %v206 = vsel %vm174, %v159, 0
    %v209 = vsel %vm174, %v160, 0
    %v212 = vsel %vm174, %v161, 0
    %v215 = vsel %vm174, %v162, 0
    %v218 = vsel %vm174, %v163, 0
    %v221 = vsel %vm174, %v164, 0
    %223 = vmatprep.subr.mxu0 0.0
    %224 = vmatpush1.msra.mxu0 0.0
    %225 = vmatprep.subr.mxu0 0.0
    %226 = vmatpush1.msra.mxu0 0.0
    %227 = vmatprep.subr.mxu0 0.0
    %228 = vmatpush1.msra.mxu0 0.0
    %229 = vmatprep.subr.mxu0 0.0
    %230 = vmatpush1.msra.mxu0 0.0
    %231 = vmatprep.subr.mxu0 0.0
    %232 = vmatpush1.msra.mxu0 0.0
    %233 = vmatprep.subr.mxu0 0.0
    %234 = vmatpush1.msra.mxu0 0.0
    %235 = vmatprep.subr.mxu0 0.0
    %236 = vmatpush1.msra.mxu0 0.0
    %237 = vmatprep.subr.mxu0 0.0
    %238 = vmatpush1.msra.mxu0 0.0
    %239 = vmatprep.subr.mxu0 0.0
    %240 = vmatpush1.msra.mxu0 0.0
    %241 = vmatprep.subr.mxu0 0.0
    %242 = vmatpush1.msra.mxu0 0.0
    %243 = vmatprep.subr.mxu0 0.0
    %244 = vmatpush1.msra.mxu0 0.0
    %245 = vmatprep.subr.mxu0 0.0
    %246 = vmatpush1.msra.mxu0 0.0
    %247 = vmatprep.subr.mxu0 0.0
    %248 = vmatpush1.msra.mxu0 %v168
    %249 = vmatprep.subr.mxu0 0.0
    %250 = vmatpush1.msra.mxu0 %v167
    %251 = vmatprep.subr.mxu0 0.0
    %252 = vmatpush1.msra.mxu0 %v166
    %253 = vmatprep.subr.mxu0 0.0
    %254 = vmatpush1.msra.mxu0 %v165
    %255 = vmatprep.subr.mxu0 0.0
    %256 = vmatpush2.msra.mxu0 0.0
    %257 = vmatprep.subr.mxu0 0.0
    %258 = vmatpush2.msra.mxu0 0.0
    %259 = vmatprep.subr.mxu0 0.0
    %260 = vmatpush2.msra.mxu0 0.0
    %261 = vmatprep.subr.mxu0 0.0
    %262 = vmatpush2.msra.mxu0 0.0
    %263 = vmatprep.subr.mxu0 0.0
    %264 = vmatpush2.msra.mxu0 0.0
    %265 = vmatprep.subr.mxu0 0.0
    %266 = vmatpush2.msra.mxu0 0.0
    %267 = vmatprep.subr.mxu0 0.0
    %268 = vmatpush2.msra.mxu0 0.0
    %269 = vmatprep.subr.mxu0 0.0
    %270 = vmatpush2.msra.mxu0 0.0
    %271 = vmatprep.subr.mxu0 0.0
    %272 = vmatpush2.msra.mxu0 0.0
    %273 = vmatprep.subr.mxu0 0.0
    %274 = vmatpush2.msra.mxu0 0.0
    %275 = vmatprep.subr.mxu0 0.0
    %276 = vmatpush2.msra.mxu0 0.0
    %277 = vmatprep.subr.mxu0 0.0
    %278 = vmatpush2.msra.mxu0 0.0
    %279 = vmatprep.subr.mxu0 0.0
    %280 = vmatpush2.msra.mxu0 0.0
    %281 = vmatprep.subr.mxu0 0.0
    %282 = vmatpush2.msra.mxu0 0.0
    %283 = vmatprep.subr.mxu0 0.0
    %284 = vmatpush2.msra.mxu0 0.0
    %285 = vmatprep.subr.mxu0 0.0
    %286 = vmatpush2.msra.mxu0 0.0
    %287 = vmatprep.mubr.f32.mxu0 0.0
    %288 = vmatmul.mubr.f32.gmra.mxu0 %v176
    %v289 = vpop.f32.mrf.mxu0
    %v290 = vadd.f32 %v173, %v289
    %v291 = vpop.f32.mrf.mxu0
    %292 = vmatprep.mubr.f32.mxu0 0.0
    %293 = vmatmul.mubr.f32.gmra.mxu0 %v179
    %v294 = vpop.f32.mrf.mxu0
    %v295 = vadd.f32 %v173, %v294
    %v296 = vpop.f32.mrf.mxu0
    %297 = vmatprep.mubr.f32.mxu0 0.0
    %298 = vmatmul.mubr.f32.gmra.mxu0 %v182
    %v299 = vpop.f32.mrf.mxu0
    %v300 = vadd.f32 %v173, %v299
    %v301 = vpop.f32.mrf.mxu0
    %302 = vmatprep.mubr.f32.mxu0 0.0
    %303 = vmatmul.mubr.f32.gmra.mxu0 %v185
    %v304 = vpop.f32.mrf.mxu0
    %v305 = vadd.f32 %v173, %v304
    %v306 = vpop.f32.mrf.mxu0
    %307 = vmatprep.mubr.f32.mxu0 0.0
    %308 = vmatmul.mubr.f32.gmra.mxu0 %v188
    %v309 = vpop.f32.mrf.mxu0
    %v310 = vadd.f32 %v173, %v309
    %v311 = vpop.f32.mrf.mxu0
    %312 = vmatprep.mubr.f32.mxu0 0.0
    %313 = vmatmul.mubr.f32.gmra.mxu0 %v191
    %v314 = vpop.f32.mrf.mxu0
    %v315 = vadd.f32 %v173, %v314
    %v316 = vpop.f32.mrf.mxu0
    %317 = vmatprep.mubr.f32.mxu0 0.0
    %318 = vmatmul.mubr.f32.gmra.mxu0 %v194
    %v319 = vpop.f32.mrf.mxu0
    %v320 = vadd.f32 %v173, %v319
    %v321 = vpop.f32.mrf.mxu0
    %322 = vmatprep.mubr.f32.mxu0 0.0
    %323 = vmatmul.mubr.f32.gmra.mxu0 %v197
    %v324 = vpop.f32.mrf.mxu0
    %v325 = vadd.f32 %v173, %v324
    %v326 = vpop.f32.mrf.mxu0
    %327 = vmatprep.mubr.f32.mxu0 0.0
    %328 = vmatmul.mubr.f32.gmra.mxu0 %v200
    %v329 = vpop.f32.mrf.mxu0
    %v330 = vadd.f32 %v173, %v329
    %v331 = vpop.f32.mrf.mxu0
    %332 = vmatprep.mubr.f32.mxu0 0.0
    %333 = vmatmul.mubr.f32.gmra.mxu0 %v203
    %v334 = vpop.f32.mrf.mxu0
    %v335 = vadd.f32 %v173, %v334
    %v336 = vpop.f32.mrf.mxu0
    %337 = vmatprep.mubr.f32.mxu0 0.0
    %338 = vmatmul.mubr.f32.gmra.mxu0 %v206
    %v339 = vpop.f32.mrf.mxu0
    %v340 = vadd.f32 %v173, %v339
    %v341 = vpop.f32.mrf.mxu0
    %342 = vmatprep.mubr.f32.mxu0 0.0
    %343 = vmatmul.mubr.f32.gmra.mxu0 %v209
    %v344 = vpop.f32.mrf.mxu0
    %v345 = vadd.f32 %v173, %v344
    %v346 = vpop.f32.mrf.mxu0
    %347 = vmatprep.mubr.f32.mxu0 0.0
    %348 = vmatmul.mubr.f32.gmra.mxu0 %v212
    %v349 = vpop.f32.mrf.mxu0
    %v350 = vadd.f32 %v173, %v349
    %v351 = vpop.f32.mrf.mxu0
    %352 = vmatprep.mubr.f32.mxu0 0.0
    %353 = vmatmul.mubr.f32.gmra.mxu0 %v215
    %v354 = vpop.f32.mrf.mxu0
    %v355 = vadd.f32 %v173, %v354
    %v356 = vpop.f32.mrf.mxu0
    %357 = vmatprep.mubr.f32.mxu0 0.0
    %358 = vmatmul.mubr.f32.gmra.mxu0 %v218
    %v359 = vpop.f32.mrf.mxu0
    %v360 = vadd.f32 %v173, %v359
    %v361 = vpop.f32.mrf.mxu0
    %362 = vmatprep.mubr.f32.mxu0 0.0
    %363 = vmatmul.mubr.f32.gmra.mxu0 %v221
    %v364 = vpop.f32.mrf.mxu0
    %v365 = vadd.f32 %v173, %v364
    %v366 = vpop.f32.mrf.mxu0
    %367 = vdwg.mxu0
    %v368 = vld [vmem:[#allocation5 + $0x20] sm:$0xff]
    %v369 = vld [vmem:[#allocation5 + $0x28] sm:$0xff]
    %v370 = vld [vmem:[#allocation5 + $0x30] sm:$0xff]
    %v371 = vld [vmem:[#allocation5 + $0x38] sm:$0xff]
    %v373 = vsel %vm174, 0.0, 0
    %375 = vmatprep.subr.mxu0 0.0
    %376 = vmatpush1.msra.mxu0 0.0
    %377 = vmatprep.subr.mxu0 0.0
    %378 = vmatpush1.msra.mxu0 0.0
    %379 = vmatprep.subr.mxu0 0.0
    %380 = vmatpush1.msra.mxu0 0.0
    %381 = vmatprep.subr.mxu0 0.0
    %382 = vmatpush1.msra.mxu0 0.0
    %383 = vmatprep.subr.mxu0 0.0
    %384 = vmatpush1.msra.mxu0 0.0
    %385 = vmatprep.subr.mxu0 0.0
    %386 = vmatpush1.msra.mxu0 0.0
    %387 = vmatprep.subr.mxu0 0.0
    %388 = vmatpush1.msra.mxu0 0.0
    %389 = vmatprep.subr.mxu0 0.0
    %390 = vmatpush1.msra.mxu0 0.0
    %391 = vmatprep.subr.mxu0 0.0
    %392 = vmatpush1.msra.mxu0 0.0
    %393 = vmatprep.subr.mxu0 0.0
    %394 = vmatpush1.msra.mxu0 0.0
    %395 = vmatprep.subr.mxu0 0.0
    %396 = vmatpush1.msra.mxu0 0.0
    %397 = vmatprep.subr.mxu0 0.0
    %398 = vmatpush1.msra.mxu0 0.0
    %399 = vmatprep.subr.mxu0 0.0
    %400 = vmatpush1.msra.mxu0 %v371
    %401 = vmatprep.subr.mxu0 0.0
    %402 = vmatpush1.msra.mxu0 %v370
    %403 = vmatprep.subr.mxu0 0.0
    %404 = vmatpush1.msra.mxu0 %v369
    %405 = vmatprep.subr.mxu0 0.0
    %406 = vmatpush1.msra.mxu0 %v368
    %407 = vmatprep.subr.mxu0 0.0
    %408 = vmatpush2.msra.mxu0 0.0
    %409 = vmatprep.subr.mxu0 0.0
    %410 = vmatpush2.msra.mxu0 0.0
    %411 = vmatprep.subr.mxu0 0.0
    %412 = vmatpush2.msra.mxu0 0.0
    %413 = vmatprep.subr.mxu0 0.0
    %414 = vmatpush2.msra.mxu0 0.0
    %415 = vmatprep.subr.mxu0 0.0
    %416 = vmatpush2.msra.mxu0 0.0
    %417 = vmatprep.subr.mxu0 0.0
    %418 = vmatpush2.msra.mxu0 0.0
    %419 = vmatprep.subr.mxu0 0.0
    %420 = vmatpush2.msra.mxu0 0.0
    %421 = vmatprep.subr.mxu0 0.0
    %422 = vmatpush2.msra.mxu0 0.0
    %423 = vmatprep.subr.mxu0 0.0
    %424 = vmatpush2.msra.mxu0 0.0
    %425 = vmatprep.subr.mxu0 0.0
    %426 = vmatpush2.msra.mxu0 0.0
    %427 = vmatprep.subr.mxu0 0.0
    %428 = vmatpush2.msra.mxu0 0.0
    %429 = vmatprep.subr.mxu0 0.0
    %430 = vmatpush2.msra.mxu0 0.0
    %431 = vmatprep.subr.mxu0 0.0
    %432 = vmatpush2.msra.mxu0 0.0
    %433 = vmatprep.subr.mxu0 0.0
    %434 = vmatpush2.msra.mxu0 0.0
    %435 = vmatprep.subr.mxu0 0.0
    %436 = vmatpush2.msra.mxu0 0.0
    %437 = vmatprep.subr.mxu0 0.0
    %438 = vmatpush2.msra.mxu0 0.0
    %439 = vmatprep.mubr.f32.mxu0 0.0
    %440 = vmatmul.mubr.f32.gmra.mxu0 %v373
    %v441 = vpop.f32.mrf.mxu0
    %v442 = vadd.f32 0.0, %v441
    %v443 = vpop.f32.mrf.mxu0
    %444 = vmatprep.mubr.f32.mxu0 0.0
    %445 = vmatmul.mubr.f32.gmra.mxu0 %v373
    %v446 = vpop.f32.mrf.mxu0
    %v447 = vadd.f32 0.0, %v446
    %v448 = vpop.f32.mrf.mxu0
    %449 = vdwg.mxu0
    %v450 = vadd.f32 %v290, %v442
    %v451 = vadd.f32 %v295, %v447
    %v452 = vxor.u32 %v450, 2147483648
    %v453 = vxor.u32 %v451, 2147483648
    %v454 = vmul.f32 %v452, 1.442695
    %v455 = vpow.pop %v454
    %v456 = vmul.f32 %v453, 1.442695
    %v457 = vpow.pop %v456
    %v458 = vadd.f32 %v455, 1.0
    %v459 = vadd.f32 %v457, 1.0
    %v460 = vrcp.pop %v458
    %v461 = vmul.f32 1.0, %v460
    %v462 = vrcp.pop %v459
    %v463 = vmul.f32 1.0, %v462
    %466 = vrot.lane.b32.xlu0 %v442, 96
    %v467 = vpop.permute.xlu0 %466
    %468 = vrot.lane.b32.xlu0 %v447, 96
    %v469 = vpop.permute.xlu0 %468
    %v472 = vmul.f32 %v461, %v467
    %v473 = vmul.f32 %v463, %v469
    %476 = vrot.lane.b32.xlu0 %v472, 32
    %v477 = vpop.permute.xlu0 %476
    %478 = vrot.lane.b32.xlu0 %v473, 32
    %v479 = vpop.permute.xlu0 %478
    %v482 = vadd.f32 %v290, %v477
    %v483 = vadd.f32 %v295, %v479
    %v484 = vtanh.pop %v482
    %v485 = vtanh.pop %v483
    %v486 = vsub.f32 1.0, %v461
    %v487 = vsub.f32 1.0, %v463
    %490 = vrot.lane.b32.xlu0 %v484, 64
    %v491 = vpop.permute.xlu0 %490
    %492 = vrot.lane.b32.xlu0 %v485, 64
    %v493 = vpop.permute.xlu0 %492
    %v496 = vmul.f32 %v486, %v491
    %v497 = vmul.f32 %v487, %v493
    %v498 = vmul.f32 %v461, 0.0
    %v499 = vmul.f32 %v463, 0.0
    %v500 = vadd.f32 %v496, %v498
    %v501 = vadd.f32 %v497, %v499
    %v503 = vsel %vm174, %v500, 0
    %v506 = vsel %vm174, %v501, 0
    %508 = vmatprep.subr.mxu0 0.0
    %509 = vmatpush1.msra.mxu0 0.0
    %510 = vmatprep.subr.mxu0 0.0
    %511 = vmatpush1.msra.mxu0 0.0
    %512 = vmatprep.subr.mxu0 0.0
    %513 = vmatpush1.msra.mxu0 0.0
    %514 = vmatprep.subr.mxu0 0.0
    %515 = vmatpush1.msra.mxu0 0.0
    %516 = vmatprep.subr.mxu0 0.0
    %517 = vmatpush1.msra.mxu0 0.0
    %518 = vmatprep.subr.mxu0 0.0
    %519 = vmatpush1.msra.mxu0 0.0
    %520 = vmatprep.subr.mxu0 0.0
    %521 = vmatpush1.msra.mxu0 0.0
    %522 = vmatprep.subr.mxu0 0.0
    %523 = vmatpush1.msra.mxu0 0.0
    %524 = vmatprep.subr.mxu0 0.0
    %525 = vmatpush1.msra.mxu0 0.0
    %526 = vmatprep.subr.mxu0 0.0
    %527 = vmatpush1.msra.mxu0 0.0
    %528 = vmatprep.subr.mxu0 0.0
    %529 = vmatpush1.msra.mxu0 0.0
    %530 = vmatprep.subr.mxu0 0.0
    %531 = vmatpush1.msra.mxu0 0.0
    %532 = vmatprep.subr.mxu0 0.0
    %533 = vmatpush1.msra.mxu0 %v371
    %534 = vmatprep.subr.mxu0 0.0
    %535 = vmatpush1.msra.mxu0 %v370
    %536 = vmatprep.subr.mxu0 0.0
    %537 = vmatpush1.msra.mxu0 %v369
    %538 = vmatprep.subr.mxu0 0.0
    %539 = vmatpush1.msra.mxu0 %v368
    %540 = vmatprep.subr.mxu0 0.0
    %541 = vmatpush2.msra.mxu0 0.0
    %542 = vmatprep.subr.mxu0 0.0
    %543 = vmatpush2.msra.mxu0 0.0
    %544 = vmatprep.subr.mxu0 0.0
    %545 = vmatpush2.msra.mxu0 0.0
    %546 = vmatprep.subr.mxu0 0.0
    %547 = vmatpush2.msra.mxu0 0.0
    %548 = vmatprep.subr.mxu0 0.0
    %549 = vmatpush2.msra.mxu0 0.0
    %550 = vmatprep.subr.mxu0 0.0
    %551 = vmatpush2.msra.mxu0 0.0
    %552 = vmatprep.subr.mxu0 0.0
    %553 = vmatpush2.msra.mxu0 0.0
    %554 = vmatprep.subr.mxu0 0.0
    %555 = vmatpush2.msra.mxu0 0.0
    %556 = vmatprep.subr.mxu0 0.0
    %557 = vmatpush2.msra.mxu0 0.0
    %558 = vmatprep.subr.mxu0 0.0
    %559 = vmatpush2.msra.mxu0 0.0
    %560 = vmatprep.subr.mxu0 0.0
    %561 = vmatpush2.msra.mxu0 0.0
    %562 = vmatprep.subr.mxu0 0.0
    %563 = vmatpush2.msra.mxu0 0.0
    %564 = vmatprep.subr.mxu0 0.0
    %565 = vmatpush2.msra.mxu0 0.0
    %566 = vmatprep.subr.mxu0 0.0
    %567 = vmatpush2.msra.mxu0 0.0
    %568 = vmatprep.subr.mxu0 0.0
    %569 = vmatpush2.msra.mxu0 0.0
    %570 = vmatprep.subr.mxu0 0.0
    %571 = vmatpush2.msra.mxu0 0.0
    %572 = vmatprep.mubr.f32.mxu0 0.0
    %573 = vmatmul.mubr.f32.gmra.mxu0 %v503
    %v574 = vpop.f32.mrf.mxu0
    %v575 = vadd.f32 0.0, %v574
    %v576 = vpop.f32.mrf.mxu0
    %577 = vmatprep.mubr.f32.mxu0 0.0
    %578 = vmatmul.mubr.f32.gmra.mxu0 %v506
    %v579 = vpop.f32.mrf.mxu0
    %v580 = vadd.f32 0.0, %v579
    %v581 = vpop.f32.mrf.mxu0
    %582 = vdwg.mxu0
    %v583 = vadd.f32 %v300, %v575
    %v584 = vadd.f32 %v305, %v580
    %v585 = vxor.u32 %v583, 2147483648
    %v586 = vxor.u32 %v584, 2147483648
    %v587 = vmul.f32 %v585, 1.442695
    %v588 = vpow.pop %v587
    %v589 = vmul.f32 %v586, 1.442695
    %v590 = vpow.pop %v589
    %v591 = vadd.f32 %v588, 1.0
    %v592 = vadd.f32 %v590, 1.0
    %v593 = vrcp.pop %v591
    %v594 = vmul.f32 1.0, %v593
    %v595 = vrcp.pop %v592
    %v596 = vmul.f32 1.0, %v595
    %599 = vrot.lane.b32.xlu0 %v575, 96
    %v600 = vpop.permute.xlu0 %599
    %601 = vrot.lane.b32.xlu0 %v580, 96
    %v602 = vpop.permute.xlu0 %601
    %v605 = vmul.f32 %v594, %v600
    %v606 = vmul.f32 %v596, %v602
    %609 = vrot.lane.b32.xlu0 %v605, 32
    %v610 = vpop.permute.xlu0 %609
    %611 = vrot.lane.b32.xlu0 %v606, 32
    %v612 = vpop.permute.xlu0 %611
    %v615 = vadd.f32 %v300, %v610
    %v616 = vadd.f32 %v305, %v612
    %v617 = vtanh.pop %v615
    %v618 = vtanh.pop %v616
    %v619 = vsub.f32 1.0, %v594
    %v620 = vsub.f32 1.0, %v596
    %623 = vrot.lane.b32.xlu0 %v617, 64
    %v624 = vpop.permute.xlu0 %623
    %625 = vrot.lane.b32.xlu0 %v618, 64
    %v626 = vpop.permute.xlu0 %625
    %v629 = vmul.f32 %v619, %v624
    %v630 = vmul.f32 %v620, %v626
    %v631 = vmul.f32 %v594, %v500
    %v632 = vmul.f32 %v596, %v501
    %v633 = vadd.f32 %v629, %v631
    %v634 = vadd.f32 %v630, %v632
    %v636 = vsel %vm174, %v633, 0
    %v639 = vsel %vm174, %v634, 0
    %641 = vmatprep.subr.mxu0 0.0
    %642 = vmatpush1.msra.mxu0 0.0
    %643 = vmatprep.subr.mxu0 0.0
    %644 = vmatpush1.msra.mxu0 0.0
    %645 = vmatprep.subr.mxu0 0.0
    %646 = vmatpush1.msra.mxu0 0.0
    %647 = vmatprep.subr.mxu0 0.0
    %648 = vmatpush1.msra.mxu0 0.0
    %649 = vmatprep.subr.mxu0 0.0
    %650 = vmatpush1.msra.mxu0 0.0
    %651 = vmatprep.subr.mxu0 0.0
    %652 = vmatpush1.msra.mxu0 0.0
    %653 = vmatprep.subr.mxu0 0.0
    %654 = vmatpush1.msra.mxu0 0.0
    %655 = vmatprep.subr.mxu0 0.0
    %656 = vmatpush1.msra.mxu0 0.0
    %657 = vmatprep.subr.mxu0 0.0
    %658 = vmatpush1.msra.mxu0 0.0
    %659 = vmatprep.subr.mxu0 0.0
    %660 = vmatpush1.msra.mxu0 0.0
    %661 = vmatprep.subr.mxu0 0.0
    %662 = vmatpush1.msra.mxu0 0.0
    %663 = vmatprep.subr.mxu0 0.0
    %664 = vmatpush1.msra.mxu0 0.0
    %665 = vmatprep.subr.mxu0 0.0
    %666 = vmatpush1.msra.mxu0 %v371
    %667 = vmatprep.subr.mxu0 0.0
    %668 = vmatpush1.msra.mxu0 %v370
    %669 = vmatprep.subr.mxu0 0.0
    %670 = vmatpush1.msra.mxu0 %v369
    %671 = vmatprep.subr.mxu0 0.0
    %672 = vmatpush1.msra.mxu0 %v368
    %673 = vmatprep.subr.mxu0 0.0
    %674 = vmatpush2.msra.mxu0 0.0
    %675 = vmatprep.subr.mxu0 0.0
    %676 = vmatpush2.msra.mxu0 0.0
    %677 = vmatprep.subr.mxu0 0.0
    %678 = vmatpush2.msra.mxu0 0.0
    %679 = vmatprep.subr.mxu0 0.0
    %680 = vmatpush2.msra.mxu0 0.0
    %681 = vmatprep.subr.mxu0 0.0
    %682 = vmatpush2.msra.mxu0 0.0
    %683 = vmatprep.subr.mxu0 0.0
    %684 = vmatpush2.msra.mxu0 0.0
    %685 = vmatprep.subr.mxu0 0.0
    %686 = vmatpush2.msra.mxu0 0.0
    %687 = vmatprep.subr.mxu0 0.0
    %688 = vmatpush2.msra.mxu0 0.0
    %689 = vmatprep.subr.mxu0 0.0
    %690 = vmatpush2.msra.mxu0 0.0
    %691 = vmatprep.subr.mxu0 0.0
    %692 = vmatpush2.msra.mxu0 0.0
    %693 = vmatprep.subr.mxu0 0.0
    %694 = vmatpush2.msra.mxu0 0.0
    %695 = vmatprep.subr.mxu0 0.0
    %696 = vmatpush2.msra.mxu0 0.0
    %697 = vmatprep.subr.mxu0 0.0
    %698 = vmatpush2.msra.mxu0 0.0
    %699 = vmatprep.subr.mxu0 0.0
    %700 = vmatpush2.msra.mxu0 0.0
    %701 = vmatprep.subr.mxu0 0.0
    %702 = vmatpush2.msra.mxu0 0.0
    %703 = vmatprep.subr.mxu0 0.0
    %704 = vmatpush2.msra.mxu0 0.0
    %705 = vmatprep.mubr.f32.mxu0 0.0
    %706 = vmatmul.mubr.f32.gmra.mxu0 %v636
    %v707 = vpop.f32.mrf.mxu0
    %v708 = vadd.f32 0.0, %v707
    %v709 = vpop.f32.mrf.mxu0
    %710 = vmatprep.mubr.f32.mxu0 0.0
    %711 = vmatmul.mubr.f32.gmra.mxu0 %v639
    %v712 = vpop.f32.mrf.mxu0
    %v713 = vadd.f32 0.0, %v712
    %v714 = vpop.f32.mrf.mxu0
    %715 = vdwg.mxu0
    %v716 = vadd.f32 %v310, %v708
    %v717 = vadd.f32 %v315, %v713
    %v718 = vxor.u32 %v716, 2147483648
    %v719 = vxor.u32 %v717, 2147483648
    %v720 = vmul.f32 %v718, 1.442695
    %v721 = vpow.pop %v720
    %v722 = vmul.f32 %v719, 1.442695
    %v723 = vpow.pop %v722
    %v724 = vadd.f32 %v721, 1.0
    %v725 = vadd.f32 %v723, 1.0
    %v726 = vrcp.pop %v724
    %v727 = vmul.f32 1.0, %v726
    %v728 = vrcp.pop %v725
    %v729 = vmul.f32 1.0, %v728
    %732 = vrot.lane.b32.xlu0 %v708, 96
    %v733 = vpop.permute.xlu0 %732
    %734 = vrot.lane.b32.xlu0 %v713, 96
    %v735 = vpop.permute.xlu0 %734
    %v738 = vmul.f32 %v727, %v733
    %v739 = vmul.f32 %v729, %v735
    %742 = vrot.lane.b32.xlu0 %v738, 32
    %v743 = vpop.permute.xlu0 %742
    %744 = vrot.lane.b32.xlu0 %v739, 32
    %v745 = vpop.permute.xlu0 %744
    %v748 = vadd.f32 %v310, %v743
    %v749 = vadd.f32 %v315, %v745
    %v750 = vtanh.pop %v748
    %v751 = vtanh.pop %v749
    %v752 = vsub.f32 1.0, %v727
    %v753 = vsub.f32 1.0, %v729
    %756 = vrot.lane.b32.xlu0 %v750, 64
    %v757 = vpop.permute.xlu0 %756
    %758 = vrot.lane.b32.xlu0 %v751, 64
    %v759 = vpop.permute.xlu0 %758
    %v762 = vmul.f32 %v752, %v757
    %v763 = vmul.f32 %v753, %v759
    %v764 = vmul.f32 %v727, %v633
    %v765 = vmul.f32 %v729, %v634
    %v766 = vadd.f32 %v762, %v764
    %v767 = vadd.f32 %v763, %v765
    %v769 = vsel %vm174, %v766, 0
    %v772 = vsel %vm174, %v767, 0
    %774 = vmatprep.subr.mxu0 0.0
    %775 = vmatpush1.msra.mxu0 0.0
    %776 = vmatprep.subr.mxu0 0.0
    %777 = vmatpush1.msra.mxu0 0.0
    %778 = vmatprep.subr.mxu0 0.0
    %779 = vmatpush1.msra.mxu0 0.0
    %780 = vmatprep.subr.mxu0 0.0
    %781 = vmatpush1.msra.mxu0 0.0
    %782 = vmatprep.subr.mxu0 0.0
    %783 = vmatpush1.msra.mxu0 0.0
    %784 = vmatprep.subr.mxu0 0.0
    %785 = vmatpush1.msra.mxu0 0.0
    %786 = vmatprep.subr.mxu0 0.0
    %787 = vmatpush1.msra.mxu0 0.0
    %788 = vmatprep.subr.mxu0 0.0
    %789 = vmatpush1.msra.mxu0 0.0
    %790 = vmatprep.subr.mxu0 0.0
    %791 = vmatpush1.msra.mxu0 0.0
    %792 = vmatprep.subr.mxu0 0.0
    %793 = vmatpush1.msra.mxu0 0.0
    %794 = vmatprep.subr.mxu0 0.0
    %795 = vmatpush1.msra.mxu0 0.0
    %796 = vmatprep.subr.mxu0 0.0
    %797 = vmatpush1.msra.mxu0 0.0
    %798 = vmatprep.subr.mxu0 0.0
    %799 = vmatpush1.msra.mxu0 %v371
    %800 = vmatprep.subr.mxu0 0.0
    %801 = vmatpush1.msra.mxu0 %v370
    %802 = vmatprep.subr.mxu0 0.0
    %803 = vmatpush1.msra.mxu0 %v369
    %804 = vmatprep.subr.mxu0 0.0
    %805 = vmatpush1.msra.mxu0 %v368
    %806 = vmatprep.subr.mxu0 0.0
    %807 = vmatpush2.msra.mxu0 0.0
    %808 = vmatprep.subr.mxu0 0.0
    %809 = vmatpush2.msra.mxu0 0.0
    %810 = vmatprep.subr.mxu0 0.0
    %811 = vmatpush2.msra.mxu0 0.0
    %812 = vmatprep.subr.mxu0 0.0
    %813 = vmatpush2.msra.mxu0 0.0
    %814 = vmatprep.subr.mxu0 0.0
    %815 = vmatpush2.msra.mxu0 0.0
    %816 = vmatprep.subr.mxu0 0.0
    %817 = vmatpush2.msra.mxu0 0.0
    %818 = vmatprep.subr.mxu0 0.0
    %819 = vmatpush2.msra.mxu0 0.0
    %820 = vmatprep.subr.mxu0 0.0
    %821 = vmatpush2.msra.mxu0 0.0
    %822 = vmatprep.subr.mxu0 0.0
    %823 = vmatpush2.msra.mxu0 0.0
    %824 = vmatprep.subr.mxu0 0.0
    %825 = vmatpush2.msra.mxu0 0.0
    %826 = vmatprep.subr.mxu0 0.0
    %827 = vmatpush2.msra.mxu0 0.0
    %828 = vmatprep.subr.mxu0 0.0
    %829 = vmatpush2.msra.mxu0 0.0
    %830 = vmatprep.subr.mxu0 0.0
    %831 = vmatpush2.msra.mxu0 0.0
    %832 = vmatprep.subr.mxu0 0.0
    %833 = vmatpush2.msra.mxu0 0.0
    %834 = vmatprep.subr.mxu0 0.0
    %835 = vmatpush2.msra.mxu0 0.0
    %836 = vmatprep.subr.mxu0 0.0
    %837 = vmatpush2.msra.mxu0 0.0
    %838 = vmatprep.mubr.f32.mxu0 0.0
    %839 = vmatmul.mubr.f32.gmra.mxu0 %v769
    %v840 = vpop.f32.mrf.mxu0
    %v841 = vadd.f32 0.0, %v840
    %v842 = vpop.f32.mrf.mxu0
    %843 = vmatprep.mubr.f32.mxu0 0.0
    %844 = vmatmul.mubr.f32.gmra.mxu0 %v772
    %v845 = vpop.f32.mrf.mxu0
    %v846 = vadd.f32 0.0, %v845
    %v847 = vpop.f32.mrf.mxu0
    %848 = vdwg.mxu0
    %v849 = vadd.f32 %v320, %v841
    %v850 = vadd.f32 %v325, %v846
    %v851 = vxor.u32 %v849, 2147483648
    %v852 = vxor.u32 %v850, 2147483648
    %v853 = vmul.f32 %v851, 1.442695
    %v854 = vpow.pop %v853
    %v855 = vmul.f32 %v852, 1.442695
    %v856 = vpow.pop %v855
    %v857 = vadd.f32 %v854, 1.0
    %v858 = vadd.f32 %v856, 1.0
    %v859 = vrcp.pop %v857
    %v860 = vmul.f32 1.0, %v859
    %v861 = vrcp.pop %v858
    %v862 = vmul.f32 1.0, %v861
    %865 = vrot.lane.b32.xlu0 %v841, 96
    %v866 = vpop.permute.xlu0 %865
    %867 = vrot.lane.b32.xlu0 %v846, 96
    %v868 = vpop.permute.xlu0 %867
    %v871 = vmul.f32 %v860, %v866
    %v872 = vmul.f32 %v862, %v868
    %875 = vrot.lane.b32.xlu0 %v871, 32
    %v876 = vpop.permute.xlu0 %875
    %877 = vrot.lane.b32.xlu0 %v872, 32
    %v878 = vpop.permute.xlu0 %877
    %v881 = vadd.f32 %v320, %v876
    %v882 = vadd.f32 %v325, %v878
    %v883 = vtanh.pop %v881
    %v884 = vtanh.pop %v882
    %v885 = vsub.f32 1.0, %v860
    %v886 = vsub.f32 1.0, %v862
    %889 = vrot.lane.b32.xlu0 %v883, 64
    %v890 = vpop.permute.xlu0 %889
    %891 = vrot.lane.b32.xlu0 %v884, 64
    %v892 = vpop.permute.xlu0 %891
    %v895 = vmul.f32 %v885, %v890
    %v896 = vmul.f32 %v886, %v892
    %v897 = vmul.f32 %v860, %v766
    %v898 = vmul.f32 %v862, %v767
    %v899 = vadd.f32 %v895, %v897
    %v900 = vadd.f32 %v896, %v898
    %v902 = vsel %vm174, %v899, 0
    %v905 = vsel %vm174, %v900, 0
    %907 = vmatprep.subr.mxu0 0.0
    %908 = vmatpush1.msra.mxu0 0.0
    %909 = vmatprep.subr.mxu0 0.0
    %910 = vmatpush1.msra.mxu0 0.0
    %911 = vmatprep.subr.mxu0 0.0
    %912 = vmatpush1.msra.mxu0 0.0
    %913 = vmatprep.subr.mxu0 0.0
    %914 = vmatpush1.msra.mxu0 0.0
    %915 = vmatprep.subr.mxu0 0.0
    %916 = vmatpush1.msra.mxu0 0.0
    %917 = vmatprep.subr.mxu0 0.0
    %918 = vmatpush1.msra.mxu0 0.0
    %919 = vmatprep.subr.mxu0 0.0
    %920 = vmatpush1.msra.mxu0 0.0
    %921 = vmatprep.subr.mxu0 0.0
    %922 = vmatpush1.msra.mxu0 0.0
    %923 = vmatprep.subr.mxu0 0.0
    %924 = vmatpush1.msra.mxu0 0.0
    %925 = vmatprep.subr.mxu0 0.0
    %926 = vmatpush1.msra.mxu0 0.0
    %927 = vmatprep.subr.mxu0 0.0
    %928 = vmatpush1.msra.mxu0 0.0
    %929 = vmatprep.subr.mxu0 0.0
    %930 = vmatpush1.msra.mxu0 0.0
    %931 = vmatprep.subr.mxu0 0.0
    %932 = vmatpush1.msra.mxu0 %v371
    %933 = vmatprep.subr.mxu0 0.0
    %934 = vmatpush1.msra.mxu0 %v370
    %935 = vmatprep.subr.mxu0 0.0
    %936 = vmatpush1.msra.mxu0 %v369
    %937 = vmatprep.subr.mxu0 0.0
    %938 = vmatpush1.msra.mxu0 %v368
    %939 = vmatprep.subr.mxu0 0.0
    %940 = vmatpush2.msra.mxu0 0.0
    %941 = vmatprep.subr.mxu0 0.0
    %942 = vmatpush2.msra.mxu0 0.0
    %943 = vmatprep.subr.mxu0 0.0
    %944 = vmatpush2.msra.mxu0 0.0
    %945 = vmatprep.subr.mxu0 0.0
    %946 = vmatpush2.msra.mxu0 0.0
    %947 = vmatprep.subr.mxu0 0.0
    %948 = vmatpush2.msra.mxu0 0.0
    %949 = vmatprep.subr.mxu0 0.0
    %950 = vmatpush2.msra.mxu0 0.0
    %951 = vmatprep.subr.mxu0 0.0
    %952 = vmatpush2.msra.mxu0 0.0
    %953 = vmatprep.subr.mxu0 0.0
    %954 = vmatpush2.msra.mxu0 0.0
    %955 = vmatprep.subr.mxu0 0.0
    %956 = vmatpush2.msra.mxu0 0.0
    %957 = vmatprep.subr.mxu0 0.0
    %958 = vmatpush2.msra.mxu0 0.0
    %959 = vmatprep.subr.mxu0 0.0
    %960 = vmatpush2.msra.mxu0 0.0
    %961 = vmatprep.subr.mxu0 0.0
    %962 = vmatpush2.msra.mxu0 0.0
    %963 = vmatprep.subr.mxu0 0.0
    %964 = vmatpush2.msra.mxu0 0.0
    %965 = vmatprep.subr.mxu0 0.0
    %966 = vmatpush2.msra.mxu0 0.0
    %967 = vmatprep.subr.mxu0 0.0
    %968 = vmatpush2.msra.mxu0 0.0
    %969 = vmatprep.subr.mxu0 0.0
    %970 = vmatpush2.msra.mxu0 0.0
    %971 = vmatprep.mubr.f32.mxu0 0.0
    %972 = vmatmul.mubr.f32.gmra.mxu0 %v902
    %v973 = vpop.f32.mrf.mxu0
    %v974 = vadd.f32 0.0, %v973
    %v975 = vpop.f32.mrf.mxu0
    %976 = vmatprep.mubr.f32.mxu0 0.0
    %977 = vmatmul.mubr.f32.gmra.mxu0 %v905
    %v978 = vpop.f32.mrf.mxu0
    %v979 = vadd.f32 0.0, %v978
    %v980 = vpop.f32.mrf.mxu0
    %981 = vdwg.mxu0
    %v982 = vadd.f32 %v330, %v974
    %v983 = vadd.f32 %v335, %v979
    %v984 = vxor.u32 %v982, 2147483648
    %v985 = vxor.u32 %v983, 2147483648
    %v986 = vmul.f32 %v984, 1.442695
    %v987 = vpow.pop %v986
    %v988 = vmul.f32 %v985, 1.442695
    %v989 = vpow.pop %v988
    %v990 = vadd.f32 %v987, 1.0
    %v991 = vadd.f32 %v989, 1.0
    %v992 = vrcp.pop %v990
    %v993 = vmul.f32 1.0, %v992
    %v994 = vrcp.pop %v991
    %v995 = vmul.f32 1.0, %v994
    %998 = vrot.lane.b32.xlu0 %v974, 96
    %v999 = vpop.permute.xlu0 %998
    %1000 = vrot.lane.b32.xlu0 %v979, 96
    %v1001 = vpop.permute.xlu0 %1000
    %v1004 = vmul.f32 %v993, %v999
    %v1005 = vmul.f32 %v995, %v1001
    %1008 = vrot.lane.b32.xlu0 %v1004, 32
    %v1009 = vpop.permute.xlu0 %1008
    %1010 = vrot.lane.b32.xlu0 %v1005, 32
    %v1011 = vpop.permute.xlu0 %1010
    %v1014 = vadd.f32 %v330, %v1009
    %v1015 = vadd.f32 %v335, %v1011
    %v1016 = vtanh.pop %v1014
    %v1017 = vtanh.pop %v1015
    %v1018 = vsub.f32 1.0, %v993
    %v1019 = vsub.f32 1.0, %v995
    %1022 = vrot.lane.b32.xlu0 %v1016, 64
    %v1023 = vpop.permute.xlu0 %1022
    %1024 = vrot.lane.b32.xlu0 %v1017, 64
    %v1025 = vpop.permute.xlu0 %1024
    %v1028 = vmul.f32 %v1018, %v1023
    %v1029 = vmul.f32 %v1019, %v1025
    %v1030 = vmul.f32 %v993, %v899
    %v1031 = vmul.f32 %v995, %v900
    %v1032 = vadd.f32 %v1028, %v1030
    %v1033 = vadd.f32 %v1029, %v1031
    %v1035 = vsel %vm174, %v1032, 0
    %v1038 = vsel %vm174, %v1033, 0
    %1040 = vmatprep.subr.mxu0 0.0
    %1041 = vmatpush1.msra.mxu0 0.0
    %1042 = vmatprep.subr.mxu0 0.0
    %1043 = vmatpush1.msra.mxu0 0.0
    %1044 = vmatprep.subr.mxu0 0.0
    %1045 = vmatpush1.msra.mxu0 0.0
    %1046 = vmatprep.subr.mxu0 0.0
    %1047 = vmatpush1.msra.mxu0 0.0
    %1048 = vmatprep.subr.mxu0 0.0
    %1049 = vmatpush1.msra.mxu0 0.0
    %1050 = vmatprep.subr.mxu0 0.0
    %1051 = vmatpush1.msra.mxu0 0.0
    %1052 = vmatprep.subr.mxu0 0.0
    %1053 = vmatpush1.msra.mxu0 0.0
    %1054 = vmatprep.subr.mxu0 0.0
    %1055 = vmatpush1.msra.mxu0 0.0
    %1056 = vmatprep.subr.mxu0 0.0
    %1057 = vmatpush1.msra.mxu0 0.0
    %1058 = vmatprep.subr.mxu0 0.0
    %1059 = vmatpush1.msra.mxu0 0.0
    %1060 = vmatprep.subr.mxu0 0.0
    %1061 = vmatpush1.msra.mxu0 0.0
    %1062 = vmatprep.subr.mxu0 0.0
    %1063 = vmatpush1.msra.mxu0 0.0
    %1064 = vmatprep.subr.mxu0 0.0
    %1065 = vmatpush1.msra.mxu0 %v371
    %1066 = vmatprep.subr.mxu0 0.0
    %1067 = vmatpush1.msra.mxu0 %v370
    %1068 = vmatprep.subr.mxu0 0.0
    %1069 = vmatpush1.msra.mxu0 %v369
    %1070 = vmatprep.subr.mxu0 0.0
    %1071 = vmatpush1.msra.mxu0 %v368
    %1072 = vmatprep.subr.mxu0 0.0
    %1073 = vmatpush2.msra.mxu0 0.0
    %1074 = vmatprep.subr.mxu0 0.0
    %1075 = vmatpush2.msra.mxu0 0.0
    %1076 = vmatprep.subr.mxu0 0.0
    %1077 = vmatpush2.msra.mxu0 0.0
    %1078 = vmatprep.subr.mxu0 0.0
    %1079 = vmatpush2.msra.mxu0 0.0
    %1080 = vmatprep.subr.mxu0 0.0
    %1081 = vmatpush2.msra.mxu0 0.0
    %1082 = vmatprep.subr.mxu0 0.0
    %1083 = vmatpush2.msra.mxu0 0.0
    %1084 = vmatprep.subr.mxu0 0.0
    %1085 = vmatpush2.msra.mxu0 0.0
    %1086 = vmatprep.subr.mxu0 0.0
    %1087 = vmatpush2.msra.mxu0 0.0
    %1088 = vmatprep.subr.mxu0 0.0
    %1089 = vmatpush2.msra.mxu0 0.0
    %1090 = vmatprep.subr.mxu0 0.0
    %1091 = vmatpush2.msra.mxu0 0.0
    %1092 = vmatprep.subr.mxu0 0.0
    %1093 = vmatpush2.msra.mxu0 0.0
    %1094 = vmatprep.subr.mxu0 0.0
    %1095 = vmatpush2.msra.mxu0 0.0
    %1096 = vmatprep.subr.mxu0 0.0
    %1097 = vmatpush2.msra.mxu0 0.0
    %1098 = vmatprep.subr.mxu0 0.0
    %1099 = vmatpush2.msra.mxu0 0.0
    %1100 = vmatprep.subr.mxu0 0.0
    %1101 = vmatpush2.msra.mxu0 0.0
    %1102 = vmatprep.subr.mxu0 0.0
    %1103 = vmatpush2.msra.mxu0 0.0
    %1104 = vmatprep.mubr.f32.mxu0 0.0
    %1105 = vmatmul.mubr.f32.gmra.mxu0 %v1035
    %v1106 = vpop.f32.mrf.mxu0
    %v1107 = vadd.f32 0.0, %v1106
    %v1108 = vpop.f32.mrf.mxu0
    %1109 = vmatprep.mubr.f32.mxu0 0.0
    %1110 = vmatmul.mubr.f32.gmra.mxu0 %v1038
    %v1111 = vpop.f32.mrf.mxu0
    %v1112 = vadd.f32 0.0, %v1111
    %v1113 = vpop.f32.mrf.mxu0
    %1114 = vdwg.mxu0
    %v1115 = vadd.f32 %v340, %v1107
    %v1116 = vadd.f32 %v345, %v1112
    %v1117 = vxor.u32 %v1115, 2147483648
    %v1118 = vxor.u32 %v1116, 2147483648
    %v1119 = vmul.f32 %v1117, 1.442695
    %v1120 = vpow.pop %v1119
    %v1121 = vmul.f32 %v1118, 1.442695
    %v1122 = vpow.pop %v1121
    %v1123 = vadd.f32 %v1120, 1.0
    %v1124 = vadd.f32 %v1122, 1.0
    %v1125 = vrcp.pop %v1123
    %v1126 = vmul.f32 1.0, %v1125
    %v1127 = vrcp.pop %v1124
    %v1128 = vmul.f32 1.0, %v1127
    %1131 = vrot.lane.b32.xlu0 %v1107, 96
    %v1132 = vpop.permute.xlu0 %1131
    %1133 = vrot.lane.b32.xlu0 %v1112, 96
    %v1134 = vpop.permute.xlu0 %1133
    %v1137 = vmul.f32 %v1126, %v1132
    %v1138 = vmul.f32 %v1128, %v1134
    %1141 = vrot.lane.b32.xlu0 %v1137, 32
    %v1142 = vpop.permute.xlu0 %1141
    %1143 = vrot.lane.b32.xlu0 %v1138, 32
    %v1144 = vpop.permute.xlu0 %1143
    %v1147 = vadd.f32 %v340, %v1142
    %v1148 = vadd.f32 %v345, %v1144
    %v1149 = vtanh.pop %v1147
    %v1150 = vtanh.pop %v1148
    %v1151 = vsub.f32 1.0, %v1126
    %v1152 = vsub.f32 1.0, %v1128
    %1155 = vrot.lane.b32.xlu0 %v1149, 64
    %v1156 = vpop.permute.xlu0 %1155
    %1157 = vrot.lane.b32.xlu0 %v1150, 64
    %v1158 = vpop.permute.xlu0 %1157
    %v1161 = vmul.f32 %v1151, %v1156
    %v1162 = vmul.f32 %v1152, %v1158
    %v1163 = vmul.f32 %v1126, %v1032
    %v1164 = vmul.f32 %v1128, %v1033
    %v1165 = vadd.f32 %v1161, %v1163
    %v1166 = vadd.f32 %v1162, %v1164
    %v1168 = vsel %vm174, %v1165, 0
    %v1171 = vsel %vm174, %v1166, 0
    %1173 = vmatprep.subr.mxu0 0.0
    %1174 = vmatpush1.msra.mxu0 0.0
    %1175 = vmatprep.subr.mxu0 0.0
    %1176 = vmatpush1.msra.mxu0 0.0
    %1177 = vmatprep.subr.mxu0 0.0
    %1178 = vmatpush1.msra.mxu0 0.0
    %1179 = vmatprep.subr.mxu0 0.0
    %1180 = vmatpush1.msra.mxu0 0.0
    %1181 = vmatprep.subr.mxu0 0.0
    %1182 = vmatpush1.msra.mxu0 0.0
    %1183 = vmatprep.subr.mxu0 0.0
    %1184 = vmatpush1.msra.mxu0 0.0
    %1185 = vmatprep.subr.mxu0 0.0
    %1186 = vmatpush1.msra.mxu0 0.0
    %1187 = vmatprep.subr.mxu0 0.0
    %1188 = vmatpush1.msra.mxu0 0.0
    %1189 = vmatprep.subr.mxu0 0.0
    %1190 = vmatpush1.msra.mxu0 0.0
    %1191 = vmatprep.subr.mxu0 0.0
    %1192 = vmatpush1.msra.mxu0 0.0
    %1193 = vmatprep.subr.mxu0 0.0
    %1194 = vmatpush1.msra.mxu0 0.0
    %1195 = vmatprep.subr.mxu0 0.0
    %1196 = vmatpush1.msra.mxu0 0.0
    %1197 = vmatprep.subr.mxu0 0.0
    %1198 = vmatpush1.msra.mxu0 %v371
    %1199 = vmatprep.subr.mxu0 0.0
    %1200 = vmatpush1.msra.mxu0 %v370
    %1201 = vmatprep.subr.mxu0 0.0
    %1202 = vmatpush1.msra.mxu0 %v369
    %1203 = vmatprep.subr.mxu0 0.0
    %1204 = vmatpush1.msra.mxu0 %v368
    %1205 = vmatprep.subr.mxu0 0.0
    %1206 = vmatpush2.msra.mxu0 0.0
    %1207 = vmatprep.subr.mxu0 0.0
    %1208 = vmatpush2.msra.mxu0 0.0
    %1209 = vmatprep.subr.mxu0 0.0
    %1210 = vmatpush2.msra.mxu0 0.0
    %1211 = vmatprep.subr.mxu0 0.0
    %1212 = vmatpush2.msra.mxu0 0.0
    %1213 = vmatprep.subr.mxu0 0.0
    %1214 = vmatpush2.msra.mxu0 0.0
    %1215 = vmatprep.subr.mxu0 0.0
    %1216 = vmatpush2.msra.mxu0 0.0
    %1217 = vmatprep.subr.mxu0 0.0
    %1218 = vmatpush2.msra.mxu0 0.0
    %1219 = vmatprep.subr.mxu0 0.0
    %1220 = vmatpush2.msra.mxu0 0.0
    %1221 = vmatprep.subr.mxu0 0.0
    %1222 = vmatpush2.msra.mxu0 0.0
    %1223 = vmatprep.subr.mxu0 0.0
    %1224 = vmatpush2.msra.mxu0 0.0
    %1225 = vmatprep.subr.mxu0 0.0
    %1226 = vmatpush2.msra.mxu0 0.0
    %1227 = vmatprep.subr.mxu0 0.0
    %1228 = vmatpush2.msra.mxu0 0.0
    %1229 = vmatprep.subr.mxu0 0.0
    %1230 = vmatpush2.msra.mxu0 0.0
    %1231 = vmatprep.subr.mxu0 0.0
    %1232 = vmatpush2.msra.mxu0 0.0
    %1233 = vmatprep.subr.mxu0 0.0
    %1234 = vmatpush2.msra.mxu0 0.0
    %1235 = vmatprep.subr.mxu0 0.0
    %1236 = vmatpush2.msra.mxu0 0.0
    %1237 = vmatprep.mubr.f32.mxu0 0.0
    %1238 = vmatmul.mubr.f32.gmra.mxu0 %v1168
    %v1239 = vpop.f32.mrf.mxu0
    %v1240 = vadd.f32 0.0, %v1239
    %v1241 = vpop.f32.mrf.mxu0
    %1242 = vmatprep.mubr.f32.mxu0 0.0
    %1243 = vmatmul.mubr.f32.gmra.mxu0 %v1171
    %v1244 = vpop.f32.mrf.mxu0
    %v1245 = vadd.f32 0.0, %v1244
    %v1246 = vpop.f32.mrf.mxu0
    %1247 = vdwg.mxu0
    %v1248 = vadd.f32 %v350, %v1240
    %v1249 = vadd.f32 %v355, %v1245
    %v1250 = vxor.u32 %v1248, 2147483648
    %v1251 = vxor.u32 %v1249, 2147483648
    %v1252 = vmul.f32 %v1250, 1.442695
    %v1253 = vpow.pop %v1252
    %v1254 = vmul.f32 %v1251, 1.442695
    %v1255 = vpow.pop %v1254
    %v1256 = vadd.f32 %v1253, 1.0
    %v1257 = vadd.f32 %v1255, 1.0
    %v1258 = vrcp.pop %v1256
    %v1259 = vmul.f32 1.0, %v1258
    %v1260 = vrcp.pop %v1257
    %v1261 = vmul.f32 1.0, %v1260
    %1264 = vrot.lane.b32.xlu0 %v1240, 96
    %v1265 = vpop.permute.xlu0 %1264
    %1266 = vrot.lane.b32.xlu0 %v1245, 96
    %v1267 = vpop.permute.xlu0 %1266
    %v1270 = vmul.f32 %v1259, %v1265
    %v1271 = vmul.f32 %v1261, %v1267
    %1274 = vrot.lane.b32.xlu0 %v1270, 32
    %v1275 = vpop.permute.xlu0 %1274
    %1276 = vrot.lane.b32.xlu0 %v1271, 32
    %v1277 = vpop.permute.xlu0 %1276
    %v1280 = vadd.f32 %v350, %v1275
    %v1281 = vadd.f32 %v355, %v1277
    %v1282 = vtanh.pop %v1280
    %v1283 = vtanh.pop %v1281
    %v1284 = vsub.f32 1.0, %v1259
    %v1285 = vsub.f32 1.0, %v1261
    %1288 = vrot.lane.b32.xlu0 %v1282, 64
    %v1289 = vpop.permute.xlu0 %1288
    %1290 = vrot.lane.b32.xlu0 %v1283, 64
    %v1291 = vpop.permute.xlu0 %1290
    %v1294 = vmul.f32 %v1284, %v1289
    %v1295 = vmul.f32 %v1285, %v1291
    %v1296 = vmul.f32 %v1259, %v1165
    %v1297 = vmul.f32 %v1261, %v1166
    %v1298 = vadd.f32 %v1294, %v1296
    %v1299 = vadd.f32 %v1295, %v1297
    %v1301 = vsel %vm174, %v1298, 0
    %v1304 = vsel %vm174, %v1299, 0
    %1306 = vmatprep.subr.mxu0 0.0
    %1307 = vmatpush1.msra.mxu0 0.0
    %1308 = vmatprep.subr.mxu0 0.0
    %1309 = vmatpush1.msra.mxu0 0.0
    %1310 = vmatprep.subr.mxu0 0.0
    %1311 = vmatpush1.msra.mxu0 0.0
    %1312 = vmatprep.subr.mxu0 0.0
    %1313 = vmatpush1.msra.mxu0 0.0
    %1314 = vmatprep.subr.mxu0 0.0
    %1315 = vmatpush1.msra.mxu0 0.0
    %1316 = vmatprep.subr.mxu0 0.0
    %1317 = vmatpush1.msra.mxu0 0.0
    %1318 = vmatprep.subr.mxu0 0.0
    %1319 = vmatpush1.msra.mxu0 0.0
    %1320 = vmatprep.subr.mxu0 0.0
    %1321 = vmatpush1.msra.mxu0 0.0
    %1322 = vmatprep.subr.mxu0 0.0
    %1323 = vmatpush1.msra.mxu0 0.0
    %1324 = vmatprep.subr.mxu0 0.0
    %1325 = vmatpush1.msra.mxu0 0.0
    %1326 = vmatprep.subr.mxu0 0.0
    %1327 = vmatpush1.msra.mxu0 0.0
    %1328 = vmatprep.subr.mxu0 0.0
    %1329 = vmatpush1.msra.mxu0 0.0
    %1330 = vmatprep.subr.mxu0 0.0
    %1331 = vmatpush1.msra.mxu0 %v371
    %1332 = vmatprep.subr.mxu0 0.0
    %1333 = vmatpush1.msra.mxu0 %v370
    %1334 = vmatprep.subr.mxu0 0.0
    %1335 = vmatpush1.msra.mxu0 %v369
    %1336 = vmatprep.subr.mxu0 0.0
    %1337 = vmatpush1.msra.mxu0 %v368
    %1338 = vmatprep.subr.mxu0 0.0
    %1339 = vmatpush2.msra.mxu0 0.0
    %1340 = vmatprep.subr.mxu0 0.0
    %1341 = vmatpush2.msra.mxu0 0.0
    %1342 = vmatprep.subr.mxu0 0.0
    %1343 = vmatpush2.msra.mxu0 0.0
    %1344 = vmatprep.subr.mxu0 0.0
    %1345 = vmatpush2.msra.mxu0 0.0
    %1346 = vmatprep.subr.mxu0 0.0
    %1347 = vmatpush2.msra.mxu0 0.0
    %1348 = vmatprep.subr.mxu0 0.0
    %1349 = vmatpush2.msra.mxu0 0.0
    %1350 = vmatprep.subr.mxu0 0.0
    %1351 = vmatpush2.msra.mxu0 0.0
    %1352 = vmatprep.subr.mxu0 0.0
    %1353 = vmatpush2.msra.mxu0 0.0
    %1354 = vmatprep.subr.mxu0 0.0
    %1355 = vmatpush2.msra.mxu0 0.0
    %1356 = vmatprep.subr.mxu0 0.0
    %1357 = vmatpush2.msra.mxu0 0.0
    %1358 = vmatprep.subr.mxu0 0.0
    %1359 = vmatpush2.msra.mxu0 0.0
    %1360 = vmatprep.subr.mxu0 0.0
    %1361 = vmatpush2.msra.mxu0 0.0
    %1362 = vmatprep.subr.mxu0 0.0
    %1363 = vmatpush2.msra.mxu0 0.0
    %1364 = vmatprep.subr.mxu0 0.0
    %1365 = vmatpush2.msra.mxu0 0.0
    %1366 = vmatprep.subr.mxu0 0.0
    %1367 = vmatpush2.msra.mxu0 0.0
    %1368 = vmatprep.subr.mxu0 0.0
    %1369 = vmatpush2.msra.mxu0 0.0
    %1370 = vmatprep.mubr.f32.mxu0 0.0
    %1371 = vmatmul.mubr.f32.gmra.mxu0 %v1301
    %v1372 = vpop.f32.mrf.mxu0
    %v1373 = vadd.f32 0.0, %v1372
    %v1374 = vpop.f32.mrf.mxu0
    %1375 = vmatprep.mubr.f32.mxu0 0.0
    %1376 = vmatmul.mubr.f32.gmra.mxu0 %v1304
    %v1377 = vpop.f32.mrf.mxu0
    %v1378 = vadd.f32 0.0, %v1377
    %v1379 = vpop.f32.mrf.mxu0
    %1380 = vdwg.mxu0
    %v1381 = vadd.f32 %v360, %v1373
    %v1382 = vadd.f32 %v365, %v1378
    %v1383 = vxor.u32 %v1381, 2147483648
    %v1384 = vxor.u32 %v1382, 2147483648
    %v1385 = vmul.f32 %v1383, 1.442695
    %v1386 = vpow.pop %v1385
    %v1387 = vmul.f32 %v1384, 1.442695
    %v1388 = vpow.pop %v1387
    %v1389 = vadd.f32 %v1386, 1.0
    %v1390 = vadd.f32 %v1388, 1.0
    %v1391 = vrcp.pop %v1389
    %v1392 = vmul.f32 1.0, %v1391
    %v1393 = vrcp.pop %v1390
    %v1394 = vmul.f32 1.0, %v1393
    %1397 = vrot.lane.b32.xlu0 %v1373, 96
    %v1398 = vpop.permute.xlu0 %1397
    %1399 = vrot.lane.b32.xlu0 %v1378, 96
    %v1400 = vpop.permute.xlu0 %1399
    %v1403 = vmul.f32 %v1392, %v1398
    %v1404 = vmul.f32 %v1394, %v1400
    %1407 = vrot.lane.b32.xlu0 %v1403, 32
    %v1408 = vpop.permute.xlu0 %1407
    %1409 = vrot.lane.b32.xlu0 %v1404, 32
    %v1410 = vpop.permute.xlu0 %1409
    %v1413 = vadd.f32 %v360, %v1408
    %v1414 = vadd.f32 %v365, %v1410
    %v1415 = vtanh.pop %v1413
    %v1416 = vtanh.pop %v1414
    %v1417 = vsub.f32 1.0, %v1392
    %v1418 = vsub.f32 1.0, %v1394
    %1421 = vrot.lane.b32.xlu0 %v1415, 64
    %v1422 = vpop.permute.xlu0 %1421
    %1423 = vrot.lane.b32.xlu0 %v1416, 64
    %v1424 = vpop.permute.xlu0 %1423
    %v1427 = vmul.f32 %v1417, %v1422
    %v1428 = vmul.f32 %v1418, %v1424
    %v1429 = vmul.f32 %v1392, %v1298
    %v1430 = vmul.f32 %v1394, %v1299
    %v1431 = vadd.f32 %v1427, %v1429
    %v1432 = vadd.f32 %v1428, %v1430
    %v1433 = vld [vmem:[#allocation2] sm:$0xff]
    %v1434 = vld [vmem:[#allocation2 + $0x8] sm:$0xff]
    %v1435 = vld [vmem:[#allocation2 + $0x10] sm:$0xff]
    %v1436 = vld [vmem:[#allocation2 + $0x18] sm:$0xff]
    %v1437 = vld [vmem:[#allocation2 + $0x20] sm:$0xff]
    %v1438 = vld [vmem:[#allocation2 + $0x28] sm:$0xff]
    %v1439 = vld [vmem:[#allocation2 + $0x30] sm:$0xff]
    %v1440 = vld [vmem:[#allocation2 + $0x38] sm:$0xff]
    %v1441 = vld [vmem:[#allocation2 + $0x40] sm:$0xff]
    %v1442 = vld [vmem:[#allocation2 + $0x48] sm:$0xff]
    %v1443 = vld [vmem:[#allocation2 + $0x50] sm:$0xff]
    %v1444 = vld [vmem:[#allocation2 + $0x58] sm:$0xff]
    %v1445 = vld [vmem:[#allocation2 + $0x60] sm:$0xff]
    %v1446 = vld [vmem:[#allocation2 + $0x68] sm:$0xff]
    %v1447 = vld [vmem:[#allocation2 + $0x70] sm:$0xff]
    %v1448 = vld [vmem:[#allocation2 + $0x78] sm:$0xff]
    %v1449 = vld [vmem:[#allocation2 + $0x80] sm:$0xff]
    %v1450 = vld [vmem:[#allocation2 + $0x88] sm:$0xff]
    %v1451 = vld [vmem:[#allocation2 + $0x90] sm:$0xff]
    %v1452 = vld [vmem:[#allocation2 + $0x98] sm:$0xff]
    %v1453 = vld [vmem:[#allocation2 + $0xa0] sm:$0xff]
    %v1454 = vld [vmem:[#allocation2 + $0xa8] sm:$0xff]
    %v1455 = vld [vmem:[#allocation2 + $0xb0] sm:$0xff]
    %v1456 = vld [vmem:[#allocation2 + $0xb8] sm:$0xff]
    %v1457 = vld [vmem:[#allocation2 + $0xc0] sm:$0xff]
    %v1458 = vld [vmem:[#allocation2 + $0xc8] sm:$0xff]
    %v1459 = vld [vmem:[#allocation2 + $0xd0] sm:$0xff]
    %v1460 = vld [vmem:[#allocation2 + $0xd8] sm:$0xff]
    %v1461 = vld [vmem:[#allocation2 + $0xe0] sm:$0xff]
    %v1462 = vld [vmem:[#allocation2 + $0xe8] sm:$0xff]
    %v1463 = vld [vmem:[#allocation2 + $0xf0] sm:$0xff]
    %v1464 = vld [vmem:[#allocation2 + $0xf8] sm:$0xff]
    %v1465 = vld [vmem:[#allocation5 + $0x40] sm:$0xff]
    %v1466 = vld [vmem:[#allocation5 + $0x48] sm:$0xff]
    %v1467 = vld [vmem:[#allocation5 + $0x50] sm:$0xff]
    %v1468 = vld [vmem:[#allocation5 + $0x58] sm:$0xff]
    %v1469 = vld [vmem:[%s4 + $0x2] sm:$0x1]
    %v1470 = vlaneseq
    %v1471 = vshrl.u32 %v1470, 7
    %v1472 = vsub.s32 0, %v1471
    %v1473 = vrot.slane %v1469, %v1472
    %v1475 = vsel %vm174, %v1433, 0
    %v1478 = vsel %vm174, %v1434, 0
    %v1481 = vsel %vm174, %v1435, 0
    %v1484 = vsel %vm174, %v1436, 0
    %v1487 = vsel %vm174, %v1437, 0
    %v1490 = vsel %vm174, %v1438, 0
    %v1493 = vsel %vm174, %v1439, 0
    %v1496 = vsel %vm174, %v1440, 0
    %v1499 = vsel %vm174, %v1441, 0
    %v1502 = vsel %vm174, %v1442, 0
    %v1505 = vsel %vm174, %v1443, 0
    %v1508 = vsel %vm174, %v1444, 0
    %v1511 = vsel %vm174, %v1445, 0
    %v1514 = vsel %vm174, %v1446, 0
    %v1517 = vsel %vm174, %v1447, 0
    %v1520 = vsel %vm174, %v1448, 0
    %v1523 = vsel %vm174, %v1449, 0
    %v1526 = vsel %vm174, %v1450, 0
    %v1529 = vsel %vm174, %v1451, 0
    %v1532 = vsel %vm174, %v1452, 0
    %v1535 = vsel %vm174, %v1453, 0
    %v1538 = vsel %vm174, %v1454, 0
    %v1541 = vsel %vm174, %v1455, 0
    %v1544 = vsel %vm174, %v1456, 0
    %v1547 = vsel %vm174, %v1457, 0
    %v1550 = vsel %vm174, %v1458, 0
    %v1553 = vsel %vm174, %v1459, 0
    %v1556 = vsel %vm174, %v1460, 0
    %v1559 = vsel %vm174, %v1461, 0
    %v1562 = vsel %vm174, %v1462, 0
    %v1565 = vsel %vm174, %v1463, 0
    %v1568 = vsel %vm174, %v1464, 0
    %1570 = vmatprep.subr.mxu0 0.0
    %1571 = vmatpush1.msra.mxu0 0.0
    %1572 = vmatprep.subr.mxu0 0.0
    %1573 = vmatpush1.msra.mxu0 0.0
    %1574 = vmatprep.subr.mxu0 0.0
    %1575 = vmatpush1.msra.mxu0 0.0
    %1576 = vmatprep.subr.mxu0 0.0
    %1577 = vmatpush1.msra.mxu0 0.0
    %1578 = vmatprep.subr.mxu0 0.0
    %1579 = vmatpush1.msra.mxu0 0.0
    %1580 = vmatprep.subr.mxu0 0.0
    %1581 = vmatpush1.msra.mxu0 0.0
    %1582 = vmatprep.subr.mxu0 0.0
    %1583 = vmatpush1.msra.mxu0 0.0
    %1584 = vmatprep.subr.mxu0 0.0
    %1585 = vmatpush1.msra.mxu0 0.0
    %1586 = vmatprep.subr.mxu0 0.0
    %1587 = vmatpush1.msra.mxu0 0.0
    %1588 = vmatprep.subr.mxu0 0.0
    %1589 = vmatpush1.msra.mxu0 0.0
    %1590 = vmatprep.subr.mxu0 0.0
    %1591 = vmatpush1.msra.mxu0 0.0
    %1592 = vmatprep.subr.mxu0 0.0
    %1593 = vmatpush1.msra.mxu0 0.0
    %1594 = vmatprep.subr.mxu0 0.0
    %1595 = vmatpush1.msra.mxu0 %v1468
    %1596 = vmatprep.subr.mxu0 0.0
    %1597 = vmatpush1.msra.mxu0 %v1467
    %1598 = vmatprep.subr.mxu0 0.0
    %1599 = vmatpush1.msra.mxu0 %v1466
    %1600 = vmatprep.subr.mxu0 0.0
    %1601 = vmatpush1.msra.mxu0 %v1465
    %1602 = vmatprep.subr.mxu0 0.0
    %1603 = vmatpush2.msra.mxu0 0.0
    %1604 = vmatprep.subr.mxu0 0.0
    %1605 = vmatpush2.msra.mxu0 0.0
    %1606 = vmatprep.subr.mxu0 0.0
    %1607 = vmatpush2.msra.mxu0 0.0
    %1608 = vmatprep.subr.mxu0 0.0
    %1609 = vmatpush2.msra.mxu0 0.0
    %1610 = vmatprep.subr.mxu0 0.0
    %1611 = vmatpush2.msra.mxu0 0.0
    %1612 = vmatprep.subr.mxu0 0.0
    %1613 = vmatpush2.msra.mxu0 0.0
    %1614 = vmatprep.subr.mxu0 0.0
    %1615 = vmatpush2.msra.mxu0 0.0
    %1616 = vmatprep.subr.mxu0 0.0
    %1617 = vmatpush2.msra.mxu0 0.0
    %1618 = vmatprep.subr.mxu0 0.0
    %1619 = vmatpush2.msra.mxu0 0.0
    %1620 = vmatprep.subr.mxu0 0.0
    %1621 = vmatpush2.msra.mxu0 0.0
    %1622 = vmatprep.subr.mxu0 0.0
    %1623 = vmatpush2.msra.mxu0 0.0
    %1624 = vmatprep.subr.mxu0 0.0
    %1625 = vmatpush2.msra.mxu0 0.0
    %1626 = vmatprep.subr.mxu0 0.0
    %1627 = vmatpush2.msra.mxu0 0.0
    %1628 = vmatprep.subr.mxu0 0.0
    %1629 = vmatpush2.msra.mxu0 0.0
    %1630 = vmatprep.subr.mxu0 0.0
    %1631 = vmatpush2.msra.mxu0 0.0
    %1632 = vmatprep.subr.mxu0 0.0
    %1633 = vmatpush2.msra.mxu0 0.0
    %1634 = vmatprep.mubr.f32.mxu0 0.0
    %1635 = vmatmul.mubr.f32.gmra.mxu0 %v1475
    %v1636 = vpop.f32.mrf.mxu0
    %v1637 = vadd.f32 %v1473, %v1636
    %v1638 = vpop.f32.mrf.mxu0
    %1639 = vmatprep.mubr.f32.mxu0 0.0
    %1640 = vmatmul.mubr.f32.gmra.mxu0 %v1478
    %v1641 = vpop.f32.mrf.mxu0
    %v1642 = vadd.f32 %v1473, %v1641
    %v1643 = vpop.f32.mrf.mxu0
    %1644 = vmatprep.mubr.f32.mxu0 0.0
    %1645 = vmatmul.mubr.f32.gmra.mxu0 %v1481
    %v1646 = vpop.f32.mrf.mxu0
    %v1647 = vadd.f32 %v1473, %v1646
    %v1648 = vpop.f32.mrf.mxu0
    %1649 = vmatprep.mubr.f32.mxu0 0.0
    %1650 = vmatmul.mubr.f32.gmra.mxu0 %v1484
    %v1651 = vpop.f32.mrf.mxu0
    %v1652 = vadd.f32 %v1473, %v1651
    %v1653 = vpop.f32.mrf.mxu0
    %1654 = vmatprep.mubr.f32.mxu0 0.0
    %1655 = vmatmul.mubr.f32.gmra.mxu0 %v1487
    %v1656 = vpop.f32.mrf.mxu0
    %v1657 = vadd.f32 %v1473, %v1656
    %v1658 = vpop.f32.mrf.mxu0
    %1659 = vmatprep.mubr.f32.mxu0 0.0
    %1660 = vmatmul.mubr.f32.gmra.mxu0 %v1490
    %v1661 = vpop.f32.mrf.mxu0
    %v1662 = vadd.f32 %v1473, %v1661
    %v1663 = vpop.f32.mrf.mxu0
    %1664 = vmatprep.mubr.f32.mxu0 0.0
    %1665 = vmatmul.mubr.f32.gmra.mxu0 %v1493
    %v1666 = vpop.f32.mrf.mxu0
    %v1667 = vadd.f32 %v1473, %v1666
    %v1668 = vpop.f32.mrf.mxu0
    %1669 = vmatprep.mubr.f32.mxu0 0.0
    %1670 = vmatmul.mubr.f32.gmra.mxu0 %v1496
    %v1671 = vpop.f32.mrf.mxu0
    %v1672 = vadd.f32 %v1473, %v1671
    %v1673 = vpop.f32.mrf.mxu0
    %1674 = vmatprep.mubr.f32.mxu0 0.0
    %1675 = vmatmul.mubr.f32.gmra.mxu0 %v1499
    %v1676 = vpop.f32.mrf.mxu0
    %v1677 = vadd.f32 %v1473, %v1676
    %v1678 = vpop.f32.mrf.mxu0
    %1679 = vmatprep.mubr.f32.mxu0 0.0
    %1680 = vmatmul.mubr.f32.gmra.mxu0 %v1502
    %v1681 = vpop.f32.mrf.mxu0
    %v1682 = vadd.f32 %v1473, %v1681
    %v1683 = vpop.f32.mrf.mxu0
    %1684 = vmatprep.mubr.f32.mxu0 0.0
    %1685 = vmatmul.mubr.f32.gmra.mxu0 %v1505
    %v1686 = vpop.f32.mrf.mxu0
    %v1687 = vadd.f32 %v1473, %v1686
    %v1688 = vpop.f32.mrf.mxu0
    %1689 = vmatprep.mubr.f32.mxu0 0.0
    %1690 = vmatmul.mubr.f32.gmra.mxu0 %v1508
    %v1691 = vpop.f32.mrf.mxu0
    %v1692 = vadd.f32 %v1473, %v1691
    %v1693 = vpop.f32.mrf.mxu0
    %1694 = vmatprep.mubr.f32.mxu0 0.0
    %1695 = vmatmul.mubr.f32.gmra.mxu0 %v1511
    %v1696 = vpop.f32.mrf.mxu0
    %v1697 = vadd.f32 %v1473, %v1696
    %v1698 = vpop.f32.mrf.mxu0
    %1699 = vmatprep.mubr.f32.mxu0 0.0
    %1700 = vmatmul.mubr.f32.gmra.mxu0 %v1514
    %v1701 = vpop.f32.mrf.mxu0
    %v1702 = vadd.f32 %v1473, %v1701
    %v1703 = vpop.f32.mrf.mxu0
    %1704 = vmatprep.mubr.f32.mxu0 0.0
    %1705 = vmatmul.mubr.f32.gmra.mxu0 %v1517
    %v1706 = vpop.f32.mrf.mxu0
    %v1707 = vadd.f32 %v1473, %v1706
    %v1708 = vpop.f32.mrf.mxu0
    %1709 = vmatprep.mubr.f32.mxu0 0.0
    %1710 = vmatmul.mubr.f32.gmra.mxu0 %v1520
    %v1711 = vpop.f32.mrf.mxu0
    %v1712 = vadd.f32 %v1473, %v1711
    %v1713 = vpop.f32.mrf.mxu0
    %1714 = vmatprep.mubr.f32.mxu0 0.0
    %1715 = vmatmul.mubr.f32.gmra.mxu0 %v1523
    %v1716 = vpop.f32.mrf.mxu0
    %v1717 = vadd.f32 %v1473, %v1716
    %v1718 = vpop.f32.mrf.mxu0
    %1719 = vmatprep.mubr.f32.mxu0 0.0
    %1720 = vmatmul.mubr.f32.gmra.mxu0 %v1526
    %v1721 = vpop.f32.mrf.mxu0
    %v1722 = vadd.f32 %v1473, %v1721
    %v1723 = vpop.f32.mrf.mxu0
    %1724 = vmatprep.mubr.f32.mxu0 0.0
    %1725 = vmatmul.mubr.f32.gmra.mxu0 %v1529
    %v1726 = vpop.f32.mrf.mxu0
    %v1727 = vadd.f32 %v1473, %v1726
    %v1728 = vpop.f32.mrf.mxu0
    %1729 = vmatprep.mubr.f32.mxu0 0.0
    %1730 = vmatmul.mubr.f32.gmra.mxu0 %v1532
    %v1731 = vpop.f32.mrf.mxu0
    %v1732 = vadd.f32 %v1473, %v1731
    %v1733 = vpop.f32.mrf.mxu0
    %1734 = vmatprep.mubr.f32.mxu0 0.0
    %1735 = vmatmul.mubr.f32.gmra.mxu0 %v1535
    %v1736 = vpop.f32.mrf.mxu0
    %v1737 = vadd.f32 %v1473, %v1736
    %v1738 = vpop.f32.mrf.mxu0
    %1739 = vmatprep.mubr.f32.mxu0 0.0
    %1740 = vmatmul.mubr.f32.gmra.mxu0 %v1538
    %v1741 = vpop.f32.mrf.mxu0
    %v1742 = vadd.f32 %v1473, %v1741
    %v1743 = vpop.f32.mrf.mxu0
    %1744 = vmatprep.mubr.f32.mxu0 0.0
    %1745 = vmatmul.mubr.f32.gmra.mxu0 %v1541
    %v1746 = vpop.f32.mrf.mxu0
    %v1747 = vadd.f32 %v1473, %v1746
    %v1748 = vpop.f32.mrf.mxu0
    %1749 = vmatprep.mubr.f32.mxu0 0.0
    %1750 = vmatmul.mubr.f32.gmra.mxu0 %v1544
    %v1751 = vpop.f32.mrf.mxu0
    %v1752 = vadd.f32 %v1473, %v1751
    %v1753 = vpop.f32.mrf.mxu0
    %1754 = vmatprep.mubr.f32.mxu0 0.0
    %1755 = vmatmul.mubr.f32.gmra.mxu0 %v1547
    %v1756 = vpop.f32.mrf.mxu0
    %v1757 = vadd.f32 %v1473, %v1756
    %v1758 = vpop.f32.mrf.mxu0
    %1759 = vmatprep.mubr.f32.mxu0 0.0
    %1760 = vmatmul.mubr.f32.gmra.mxu0 %v1550
    %v1761 = vpop.f32.mrf.mxu0
    %v1762 = vadd.f32 %v1473, %v1761
    %v1763 = vpop.f32.mrf.mxu0
    %1764 = vmatprep.mubr.f32.mxu0 0.0
    %1765 = vmatmul.mubr.f32.gmra.mxu0 %v1553
    %v1766 = vpop.f32.mrf.mxu0
    %v1767 = vadd.f32 %v1473, %v1766
    %v1768 = vpop.f32.mrf.mxu0
    %1769 = vmatprep.mubr.f32.mxu0 0.0
    %1770 = vmatmul.mubr.f32.gmra.mxu0 %v1556
    %v1771 = vpop.f32.mrf.mxu0
    %v1772 = vadd.f32 %v1473, %v1771
    %v1773 = vpop.f32.mrf.mxu0
    %1774 = vmatprep.mubr.f32.mxu0 0.0
    %1775 = vmatmul.mubr.f32.gmra.mxu0 %v1559
    %v1776 = vpop.f32.mrf.mxu0
    %v1777 = vadd.f32 %v1473, %v1776
    %v1778 = vpop.f32.mrf.mxu0
    %1779 = vmatprep.mubr.f32.mxu0 0.0
    %1780 = vmatmul.mubr.f32.gmra.mxu0 %v1562
    %v1781 = vpop.f32.mrf.mxu0
    %v1782 = vadd.f32 %v1473, %v1781
    %v1783 = vpop.f32.mrf.mxu0
    %1784 = vmatprep.mubr.f32.mxu0 0.0
    %1785 = vmatmul.mubr.f32.gmra.mxu0 %v1565
    %v1786 = vpop.f32.mrf.mxu0
    %v1787 = vadd.f32 %v1473, %v1786
    %v1788 = vpop.f32.mrf.mxu0
    %1789 = vmatprep.mubr.f32.mxu0 0.0
    %1790 = vmatmul.mubr.f32.gmra.mxu0 %v1568
    %v1791 = vpop.f32.mrf.mxu0
    %v1792 = vadd.f32 %v1473, %v1791
    %v1793 = vpop.f32.mrf.mxu0
    %1794 = vdwg.mxu0
    %v1795 = vmax.f32 %v1637, 0.0
    %v1796 = vmax.f32 %v1642, 0.0
    %v1797 = vmax.f32 %v1647, 0.0
    %v1798 = vmax.f32 %v1652, 0.0
    %v1799 = vmax.f32 %v1657, 0.0
    %v1800 = vmax.f32 %v1662, 0.0
    %v1801 = vmax.f32 %v1667, 0.0
    %v1802 = vmax.f32 %v1672, 0.0
    %v1803 = vmax.f32 %v1677, 0.0
    %v1804 = vmax.f32 %v1682, 0.0
    %v1805 = vmax.f32 %v1687, 0.0
    %v1806 = vmax.f32 %v1692, 0.0
    %v1807 = vmax.f32 %v1697, 0.0
    %v1808 = vmax.f32 %v1702, 0.0
    %v1809 = vmax.f32 %v1707, 0.0
    %v1810 = vmax.f32 %v1712, 0.0
    %v1811 = vmax.f32 %v1717, 0.0
    %v1812 = vmax.f32 %v1722, 0.0
    %v1813 = vmax.f32 %v1727, 0.0
    %v1814 = vmax.f32 %v1732, 0.0
    %v1815 = vmax.f32 %v1737, 0.0
    %v1816 = vmax.f32 %v1742, 0.0
    %v1817 = vmax.f32 %v1747, 0.0
    %v1818 = vmax.f32 %v1752, 0.0
    %v1819 = vmax.f32 %v1757, 0.0
    %v1820 = vmax.f32 %v1762, 0.0
    %v1821 = vmax.f32 %v1767, 0.0
    %v1822 = vmax.f32 %v1772, 0.0
    %v1823 = vmax.f32 %v1777, 0.0
    %v1824 = vmax.f32 %v1782, 0.0
    %v1825 = vmax.f32 %v1787, 0.0
    %v1826 = vmax.f32 %v1792, 0.0
    %v1827 = vld [vmem:[#allocation5 + $0x60] sm:$0xff]
    %v1828 = vld [vmem:[#allocation5 + $0x68] sm:$0xff]
    %v1829 = vld [vmem:[#allocation5 + $0x70] sm:$0xff]
    %v1830 = vld [vmem:[#allocation5 + $0x78] sm:$0xff]
    %v1831 = vld [vmem:[%s4 + $0x3] sm:$0x1]
    %v1832 = vlaneseq
    %v1833 = vshrl.u32 %v1832, 7
    %v1834 = vsub.s32 0, %v1833
    %v1835 = vrot.slane %v1831, %v1834
    %v1837 = vsel %vm174, %v1431, 0
    %v1840 = vsel %vm174, %v1432, 0
    %1842 = vmatprep.subr.mxu0 0.0
    %1843 = vmatpush1.msra.mxu0 0.0
    %1844 = vmatprep.subr.mxu0 0.0
    %1845 = vmatpush1.msra.mxu0 0.0
    %1846 = vmatprep.subr.mxu0 0.0
    %1847 = vmatpush1.msra.mxu0 0.0
    %1848 = vmatprep.subr.mxu0 0.0
    %1849 = vmatpush1.msra.mxu0 0.0
    %1850 = vmatprep.subr.mxu0 0.0
    %1851 = vmatpush1.msra.mxu0 0.0
    %1852 = vmatprep.subr.mxu0 0.0
    %1853 = vmatpush1.msra.mxu0 0.0
    %1854 = vmatprep.subr.mxu0 0.0
    %1855 = vmatpush1.msra.mxu0 0.0
    %1856 = vmatprep.subr.mxu0 0.0
    %1857 = vmatpush1.msra.mxu0 0.0
    %1858 = vmatprep.subr.mxu0 0.0
    %1859 = vmatpush1.msra.mxu0 0.0
    %1860 = vmatprep.subr.mxu0 0.0
    %1861 = vmatpush1.msra.mxu0 0.0
    %1862 = vmatprep.subr.mxu0 0.0
    %1863 = vmatpush1.msra.mxu0 0.0
    %1864 = vmatprep.subr.mxu0 0.0
    %1865 = vmatpush1.msra.mxu0 0.0
    %1866 = vmatprep.subr.mxu0 0.0
    %1867 = vmatpush1.msra.mxu0 %v1830
    %1868 = vmatprep.subr.mxu0 0.0
    %1869 = vmatpush1.msra.mxu0 %v1829
    %1870 = vmatprep.subr.mxu0 0.0
    %1871 = vmatpush1.msra.mxu0 %v1828
    %1872 = vmatprep.subr.mxu0 0.0
    %1873 = vmatpush1.msra.mxu0 %v1827
    %1874 = vmatprep.subr.mxu0 0.0
    %1875 = vmatpush2.msra.mxu0 0.0
    %1876 = vmatprep.subr.mxu0 0.0
    %1877 = vmatpush2.msra.mxu0 0.0
    %1878 = vmatprep.subr.mxu0 0.0
    %1879 = vmatpush2.msra.mxu0 0.0
    %1880 = vmatprep.subr.mxu0 0.0
    %1881 = vmatpush2.msra.mxu0 0.0
    %1882 = vmatprep.subr.mxu0 0.0
    %1883 = vmatpush2.msra.mxu0 0.0
    %1884 = vmatprep.subr.mxu0 0.0
    %1885 = vmatpush2.msra.mxu0 0.0
    %1886 = vmatprep.subr.mxu0 0.0
    %1887 = vmatpush2.msra.mxu0 0.0
    %1888 = vmatprep.subr.mxu0 0.0
    %1889 = vmatpush2.msra.mxu0 0.0
    %1890 = vmatprep.subr.mxu0 0.0
    %1891 = vmatpush2.msra.mxu0 0.0
    %1892 = vmatprep.subr.mxu0 0.0
    %1893 = vmatpush2.msra.mxu0 0.0
    %1894 = vmatprep.subr.mxu0 0.0
    %1895 = vmatpush2.msra.mxu0 0.0
    %1896 = vmatprep.subr.mxu0 0.0
    %1897 = vmatpush2.msra.mxu0 0.0
    %1898 = vmatprep.subr.mxu0 0.0
    %1899 = vmatpush2.msra.mxu0 0.0
    %1900 = vmatprep.subr.mxu0 0.0
    %1901 = vmatpush2.msra.mxu0 0.0
    %1902 = vmatprep.subr.mxu0 0.0
    %1903 = vmatpush2.msra.mxu0 0.0
    %1904 = vmatprep.subr.mxu0 0.0
    %1905 = vmatpush2.msra.mxu0 0.0
    %1906 = vmatprep.mubr.f32.mxu0 0.0
    %1907 = vmatmul.mubr.f32.gmra.mxu0 %v1837
    %v1908 = vpop.f32.mrf.mxu0
    %v1909 = vadd.f32 %v1835, %v1908
    %v1910 = vpop.f32.mrf.mxu0
    %1911 = vmatprep.mubr.f32.mxu0 0.0
    %1912 = vmatmul.mubr.f32.gmra.mxu0 %v1840
    %v1913 = vpop.f32.mrf.mxu0
    %v1914 = vadd.f32 %v1835, %v1913
    %v1915 = vpop.f32.mrf.mxu0
    %1916 = vdwg.mxu0
    %v1917 = vmax.f32 %v1909, 0.0
    %v1918 = vmax.f32 %v1914, 0.0
    %v1919 = vld [vmem:[%s4 + $0x1] sm:$0x1]
    %v1920 = vld [vmem:[%s4 + $0x7] sm:$0x1]
    %v1923 = vcombine.high %v1917, %v1917
    %v1925 = vunpack.c.l.s4 1966171168
    %v1926 = vunpack.c.0.s8 %v1925
    %v1927 = vlaneseq
    %v1928 = vshrl.u32 %v1927, 7
    %v1929 = vsub.s32 %v1926, %v1928
    %v1930 = vrot.slane %v1917, %v1929
    %v1932 = vunpack.c.l.s4 1966171168
    %v1933 = vunpack.c.0.s8 %v1932
    %v1934 = vlaneseq
    %v1935 = vshrl.u32 %v1934, 7
    %v1936 = vsub.s32 %v1933, %v1935
    %v1937 = vrot.slane %v1923, %v1936
    %v1938 = vcombine.high %v1930, %v1930
    %v1939 = vcombine.high %v1937, %v1937
    %v1941 = vunpack.c.l.s4 1966171168
    %v1942 = vunpack.c.0.s8 %v1941
    %v1943 = vlaneseq
    %v1944 = vshrl.u32 %v1943, 7
    %v1945 = vsub.s32 %v1942, %v1944
    %v1946 = vrot.slane %v1930, %v1945
    %v1948 = vunpack.c.l.s4 1966171168
    %v1949 = vunpack.c.0.s8 %v1948
    %v1950 = vlaneseq
    %v1951 = vshrl.u32 %v1950, 7
    %v1952 = vsub.s32 %v1949, %v1951
    %v1953 = vrot.slane %v1937, %v1952
    %v1955 = vunpack.c.l.s4 1966171168
    %v1956 = vunpack.c.0.s8 %v1955
    %v1957 = vlaneseq
    %v1958 = vshrl.u32 %v1957, 7
    %v1959 = vsub.s32 %v1956, %v1958
    %v1960 = vrot.slane %v1938, %v1959
    %v1962 = vunpack.c.l.s4 1966171168
    %v1963 = vunpack.c.0.s8 %v1962
    %v1964 = vlaneseq
    %v1965 = vshrl.u32 %v1964, 7
    %v1966 = vsub.s32 %v1963, %v1965
    %v1967 = vrot.slane %v1939, %v1966
    %v1968 = vcombine.high %v1946, %v1946
    %v1969 = vcombine.high %v1953, %v1953
    %v1970 = vcombine.high %v1960, %v1960
    %v1971 = vcombine.high %v1967, %v1967
    %v1972 = vcombine.high %v1918, %v1918
    %v1974 = vunpack.c.l.s4 1966171168
    %v1975 = vunpack.c.0.s8 %v1974
    %v1976 = vlaneseq
    %v1977 = vshrl.u32 %v1976, 7
    %v1978 = vsub.s32 %v1975, %v1977
    %v1979 = vrot.slane %v1918, %v1978
    %v1981 = vunpack.c.l.s4 1966171168
    %v1982 = vunpack.c.0.s8 %v1981
    %v1983 = vlaneseq
    %v1984 = vshrl.u32 %v1983, 7
    %v1985 = vsub.s32 %v1982, %v1984
    %v1986 = vrot.slane %v1972, %v1985
    %v1987 = vcombine.high %v1979, %v1979
    %v1988 = vcombine.high %v1986, %v1986
    %v1990 = vunpack.c.l.s4 1966171168
    %v1991 = vunpack.c.0.s8 %v1990
    %v1992 = vlaneseq
    %v1993 = vshrl.u32 %v1992, 7
    %v1994 = vsub.s32 %v1991, %v1993
    %v1995 = vrot.slane %v1979, %v1994
    %v1997 = vunpack.c.l.s4 1966171168
    %v1998 = vunpack.c.0.s8 %v1997
    %v1999 = vlaneseq
    %v2000 = vshrl.u32 %v1999, 7
    %v2001 = vsub.s32 %v1998, %v2000
    %v2002 = vrot.slane %v1986, %v2001
    %v2004 = vunpack.c.l.s4 1966171168
    %v2005 = vunpack.c.0.s8 %v2004
    %v2006 = vlaneseq
    %v2007 = vshrl.u32 %v2006, 7
    %v2008 = vsub.s32 %v2005, %v2007
    %v2009 = vrot.slane %v1987, %v2008
    %v2011 = vunpack.c.l.s4 1966171168
    %v2012 = vunpack.c.0.s8 %v2011
    %v2013 = vlaneseq
    %v2014 = vshrl.u32 %v2013, 7
    %v2015 = vsub.s32 %v2012, %v2014
    %v2016 = vrot.slane %v1988, %v2015
    %v2017 = vcombine.high %v1995, %v1995
    %v2018 = vcombine.high %v2002, %v2002
    %v2019 = vcombine.high %v2009, %v2009
    %v2020 = vcombine.high %v2016, %v2016
    %v2021 = vlaneseq
    %v2022 = vshrl.u32 %v2021, 7
    %v2023 = vsub.s32 0, %v2022
    %v2024 = vrot.slane %v1946, %v2023
    %v2025 = vlaneseq
    %v2026 = vshrl.u32 %v2025, 7
    %v2027 = vsub.s32 0, %v2026
    %v2028 = vrot.slane %v1960, %v2027
    %v2029 = vlaneseq
    %v2030 = vshrl.u32 %v2029, 7
    %v2031 = vsub.s32 0, %v2030
    %v2032 = vrot.slane %v1968, %v2031
    %v2033 = vlaneseq
    %v2034 = vshrl.u32 %v2033, 7
    %v2035 = vsub.s32 0, %v2034
    %v2036 = vrot.slane %v1970, %v2035
    %v2037 = vlaneseq
    %v2038 = vshrl.u32 %v2037, 7
    %v2039 = vsub.s32 0, %v2038
    %v2040 = vrot.slane %v1953, %v2039
    %v2041 = vlaneseq
    %v2042 = vshrl.u32 %v2041, 7
    %v2043 = vsub.s32 0, %v2042
    %v2044 = vrot.slane %v1967, %v2043
    %v2045 = vlaneseq
    %v2046 = vshrl.u32 %v2045, 7
    %v2047 = vsub.s32 0, %v2046
    %v2048 = vrot.slane %v1969, %v2047
    %v2049 = vlaneseq
    %v2050 = vshrl.u32 %v2049, 7
    %v2051 = vsub.s32 0, %v2050
    %v2052 = vrot.slane %v1971, %v2051
    %v2053 = vlaneseq
    %v2054 = vshrl.u32 %v2053, 7
    %v2055 = vsub.s32 0, %v2054
    %v2056 = vrot.slane %v1995, %v2055
    %v2057 = vlaneseq
    %v2058 = vshrl.u32 %v2057, 7
    %v2059 = vsub.s32 0, %v2058
    %v2060 = vrot.slane %v2009, %v2059
    %v2061 = vlaneseq
    %v2062 = vshrl.u32 %v2061, 7
    %v2063 = vsub.s32 0, %v2062
    %v2064 = vrot.slane %v2017, %v2063
    %v2065 = vlaneseq
    %v2066 = vshrl.u32 %v2065, 7
    %v2067 = vsub.s32 0, %v2066
    %v2068 = vrot.slane %v2019, %v2067
    %v2069 = vlaneseq
    %v2070 = vshrl.u32 %v2069, 7
    %v2071 = vsub.s32 0, %v2070
    %v2072 = vrot.slane %v2002, %v2071
    %v2073 = vlaneseq
    %v2074 = vshrl.u32 %v2073, 7
    %v2075 = vsub.s32 0, %v2074
    %v2076 = vrot.slane %v2016, %v2075
    %v2077 = vlaneseq
    %v2078 = vshrl.u32 %v2077, 7
    %v2079 = vsub.s32 0, %v2078
    %v2080 = vrot.slane %v2018, %v2079
    %v2081 = vlaneseq
    %v2082 = vshrl.u32 %v2081, 7
    %v2083 = vsub.s32 0, %v2082
    %v2084 = vrot.slane %v2020, %v2083
    %v2101 = vmul.f32 %v1795, %v2024
    %v2102 = vmul.f32 %v1796, %v2024
    %v2103 = vmul.f32 %v1797, %v2028
    %v2104 = vmul.f32 %v1798, %v2028
    %v2105 = vmul.f32 %v1799, %v2032
    %v2106 = vmul.f32 %v1800, %v2032
    %v2107 = vmul.f32 %v1801, %v2036
    %v2108 = vmul.f32 %v1802, %v2036
    %v2109 = vmul.f32 %v1803, %v2040
    %v2110 = vmul.f32 %v1804, %v2040
    %v2111 = vmul.f32 %v1805, %v2044
    %v2112 = vmul.f32 %v1806, %v2044
    %v2113 = vmul.f32 %v1807, %v2048
    %v2114 = vmul.f32 %v1808, %v2048
    %v2115 = vmul.f32 %v1809, %v2052
    %v2116 = vmul.f32 %v1810, %v2052
    %v2117 = vmul.f32 %v1811, %v2056
    %v2118 = vmul.f32 %v1812, %v2056
    %v2119 = vmul.f32 %v1813, %v2060
    %v2120 = vmul.f32 %v1814, %v2060
    %v2121 = vmul.f32 %v1815, %v2064
    %v2122 = vmul.f32 %v1816, %v2064
    %v2123 = vmul.f32 %v1817, %v2068
    %v2124 = vmul.f32 %v1818, %v2068
    %v2125 = vmul.f32 %v1819, %v2072
    %v2126 = vmul.f32 %v1820, %v2072
    %v2127 = vmul.f32 %v1821, %v2076
    %v2128 = vmul.f32 %v1822, %v2076
    %v2129 = vmul.f32 %v1823, %v2080
    %v2130 = vmul.f32 %v1824, %v2080
    %v2131 = vmul.f32 %v1825, %v2084
    %v2132 = vmul.f32 %v1826, %v2084
    %v2133 = vlaneseq
    %v2134 = vshrl.u32 %v2133, 7
    %v2135 = vsub.s32 0, %v2134
    %v2136 = vrot.slane %v1919, %v2135
    %v2137 = vmul.f32 %v2101, %v2136
    %v2138 = vmul.f32 %v2102, %v2136
    %v2139 = vmul.f32 %v2103, %v2136
    %v2140 = vmul.f32 %v2104, %v2136
    %v2141 = vmul.f32 %v2105, %v2136
    %v2142 = vmul.f32 %v2106, %v2136
    %v2143 = vmul.f32 %v2107, %v2136
    %v2144 = vmul.f32 %v2108, %v2136
    %v2145 = vmul.f32 %v2109, %v2136
    %v2146 = vmul.f32 %v2110, %v2136
    %v2147 = vmul.f32 %v2111, %v2136
    %v2148 = vmul.f32 %v2112, %v2136
    %v2149 = vmul.f32 %v2113, %v2136
    %v2150 = vmul.f32 %v2114, %v2136
    %v2151 = vmul.f32 %v2115, %v2136
    %v2152 = vmul.f32 %v2116, %v2136
    %v2153 = vmul.f32 %v2117, %v2136
    %v2154 = vmul.f32 %v2118, %v2136
    %v2155 = vmul.f32 %v2119, %v2136
    %v2156 = vmul.f32 %v2120, %v2136
    %v2157 = vmul.f32 %v2121, %v2136
    %v2158 = vmul.f32 %v2122, %v2136
    %v2159 = vmul.f32 %v2123, %v2136
    %v2160 = vmul.f32 %v2124, %v2136
    %v2161 = vmul.f32 %v2125, %v2136
    %v2162 = vmul.f32 %v2126, %v2136
    %v2163 = vmul.f32 %v2127, %v2136
    %v2164 = vmul.f32 %v2128, %v2136
    %v2165 = vmul.f32 %v2129, %v2136
    %v2166 = vmul.f32 %v2130, %v2136
    %v2167 = vmul.f32 %v2131, %v2136
    %v2168 = vmul.f32 %v2132, %v2136
    %v2169 = vsel %vm174, %v2137, 0.0
    %2170 = vadd.xlane.f32.xlu0 %v2169
    %v2171 = vpop.xlane.xlu0 %2170
    %v2172 = vsel %vm174, %v2138, 0.0
    %2173 = vadd.xlane.f32.xlu0 %v2172
    %v2174 = vpop.xlane.xlu0 %2173
    %v2175 = vsel %vm174, %v2139, 0.0
    %2176 = vadd.xlane.f32.xlu0 %v2175
    %v2177 = vpop.xlane.xlu0 %2176
    %v2178 = vsel %vm174, %v2140, 0.0
    %2179 = vadd.xlane.f32.xlu0 %v2178
    %v2180 = vpop.xlane.xlu0 %2179
    %v2181 = vsel %vm174, %v2141, 0.0
    %2182 = vadd.xlane.f32.xlu0 %v2181
    %v2183 = vpop.xlane.xlu0 %2182
    %v2184 = vsel %vm174, %v2142, 0.0
    %2185 = vadd.xlane.f32.xlu0 %v2184
    %v2186 = vpop.xlane.xlu0 %2185
    %v2187 = vsel %vm174, %v2143, 0.0
    %2188 = vadd.xlane.f32.xlu0 %v2187
    %v2189 = vpop.xlane.xlu0 %2188
    %v2190 = vsel %vm174, %v2144, 0.0
    %2191 = vadd.xlane.f32.xlu0 %v2190
    %v2192 = vpop.xlane.xlu0 %2191
    %v2193 = vsel %vm174, %v2145, 0.0
    %2194 = vadd.xlane.f32.xlu0 %v2193
    %v2195 = vpop.xlane.xlu0 %2194
    %v2196 = vsel %vm174, %v2146, 0.0
    %2197 = vadd.xlane.f32.xlu0 %v2196
    %v2198 = vpop.xlane.xlu0 %2197
    %v2199 = vsel %vm174, %v2147, 0.0
    %2200 = vadd.xlane.f32.xlu0 %v2199
    %v2201 = vpop.xlane.xlu0 %2200
    %v2202 = vsel %vm174, %v2148, 0.0
    %2203 = vadd.xlane.f32.xlu0 %v2202
    %v2204 = vpop.xlane.xlu0 %2203
    %v2205 = vsel %vm174, %v2149, 0.0
    %2206 = vadd.xlane.f32.xlu0 %v2205
    %v2207 = vpop.xlane.xlu0 %2206
    %v2208 = vsel %vm174, %v2150, 0.0
    %2209 = vadd.xlane.f32.xlu0 %v2208
    %v2210 = vpop.xlane.xlu0 %2209
    %v2211 = vsel %vm174, %v2151, 0.0
    %2212 = vadd.xlane.f32.xlu0 %v2211
    %v2213 = vpop.xlane.xlu0 %2212
    %v2214 = vsel %vm174, %v2152, 0.0
    %2215 = vadd.xlane.f32.xlu0 %v2214
    %v2216 = vpop.xlane.xlu0 %2215
    %v2217 = vsel %vm174, %v2153, 0.0
    %2218 = vadd.xlane.f32.xlu0 %v2217
    %v2219 = vpop.xlane.xlu0 %2218
    %v2220 = vsel %vm174, %v2154, 0.0
    %2221 = vadd.xlane.f32.xlu0 %v2220
    %v2222 = vpop.xlane.xlu0 %2221
    %v2223 = vsel %vm174, %v2155, 0.0
    %2224 = vadd.xlane.f32.xlu0 %v2223
    %v2225 = vpop.xlane.xlu0 %2224
    %v2226 = vsel %vm174, %v2156, 0.0
    %2227 = vadd.xlane.f32.xlu0 %v2226
    %v2228 = vpop.xlane.xlu0 %2227
    %v2229 = vsel %vm174, %v2157, 0.0
    %2230 = vadd.xlane.f32.xlu0 %v2229
    %v2231 = vpop.xlane.xlu0 %2230
    %v2232 = vsel %vm174, %v2158, 0.0
    %2233 = vadd.xlane.f32.xlu0 %v2232
    %v2234 = vpop.xlane.xlu0 %2233
    %v2235 = vsel %vm174, %v2159, 0.0
    %2236 = vadd.xlane.f32.xlu0 %v2235
    %v2237 = vpop.xlane.xlu0 %2236
    %v2238 = vsel %vm174, %v2160, 0.0
    %2239 = vadd.xlane.f32.xlu0 %v2238
    %v2240 = vpop.xlane.xlu0 %2239
    %v2241 = vsel %vm174, %v2161, 0.0
    %2242 = vadd.xlane.f32.xlu0 %v2241
    %v2243 = vpop.xlane.xlu0 %2242
    %v2244 = vsel %vm174, %v2162, 0.0
    %2245 = vadd.xlane.f32.xlu0 %v2244
    %v2246 = vpop.xlane.xlu0 %2245
    %v2247 = vsel %vm174, %v2163, 0.0
    %2248 = vadd.xlane.f32.xlu0 %v2247
    %v2249 = vpop.xlane.xlu0 %2248
    %v2250 = vsel %vm174, %v2164, 0.0
    %2251 = vadd.xlane.f32.xlu0 %v2250
    %v2252 = vpop.xlane.xlu0 %2251
    %v2253 = vsel %vm174, %v2165, 0.0
    %2254 = vadd.xlane.f32.xlu0 %v2253
    %v2255 = vpop.xlane.xlu0 %2254
    %v2256 = vsel %vm174, %v2166, 0.0
    %2257 = vadd.xlane.f32.xlu0 %v2256
    %v2258 = vpop.xlane.xlu0 %2257
    %v2259 = vsel %vm174, %v2167, 0.0
    %2260 = vadd.xlane.f32.xlu0 %v2259
    %v2261 = vpop.xlane.xlu0 %2260
    %v2262 = vsel %vm174, %v2168, 0.0
    %2263 = vadd.xlane.f32.xlu0 %v2262
    %v2264 = vpop.xlane.xlu0 %2263
    %s2266 = vtos %v1920
    %v2267 = vstv %s2266
    %v2269 = vadd.f32 %v2171, %v2267
    %v2270 = vadd.f32 %v2174, %v2267
    %v2271 = vadd.f32 %v2177, %v2267
    %v2272 = vadd.f32 %v2180, %v2267
    %v2273 = vadd.f32 %v2183, %v2267
    %v2274 = vadd.f32 %v2186, %v2267
    %v2275 = vadd.f32 %v2189, %v2267
    %v2276 = vadd.f32 %v2192, %v2267
    %v2277 = vadd.f32 %v2195, %v2267
    %v2278 = vadd.f32 %v2198, %v2267
    %v2279 = vadd.f32 %v2201, %v2267
    %v2280 = vadd.f32 %v2204, %v2267
    %v2281 = vadd.f32 %v2207, %v2267
    %v2282 = vadd.f32 %v2210, %v2267
    %v2283 = vadd.f32 %v2213, %v2267
    %v2284 = vadd.f32 %v2216, %v2267
    %v2285 = vadd.f32 %v2219, %v2267
    %v2286 = vadd.f32 %v2222, %v2267
    %v2287 = vadd.f32 %v2225, %v2267
    %v2288 = vadd.f32 %v2228, %v2267
    %v2289 = vadd.f32 %v2231, %v2267
    %v2290 = vadd.f32 %v2234, %v2267
    %v2291 = vadd.f32 %v2237, %v2267
    %v2292 = vadd.f32 %v2240, %v2267
    %v2293 = vadd.f32 %v2243, %v2267
    %v2294 = vadd.f32 %v2246, %v2267
    %v2295 = vadd.f32 %v2249, %v2267
    %v2296 = vadd.f32 %v2252, %v2267
    %v2297 = vadd.f32 %v2255, %v2267
    %v2298 = vadd.f32 %v2258, %v2267
    %v2299 = vadd.f32 %v2261, %v2267
    %v2300 = vadd.f32 %v2264, %v2267
    %v2333 = vlaneseq
    %v2334 = vshrl.u32 %v2333, 7
    %v2335 = vsub.s32 %v68, %v2334
    %v2336 = vrot.slane %v2269, %v2335
    %v2337 = vadd.s32 %v68, 4294967288
    %v2338 = vlaneseq
    %v2339 = vshrl.u32 %v2338, 7
    %v2340 = vsub.s32 %v2337, %v2339
    %v2341 = vrot.slane %v2270, %v2340
    %vm2342 = vcmask 130112
    %v2343 = vsel %vm2342, %v2341, %v2336
    %v2344 = vlaneseq
    %v2345 = vshrl.u32 %v2344, 7
    %v2346 = vsub.s32 %v68, %v2345
    %v2347 = vrot.slane %v2271, %v2346
    %v2348 = vlaneseq
    %v2349 = vshrl.u32 %v2348, 7
    %v2350 = vsub.s32 %v2337, %v2349
    %v2351 = vrot.slane %v2272, %v2350
    %v2352 = vsel %vm2342, %v2351, %v2347
    %v2353 = vlaneseq
    %v2354 = vshrl.u32 %v2353, 7
    %v2355 = vsub.s32 %v68, %v2354
    %v2356 = vrot.slane %v2273, %v2355
    %v2357 = vlaneseq
    %v2358 = vshrl.u32 %v2357, 7
    %v2359 = vsub.s32 %v2337, %v2358
    %v2360 = vrot.slane %v2274, %v2359
    %v2361 = vsel %vm2342, %v2360, %v2356
    %v2362 = vlaneseq
    %v2363 = vshrl.u32 %v2362, 7
    %v2364 = vsub.s32 %v68, %v2363
    %v2365 = vrot.slane %v2275, %v2364
    %v2366 = vlaneseq
    %v2367 = vshrl.u32 %v2366, 7
    %v2368 = vsub.s32 %v2337, %v2367
    %v2369 = vrot.slane %v2276, %v2368
    %v2370 = vsel %vm2342, %v2369, %v2365
    %v2371 = vlaneseq
    %v2372 = vshrl.u32 %v2371, 7
    %v2373 = vsub.s32 %v68, %v2372
    %v2374 = vrot.slane %v2277, %v2373
    %v2375 = vlaneseq
    %v2376 = vshrl.u32 %v2375, 7
    %v2377 = vsub.s32 %v2337, %v2376
    %v2378 = vrot.slane %v2278, %v2377
    %v2379 = vsel %vm2342, %v2378, %v2374
    %v2380 = vlaneseq
    %v2381 = vshrl.u32 %v2380, 7
    %v2382 = vsub.s32 %v68, %v2381
    %v2383 = vrot.slane %v2279, %v2382
    %v2384 = vlaneseq
    %v2385 = vshrl.u32 %v2384, 7
    %v2386 = vsub.s32 %v2337, %v2385
    %v2387 = vrot.slane %v2280, %v2386
    %v2388 = vsel %vm2342, %v2387, %v2383
    %v2389 = vlaneseq
    %v2390 = vshrl.u32 %v2389, 7
    %v2391 = vsub.s32 %v68, %v2390
    %v2392 = vrot.slane %v2281, %v2391
    %v2393 = vlaneseq
    %v2394 = vshrl.u32 %v2393, 7
    %v2395 = vsub.s32 %v2337, %v2394
    %v2396 = vrot.slane %v2282, %v2395
    %v2397 = vsel %vm2342, %v2396, %v2392
    %v2398 = vlaneseq
    %v2399 = vshrl.u32 %v2398, 7
    %v2400 = vsub.s32 %v68, %v2399
    %v2401 = vrot.slane %v2283, %v2400
    %v2402 = vlaneseq
    %v2403 = vshrl.u32 %v2402, 7
    %v2404 = vsub.s32 %v2337, %v2403
    %v2405 = vrot.slane %v2284, %v2404
    %v2406 = vsel %vm2342, %v2405, %v2401
    %v2407 = vlaneseq
    %v2408 = vshrl.u32 %v2407, 7
    %v2409 = vsub.s32 %v68, %v2408
    %v2410 = vrot.slane %v2285, %v2409
    %v2411 = vlaneseq
    %v2412 = vshrl.u32 %v2411, 7
    %v2413 = vsub.s32 %v2337, %v2412
    %v2414 = vrot.slane %v2286, %v2413
    %v2415 = vsel %vm2342, %v2414, %v2410
    %v2416 = vlaneseq
    %v2417 = vshrl.u32 %v2416, 7
    %v2418 = vsub.s32 %v68, %v2417
    %v2419 = vrot.slane %v2287, %v2418
    %v2420 = vlaneseq
    %v2421 = vshrl.u32 %v2420, 7
    %v2422 = vsub.s32 %v2337, %v2421
    %v2423 = vrot.slane %v2288, %v2422
    %v2424 = vsel %vm2342, %v2423, %v2419
    %v2425 = vlaneseq
    %v2426 = vshrl.u32 %v2425, 7
    %v2427 = vsub.s32 %v68, %v2426
    %v2428 = vrot.slane %v2289, %v2427
    %v2429 = vlaneseq
    %v2430 = vshrl.u32 %v2429, 7
    %v2431 = vsub.s32 %v2337, %v2430
    %v2432 = vrot.slane %v2290, %v2431
    %v2433 = vsel %vm2342, %v2432, %v2428
    %v2434 = vlaneseq
    %v2435 = vshrl.u32 %v2434, 7
    %v2436 = vsub.s32 %v68, %v2435
    %v2437 = vrot.slane %v2291, %v2436
    %v2438 = vlaneseq
    %v2439 = vshrl.u32 %v2438, 7
    %v2440 = vsub.s32 %v2337, %v2439
    %v2441 = vrot.slane %v2292, %v2440
    %v2442 = vsel %vm2342, %v2441, %v2437
    %v2443 = vlaneseq
    %v2444 = vshrl.u32 %v2443, 7
    %v2445 = vsub.s32 %v68, %v2444
    %v2446 = vrot.slane %v2293, %v2445
    %v2447 = vlaneseq
    %v2448 = vshrl.u32 %v2447, 7
    %v2449 = vsub.s32 %v2337, %v2448
    %v2450 = vrot.slane %v2294, %v2449
    %v2451 = vsel %vm2342, %v2450, %v2446
    %v2452 = vlaneseq
    %v2453 = vshrl.u32 %v2452, 7
    %v2454 = vsub.s32 %v68, %v2453
    %v2455 = vrot.slane %v2295, %v2454
    %v2456 = vlaneseq
    %v2457 = vshrl.u32 %v2456, 7
    %v2458 = vsub.s32 %v2337, %v2457
    %v2459 = vrot.slane %v2296, %v2458
    %v2460 = vsel %vm2342, %v2459, %v2455
    %v2461 = vlaneseq
    %v2462 = vshrl.u32 %v2461, 7
    %v2463 = vsub.s32 %v68, %v2462
    %v2464 = vrot.slane %v2297, %v2463
    %v2465 = vlaneseq
    %v2466 = vshrl.u32 %v2465, 7
    %v2467 = vsub.s32 %v2337, %v2466
    %v2468 = vrot.slane %v2298, %v2467
    %v2469 = vsel %vm2342, %v2468, %v2464
    %v2470 = vlaneseq
    %v2471 = vshrl.u32 %v2470, 7
    %v2472 = vsub.s32 %v68, %v2471
    %v2473 = vrot.slane %v2299, %v2472
    %v2474 = vlaneseq
    %v2475 = vshrl.u32 %v2474, 7
    %v2476 = vsub.s32 %v2337, %v2475
    %v2477 = vrot.slane %v2300, %v2476
    %v2478 = vsel %vm2342, %v2477, %v2473
    %vm2479 = vcmask 1041409
    %v2480 = vsel %vm2479, %v2352, %v2343
    %vm2481 = vcmask 1042434
    %v2482 = vsel %vm2481, %v2361, %v2480
    %vm2483 = vcmask 1043459
    %v2484 = vsel %vm2483, %v2370, %v2482
    %vm2485 = vcmask 1044484
    %v2486 = vsel %vm2485, %v2379, %v2484
    %vm2487 = vcmask 1045509
    %v2488 = vsel %vm2487, %v2388, %v2486
    %vm2489 = vcmask 1046534
    %v2490 = vsel %vm2489, %v2397, %v2488
    %vm2491 = vcmask 1047559
    %v2492 = vsel %vm2491, %v2406, %v2490
    %v2493 = vsel %vm2479, %v2424, %v2415
    %v2494 = vsel %vm2481, %v2433, %v2493
    %v2495 = vsel %vm2483, %v2442, %v2494
    %v2496 = vsel %vm2485, %v2451, %v2495
    %v2497 = vsel %vm2487, %v2460, %v2496
    %v2498 = vsel %vm2489, %v2469, %v2497
    %v2499 = vsel %vm2491, %v2478, %v2498
    %vm2502 = vcmask 130048
    %v2503 = vsel %vm2502, %v2492, -inf
    %2504 = vmax.xlane.f32.xlu0 %v2503
    %v2505 = vpop.xlane.xlu0 %2504
    %v2506 = vsel %vm2502, %v2499, -inf
    %2507 = vmax.xlane.f32.xlu0 %v2506
    %v2508 = vpop.xlane.xlu0 %2507
    %v2511 = vlaneseq
    %v2512 = vshrl.u32 %v2511, 7
    %v2513 = vsub.s32 0, %v2512
    %v2514 = vrot.slane %v2505, %v2513
    %v2515 = vlaneseq
    %v2516 = vshrl.u32 %v2515, 7
    %v2517 = vsub.s32 1, %v2516
    %v2518 = vrot.slane %v2505, %v2517
    %v2519 = vlaneseq
    %v2520 = vshrl.u32 %v2519, 7
    %v2521 = vsub.s32 2, %v2520
    %v2522 = vrot.slane %v2505, %v2521
    %v2523 = vlaneseq
    %v2524 = vshrl.u32 %v2523, 7
    %v2525 = vsub.s32 3, %v2524
    %v2526 = vrot.slane %v2505, %v2525
    %v2527 = vlaneseq
    %v2528 = vshrl.u32 %v2527, 7
    %v2529 = vsub.s32 4, %v2528
    %v2530 = vrot.slane %v2505, %v2529
    %v2531 = vlaneseq
    %v2532 = vshrl.u32 %v2531, 7
    %v2533 = vsub.s32 5, %v2532
    %v2534 = vrot.slane %v2505, %v2533
    %v2535 = vlaneseq
    %v2536 = vshrl.u32 %v2535, 7
    %v2537 = vsub.s32 6, %v2536
    %v2538 = vrot.slane %v2505, %v2537
    %v2539 = vlaneseq
    %v2540 = vshrl.u32 %v2539, 7
    %v2541 = vsub.s32 7, %v2540
    %v2542 = vrot.slane %v2505, %v2541
    %v2543 = vlaneseq
    %v2544 = vshrl.u32 %v2543, 7
    %v2545 = vsub.s32 0, %v2544
    %v2546 = vrot.slane %v2508, %v2545
    %v2547 = vlaneseq
    %v2548 = vshrl.u32 %v2547, 7
    %v2549 = vsub.s32 1, %v2548
    %v2550 = vrot.slane %v2508, %v2549
    %v2551 = vlaneseq
    %v2552 = vshrl.u32 %v2551, 7
    %v2553 = vsub.s32 2, %v2552
    %v2554 = vrot.slane %v2508, %v2553
    %v2555 = vlaneseq
    %v2556 = vshrl.u32 %v2555, 7
    %v2557 = vsub.s32 3, %v2556
    %v2558 = vrot.slane %v2508, %v2557
    %v2559 = vlaneseq
    %v2560 = vshrl.u32 %v2559, 7
    %v2561 = vsub.s32 4, %v2560
    %v2562 = vrot.slane %v2508, %v2561
    %v2563 = vlaneseq
    %v2564 = vshrl.u32 %v2563, 7
    %v2565 = vsub.s32 5, %v2564
    %v2566 = vrot.slane %v2508, %v2565
    %v2567 = vlaneseq
    %v2568 = vshrl.u32 %v2567, 7
    %v2569 = vsub.s32 6, %v2568
    %v2570 = vrot.slane %v2508, %v2569
    %v2571 = vlaneseq
    %v2572 = vshrl.u32 %v2571, 7
    %v2573 = vsub.s32 7, %v2572
    %v2574 = vrot.slane %v2508, %v2573
    %v2591 = vsub.f32 %v2269, %v2514
    %v2592 = vsub.f32 %v2270, %v2514
    %v2593 = vsub.f32 %v2271, %v2518
    %v2594 = vsub.f32 %v2272, %v2518
    %v2595 = vsub.f32 %v2273, %v2522
    %v2596 = vsub.f32 %v2274, %v2522
    %v2597 = vsub.f32 %v2275, %v2526
    %v2598 = vsub.f32 %v2276, %v2526
    %v2599 = vsub.f32 %v2277, %v2530
    %v2600 = vsub.f32 %v2278, %v2530
    %v2601 = vsub.f32 %v2279, %v2534
    %v2602 = vsub.f32 %v2280, %v2534
    %v2603 = vsub.f32 %v2281, %v2538
    %v2604 = vsub.f32 %v2282, %v2538
    %v2605 = vsub.f32 %v2283, %v2542
    %v2606 = vsub.f32 %v2284, %v2542
    %v2607 = vsub.f32 %v2285, %v2546
    %v2608 = vsub.f32 %v2286, %v2546
    %v2609 = vsub.f32 %v2287, %v2550
    %v2610 = vsub.f32 %v2288, %v2550
    %v2611 = vsub.f32 %v2289, %v2554
    %v2612 = vsub.f32 %v2290, %v2554
    %v2613 = vsub.f32 %v2291, %v2558
    %v2614 = vsub.f32 %v2292, %v2558
    %v2615 = vsub.f32 %v2293, %v2562
    %v2616 = vsub.f32 %v2294, %v2562
    %v2617 = vsub.f32 %v2295, %v2566
    %v2618 = vsub.f32 %v2296, %v2566
    %v2619 = vsub.f32 %v2297, %v2570
    %v2620 = vsub.f32 %v2298, %v2570
    %v2621 = vsub.f32 %v2299, %v2574
    %v2622 = vsub.f32 %v2300, %v2574
    %v2623 = vmul.f32 %v2591, 1.442695
    %v2624 = vpow.pop %v2623
    %v2625 = vmul.f32 %v2592, 1.442695
    %v2626 = vpow.pop %v2625
    %v2627 = vmul.f32 %v2593, 1.442695
    %v2628 = vpow.pop %v2627
    %v2629 = vmul.f32 %v2594, 1.442695
    %v2630 = vpow.pop %v2629
    %v2631 = vmul.f32 %v2595, 1.442695
    %v2632 = vpow.pop %v2631
    %v2633 = vmul.f32 %v2596, 1.442695
    %v2634 = vpow.pop %v2633
    %v2635 = vmul.f32 %v2597, 1.442695
    %v2636 = vpow.pop %v2635
    %v2637 = vmul.f32 %v2598, 1.442695
    %v2638 = vpow.pop %v2637
    %v2639 = vmul.f32 %v2599, 1.442695
    %v2640 = vpow.pop %v2639
    %v2641 = vmul.f32 %v2600, 1.442695
    %v2642 = vpow.pop %v2641
    %v2643 = vmul.f32 %v2601, 1.442695
    %v2644 = vpow.pop %v2643
    %v2645 = vmul.f32 %v2602, 1.442695
    %v2646 = vpow.pop %v2645
    %v2647 = vmul.f32 %v2603, 1.442695
    %v2648 = vpow.pop %v2647
    %v2649 = vmul.f32 %v2604, 1.442695
    %v2650 = vpow.pop %v2649
    %v2651 = vmul.f32 %v2605, 1.442695
    %v2652 = vpow.pop %v2651
    %v2653 = vmul.f32 %v2606, 1.442695
    %v2654 = vpow.pop %v2653
    %v2655 = vmul.f32 %v2607, 1.442695
    %v2656 = vpow.pop %v2655
    %v2657 = vmul.f32 %v2608, 1.442695
    %v2658 = vpow.pop %v2657
    %v2659 = vmul.f32 %v2609, 1.442695
    %v2660 = vpow.pop %v2659
    %v2661 = vmul.f32 %v2610, 1.442695
    %v2662 = vpow.pop %v2661
    %v2663 = vmul.f32 %v2611, 1.442695
    %v2664 = vpow.pop %v2663
    %v2665 = vmul.f32 %v2612, 1.442695
    %v2666 = vpow.pop %v2665
    %v2667 = vmul.f32 %v2613, 1.442695
    %v2668 = vpow.pop %v2667
    %v2669 = vmul.f32 %v2614, 1.442695
    %v2670 = vpow.pop %v2669
    %v2671 = vmul.f32 %v2615, 1.442695
    %v2672 = vpow.pop %v2671
    %v2673 = vmul.f32 %v2616, 1.442695
    %v2674 = vpow.pop %v2673
    %v2675 = vmul.f32 %v2617, 1.442695
    %v2676 = vpow.pop %v2675
    %v2677 = vmul.f32 %v2618, 1.442695
    %v2678 = vpow.pop %v2677
    %v2679 = vmul.f32 %v2619, 1.442695
    %v2680 = vpow.pop %v2679
    %v2681 = vmul.f32 %v2620, 1.442695
    %v2682 = vpow.pop %v2681
    %v2683 = vmul.f32 %v2621, 1.442695
    %v2684 = vpow.pop %v2683
    %v2685 = vmul.f32 %v2622, 1.442695
    %v2686 = vpow.pop %v2685
    %2719 = vset.pattern.permute.xlu0 0
    %2720 = vperm.xlu0 %2719, %v2624
    %v2721 = vpop.permute.xlu0 %2720
    %2722 = vset.pattern.permute.xlu0 0
    %2723 = vperm.xlu0 %2722, %v2626
    %v2724 = vpop.permute.xlu0 %2723
    %2725 = vset.pattern.permute.xlu0 0
    %2726 = vperm.xlu0 %2725, %v2628
    %v2727 = vpop.permute.xlu0 %2726
    %2728 = vset.pattern.permute.xlu0 0
    %2729 = vperm.xlu0 %2728, %v2630
    %v2730 = vpop.permute.xlu0 %2729
    %2731 = vset.pattern.permute.xlu0 0
    %2732 = vperm.xlu0 %2731, %v2632
    %v2733 = vpop.permute.xlu0 %2732
    %2734 = vset.pattern.permute.xlu0 0
    %2735 = vperm.xlu0 %2734, %v2634
    %v2736 = vpop.permute.xlu0 %2735
    %2737 = vset.pattern.permute.xlu0 0
    %2738 = vperm.xlu0 %2737, %v2636
    %v2739 = vpop.permute.xlu0 %2738
    %2740 = vset.pattern.permute.xlu0 0
    %2741 = vperm.xlu0 %2740, %v2638
    %v2742 = vpop.permute.xlu0 %2741
    %2743 = vset.pattern.permute.xlu0 0
    %2744 = vperm.xlu0 %2743, %v2640
    %v2745 = vpop.permute.xlu0 %2744
    %2746 = vset.pattern.permute.xlu0 0
    %2747 = vperm.xlu0 %2746, %v2642
    %v2748 = vpop.permute.xlu0 %2747
    %2749 = vset.pattern.permute.xlu0 0
    %2750 = vperm.xlu0 %2749, %v2644
    %v2751 = vpop.permute.xlu0 %2750
    %2752 = vset.pattern.permute.xlu0 0
    %2753 = vperm.xlu0 %2752, %v2646
    %v2754 = vpop.permute.xlu0 %2753
    %2755 = vset.pattern.permute.xlu0 0
    %2756 = vperm.xlu0 %2755, %v2648
    %v2757 = vpop.permute.xlu0 %2756
    %2758 = vset.pattern.permute.xlu0 0
    %2759 = vperm.xlu0 %2758, %v2650
    %v2760 = vpop.permute.xlu0 %2759
    %2761 = vset.pattern.permute.xlu0 0
    %2762 = vperm.xlu0 %2761, %v2652
    %v2763 = vpop.permute.xlu0 %2762
    %2764 = vset.pattern.permute.xlu0 0
    %2765 = vperm.xlu0 %2764, %v2654
    %v2766 = vpop.permute.xlu0 %2765
    %2767 = vset.pattern.permute.xlu0 0
    %2768 = vperm.xlu0 %2767, %v2656
    %v2769 = vpop.permute.xlu0 %2768
    %2770 = vset.pattern.permute.xlu0 0
    %2771 = vperm.xlu0 %2770, %v2658
    %v2772 = vpop.permute.xlu0 %2771
    %2773 = vset.pattern.permute.xlu0 0
    %2774 = vperm.xlu0 %2773, %v2660
    %v2775 = vpop.permute.xlu0 %2774
    %2776 = vset.pattern.permute.xlu0 0
    %2777 = vperm.xlu0 %2776, %v2662
    %v2778 = vpop.permute.xlu0 %2777
    %2779 = vset.pattern.permute.xlu0 0
    %2780 = vperm.xlu0 %2779, %v2664
    %v2781 = vpop.permute.xlu0 %2780
    %2782 = vset.pattern.permute.xlu0 0
    %2783 = vperm.xlu0 %2782, %v2666
    %v2784 = vpop.permute.xlu0 %2783
    %2785 = vset.pattern.permute.xlu0 0
    %2786 = vperm.xlu0 %2785, %v2668
    %v2787 = vpop.permute.xlu0 %2786
    %2788 = vset.pattern.permute.xlu0 0
    %2789 = vperm.xlu0 %2788, %v2670
    %v2790 = vpop.permute.xlu0 %2789
    %2791 = vset.pattern.permute.xlu0 0
    %2792 = vperm.xlu0 %2791, %v2672
    %v2793 = vpop.permute.xlu0 %2792
    %2794 = vset.pattern.permute.xlu0 0
    %2795 = vperm.xlu0 %2794, %v2674
    %v2796 = vpop.permute.xlu0 %2795
    %2797 = vset.pattern.permute.xlu0 0
    %2798 = vperm.xlu0 %2797, %v2676
    %v2799 = vpop.permute.xlu0 %2798
    %2800 = vset.pattern.permute.xlu0 0
    %2801 = vperm.xlu0 %2800, %v2678
    %v2802 = vpop.permute.xlu0 %2801
    %2803 = vset.pattern.permute.xlu0 0
    %2804 = vperm.xlu0 %2803, %v2680
    %v2805 = vpop.permute.xlu0 %2804
    %2806 = vset.pattern.permute.xlu0 0
    %2807 = vperm.xlu0 %2806, %v2682
    %v2808 = vpop.permute.xlu0 %2807
    %2809 = vset.pattern.permute.xlu0 0
    %2810 = vperm.xlu0 %2809, %v2684
    %v2811 = vpop.permute.xlu0 %2810
    %2812 = vset.pattern.permute.xlu0 0
    %2813 = vperm.xlu0 %2812, %v2686
    %v2814 = vpop.permute.xlu0 %2813
    %v2815 = vlaneseq
    %v2816 = vshrl.u32 %v2815, 7
    %v2817 = vsub.s32 %v68, %v2816
    %v2818 = vrot.slane %v2721, %v2817
    %v2819 = vlaneseq
    %v2820 = vshrl.u32 %v2819, 7
    %v2821 = vsub.s32 %v2337, %v2820
    %v2822 = vrot.slane %v2724, %v2821
    %v2823 = vsel %vm2342, %v2822, %v2818
    %v2824 = vlaneseq
    %v2825 = vshrl.u32 %v2824, 7
    %v2826 = vsub.s32 %v68, %v2825
    %v2827 = vrot.slane %v2727, %v2826
    %v2828 = vlaneseq
    %v2829 = vshrl.u32 %v2828, 7
    %v2830 = vsub.s32 %v2337, %v2829
    %v2831 = vrot.slane %v2730, %v2830
    %v2832 = vsel %vm2342, %v2831, %v2827
    %v2833 = vlaneseq
    %v2834 = vshrl.u32 %v2833, 7
    %v2835 = vsub.s32 %v68, %v2834
    %v2836 = vrot.slane %v2733, %v2835
    %v2837 = vlaneseq
    %v2838 = vshrl.u32 %v2837, 7
    %v2839 = vsub.s32 %v2337, %v2838
    %v2840 = vrot.slane %v2736, %v2839
    %v2841 = vsel %vm2342, %v2840, %v2836
    %v2842 = vlaneseq
    %v2843 = vshrl.u32 %v2842, 7
    %v2844 = vsub.s32 %v68, %v2843
    %v2845 = vrot.slane %v2739, %v2844
    %v2846 = vlaneseq
    %v2847 = vshrl.u32 %v2846, 7
    %v2848 = vsub.s32 %v2337, %v2847
    %v2849 = vrot.slane %v2742, %v2848
    %v2850 = vsel %vm2342, %v2849, %v2845
    %v2851 = vlaneseq
    %v2852 = vshrl.u32 %v2851, 7
    %v2853 = vsub.s32 %v68, %v2852
    %v2854 = vrot.slane %v2745, %v2853
    %v2855 = vlaneseq
    %v2856 = vshrl.u32 %v2855, 7
    %v2857 = vsub.s32 %v2337, %v2856
    %v2858 = vrot.slane %v2748, %v2857
    %v2859 = vsel %vm2342, %v2858, %v2854
    %v2860 = vlaneseq
    %v2861 = vshrl.u32 %v2860, 7
    %v2862 = vsub.s32 %v68, %v2861
    %v2863 = vrot.slane %v2751, %v2862
    %v2864 = vlaneseq
    %v2865 = vshrl.u32 %v2864, 7
    %v2866 = vsub.s32 %v2337, %v2865
    %v2867 = vrot.slane %v2754, %v2866
    %v2868 = vsel %vm2342, %v2867, %v2863
    %v2869 = vlaneseq
    %v2870 = vshrl.u32 %v2869, 7
    %v2871 = vsub.s32 %v68, %v2870
    %v2872 = vrot.slane %v2757, %v2871
    %v2873 = vlaneseq
    %v2874 = vshrl.u32 %v2873, 7
    %v2875 = vsub.s32 %v2337, %v2874
    %v2876 = vrot.slane %v2760, %v2875
    %v2877 = vsel %vm2342, %v2876, %v2872
    %v2878 = vlaneseq
    %v2879 = vshrl.u32 %v2878, 7
    %v2880 = vsub.s32 %v68, %v2879
    %v2881 = vrot.slane %v2763, %v2880
    %v2882 = vlaneseq
    %v2883 = vshrl.u32 %v2882, 7
    %v2884 = vsub.s32 %v2337, %v2883
    %v2885 = vrot.slane %v2766, %v2884
    %v2886 = vsel %vm2342, %v2885, %v2881
    %v2887 = vlaneseq
    %v2888 = vshrl.u32 %v2887, 7
    %v2889 = vsub.s32 %v68, %v2888
    %v2890 = vrot.slane %v2769, %v2889
    %v2891 = vlaneseq
    %v2892 = vshrl.u32 %v2891, 7
    %v2893 = vsub.s32 %v2337, %v2892
    %v2894 = vrot.slane %v2772, %v2893
    %v2895 = vsel %vm2342, %v2894, %v2890
    %v2896 = vlaneseq
    %v2897 = vshrl.u32 %v2896, 7
    %v2898 = vsub.s32 %v68, %v2897
    %v2899 = vrot.slane %v2775, %v2898
    %v2900 = vlaneseq
    %v2901 = vshrl.u32 %v2900, 7
    %v2902 = vsub.s32 %v2337, %v2901
    %v2903 = vrot.slane %v2778, %v2902
    %v2904 = vsel %vm2342, %v2903, %v2899
    %v2905 = vlaneseq
    %v2906 = vshrl.u32 %v2905, 7
    %v2907 = vsub.s32 %v68, %v2906
    %v2908 = vrot.slane %v2781, %v2907
    %v2909 = vlaneseq
    %v2910 = vshrl.u32 %v2909, 7
    %v2911 = vsub.s32 %v2337, %v2910
    %v2912 = vrot.slane %v2784, %v2911
    %v2913 = vsel %vm2342, %v2912, %v2908
    %v2914 = vlaneseq
    %v2915 = vshrl.u32 %v2914, 7
    %v2916 = vsub.s32 %v68, %v2915
    %v2917 = vrot.slane %v2787, %v2916
    %v2918 = vlaneseq
    %v2919 = vshrl.u32 %v2918, 7
    %v2920 = vsub.s32 %v2337, %v2919
    %v2921 = vrot.slane %v2790, %v2920
    %v2922 = vsel %vm2342, %v2921, %v2917
    %v2923 = vlaneseq
    %v2924 = vshrl.u32 %v2923, 7
    %v2925 = vsub.s32 %v68, %v2924
    %v2926 = vrot.slane %v2793, %v2925
    %v2927 = vlaneseq
    %v2928 = vshrl.u32 %v2927, 7
    %v2929 = vsub.s32 %v2337, %v2928
    %v2930 = vrot.slane %v2796, %v2929
    %v2931 = vsel %vm2342, %v2930, %v2926
    %v2932 = vlaneseq
    %v2933 = vshrl.u32 %v2932, 7
    %v2934 = vsub.s32 %v68, %v2933
    %v2935 = vrot.slane %v2799, %v2934
    %v2936 = vlaneseq
    %v2937 = vshrl.u32 %v2936, 7
    %v2938 = vsub.s32 %v2337, %v2937
    %v2939 = vrot.slane %v2802, %v2938
    %v2940 = vsel %vm2342, %v2939, %v2935
    %v2941 = vlaneseq
    %v2942 = vshrl.u32 %v2941, 7
    %v2943 = vsub.s32 %v68, %v2942
    %v2944 = vrot.slane %v2805, %v2943
    %v2945 = vlaneseq
    %v2946 = vshrl.u32 %v2945, 7
    %v2947 = vsub.s32 %v2337, %v2946
    %v2948 = vrot.slane %v2808, %v2947
    %v2949 = vsel %vm2342, %v2948, %v2944
    %v2950 = vlaneseq
    %v2951 = vshrl.u32 %v2950, 7
    %v2952 = vsub.s32 %v68, %v2951
    %v2953 = vrot.slane %v2811, %v2952
    %v2954 = vlaneseq
    %v2955 = vshrl.u32 %v2954, 7
    %v2956 = vsub.s32 %v2337, %v2955
    %v2957 = vrot.slane %v2814, %v2956
    %v2958 = vsel %vm2342, %v2957, %v2953
    %v2959 = vsel %vm2479, %v2832, %v2823
    %v2960 = vsel %vm2481, %v2841, %v2959
    %v2961 = vsel %vm2483, %v2850, %v2960
    %v2962 = vsel %vm2485, %v2859, %v2961
    %v2963 = vsel %vm2487, %v2868, %v2962
    %v2964 = vsel %vm2489, %v2877, %v2963
    %v2965 = vsel %vm2491, %v2886, %v2964
    %v2966 = vsel %vm2479, %v2904, %v2895
    %v2967 = vsel %vm2481, %v2913, %v2966
    %v2968 = vsel %vm2483, %v2922, %v2967
    %v2969 = vsel %vm2485, %v2931, %v2968
    %v2970 = vsel %vm2487, %v2940, %v2969
    %v2971 = vsel %vm2489, %v2949, %v2970
    %v2972 = vsel %vm2491, %v2958, %v2971
    %v2975 = vsel %vm2502, %v2965, 0.0
    %2976 = vadd.xlane.f32.xlu0 %v2975
    %v2977 = vpop.xlane.xlu0 %2976
    %v2978 = vsel %vm2502, %v2972, 0.0
    %2979 = vadd.xlane.f32.xlu0 %v2978
    %v2980 = vpop.xlane.xlu0 %2979
    %v2983 = vlaneseq
    %v2984 = vshrl.u32 %v2983, 7
    %v2985 = vsub.s32 0, %v2984
    %v2986 = vrot.slane %v2977, %v2985
    %v2987 = vlaneseq
    %v2988 = vshrl.u32 %v2987, 7
    %v2989 = vsub.s32 1, %v2988
    %v2990 = vrot.slane %v2977, %v2989
    %v2991 = vlaneseq
    %v2992 = vshrl.u32 %v2991, 7
    %v2993 = vsub.s32 2, %v2992
    %v2994 = vrot.slane %v2977, %v2993
    %v2995 = vlaneseq
    %v2996 = vshrl.u32 %v2995, 7
    %v2997 = vsub.s32 3, %v2996
    %v2998 = vrot.slane %v2977, %v2997
    %v2999 = vlaneseq
    %v3000 = vshrl.u32 %v2999, 7
    %v3001 = vsub.s32 4, %v3000
    %v3002 = vrot.slane %v2977, %v3001
    %v3003 = vlaneseq
    %v3004 = vshrl.u32 %v3003, 7
    %v3005 = vsub.s32 5, %v3004
    %v3006 = vrot.slane %v2977, %v3005
    %v3007 = vlaneseq
    %v3008 = vshrl.u32 %v3007, 7
    %v3009 = vsub.s32 6, %v3008
    %v3010 = vrot.slane %v2977, %v3009
    %v3011 = vlaneseq
    %v3012 = vshrl.u32 %v3011, 7
    %v3013 = vsub.s32 7, %v3012
    %v3014 = vrot.slane %v2977, %v3013
    %v3015 = vlaneseq
    %v3016 = vshrl.u32 %v3015, 7
    %v3017 = vsub.s32 0, %v3016
    %v3018 = vrot.slane %v2980, %v3017
    %v3019 = vlaneseq
    %v3020 = vshrl.u32 %v3019, 7
    %v3021 = vsub.s32 1, %v3020
    %v3022 = vrot.slane %v2980, %v3021
    %v3023 = vlaneseq
    %v3024 = vshrl.u32 %v3023, 7
    %v3025 = vsub.s32 2, %v3024
    %v3026 = vrot.slane %v2980, %v3025
    %v3027 = vlaneseq
    %v3028 = vshrl.u32 %v3027, 7
    %v3029 = vsub.s32 3, %v3028
    %v3030 = vrot.slane %v2980, %v3029
    %v3031 = vlaneseq
    %v3032 = vshrl.u32 %v3031, 7
    %v3033 = vsub.s32 4, %v3032
    %v3034 = vrot.slane %v2980, %v3033
    %v3035 = vlaneseq
    %v3036 = vshrl.u32 %v3035, 7
    %v3037 = vsub.s32 5, %v3036
    %v3038 = vrot.slane %v2980, %v3037
    %v3039 = vlaneseq
    %v3040 = vshrl.u32 %v3039, 7
    %v3041 = vsub.s32 6, %v3040
    %v3042 = vrot.slane %v2980, %v3041
    %v3043 = vlaneseq
    %v3044 = vshrl.u32 %v3043, 7
    %v3045 = vsub.s32 7, %v3044
    %v3046 = vrot.slane %v2980, %v3045
    %v3063 = vrcp.pop %v2986
    %v3064 = vmul.f32 %v2624, %v3063
    %v3065 = vmul.f32 %v2626, %v3063
    %v3066 = vrcp.pop %v2990
    %v3067 = vmul.f32 %v2628, %v3066
    %v3068 = vmul.f32 %v2630, %v3066
    %v3069 = vrcp.pop %v2994
    %v3070 = vmul.f32 %v2632, %v3069
    %v3071 = vmul.f32 %v2634, %v3069
    %v3072 = vrcp.pop %v2998
    %v3073 = vmul.f32 %v2636, %v3072
    %v3074 = vmul.f32 %v2638, %v3072
    %v3075 = vrcp.pop %v3002
    %v3076 = vmul.f32 %v2640, %v3075
    %v3077 = vmul.f32 %v2642, %v3075
    %v3078 = vrcp.pop %v3006
    %v3079 = vmul.f32 %v2644, %v3078
    %v3080 = vmul.f32 %v2646, %v3078
    %v3081 = vrcp.pop %v3010
    %v3082 = vmul.f32 %v2648, %v3081
    %v3083 = vmul.f32 %v2650, %v3081
    %v3084 = vrcp.pop %v3014
    %v3085 = vmul.f32 %v2652, %v3084
    %v3086 = vmul.f32 %v2654, %v3084
    %v3087 = vrcp.pop %v3018
    %v3088 = vmul.f32 %v2656, %v3087
    %v3089 = vmul.f32 %v2658, %v3087
    %v3090 = vrcp.pop %v3022
    %v3091 = vmul.f32 %v2660, %v3090
    %v3092 = vmul.f32 %v2662, %v3090
    %v3093 = vrcp.pop %v3026
    %v3094 = vmul.f32 %v2664, %v3093
    %v3095 = vmul.f32 %v2666, %v3093
    %v3096 = vrcp.pop %v3030
    %v3097 = vmul.f32 %v2668, %v3096
    %v3098 = vmul.f32 %v2670, %v3096
    %v3099 = vrcp.pop %v3034
    %v3100 = vmul.f32 %v2672, %v3099
    %v3101 = vmul.f32 %v2674, %v3099
    %v3102 = vrcp.pop %v3038
    %v3103 = vmul.f32 %v2676, %v3102
    %v3104 = vmul.f32 %v2678, %v3102
    %v3105 = vrcp.pop %v3042
    %v3106 = vmul.f32 %v2680, %v3105
    %v3107 = vmul.f32 %v2682, %v3105
    %v3108 = vrcp.pop %v3046
    %v3109 = vmul.f32 %v2684, %v3108
    %v3110 = vmul.f32 %v2686, %v3108
    %3112 = vset.pattern.permute.xlu0 0
    %3113 = vperm.xlu0 %3112, %v3064
    %v3114 = vpop.permute.xlu0 %3113
    %3117 = vset.pattern.permute.xlu0 0
    %3118 = vperm.xlu0 %3117, %v3065
    %v3119 = vpop.permute.xlu0 %3118
    %3122 = vset.pattern.permute.xlu0 0
    %3123 = vperm.xlu0 %3122, %v3067
    %v3124 = vpop.permute.xlu0 %3123
    %3127 = vset.pattern.permute.xlu0 0
    %3128 = vperm.xlu0 %3127, %v3068
    %v3129 = vpop.permute.xlu0 %3128
    %3132 = vset.pattern.permute.xlu0 0
    %3133 = vperm.xlu0 %3132, %v3070
    %v3134 = vpop.permute.xlu0 %3133
    %3137 = vset.pattern.permute.xlu0 0
    %3138 = vperm.xlu0 %3137, %v3071
    %v3139 = vpop.permute.xlu0 %3138
    %3142 = vset.pattern.permute.xlu0 0
    %3143 = vperm.xlu0 %3142, %v3073
    %v3144 = vpop.permute.xlu0 %3143
    %3147 = vset.pattern.permute.xlu0 0
    %3148 = vperm.xlu0 %3147, %v3074
    %v3149 = vpop.permute.xlu0 %3148
    %3152 = vset.pattern.permute.xlu0 0
    %3153 = vperm.xlu0 %3152, %v3076
    %v3154 = vpop.permute.xlu0 %3153
    %3157 = vset.pattern.permute.xlu0 0
    %3158 = vperm.xlu0 %3157, %v3077
    %v3159 = vpop.permute.xlu0 %3158
    %3162 = vset.pattern.permute.xlu0 0
    %3163 = vperm.xlu0 %3162, %v3079
    %v3164 = vpop.permute.xlu0 %3163
    %3167 = vset.pattern.permute.xlu0 0
    %3168 = vperm.xlu0 %3167, %v3080
    %v3169 = vpop.permute.xlu0 %3168
    %3172 = vset.pattern.permute.xlu0 0
    %3173 = vperm.xlu0 %3172, %v3082
    %v3174 = vpop.permute.xlu0 %3173
    %3177 = vset.pattern.permute.xlu0 0
    %3178 = vperm.xlu0 %3177, %v3083
    %v3179 = vpop.permute.xlu0 %3178
    %3182 = vset.pattern.permute.xlu0 0
    %3183 = vperm.xlu0 %3182, %v3085
    %v3184 = vpop.permute.xlu0 %3183
    %3187 = vset.pattern.permute.xlu0 0
    %3188 = vperm.xlu0 %3187, %v3086
    %v3189 = vpop.permute.xlu0 %3188
    %3192 = vset.pattern.permute.xlu0 0
    %3193 = vperm.xlu0 %3192, %v3088
    %v3194 = vpop.permute.xlu0 %3193
    %3197 = vset.pattern.permute.xlu0 0
    %3198 = vperm.xlu0 %3197, %v3089
    %v3199 = vpop.permute.xlu0 %3198
    %3202 = vset.pattern.permute.xlu0 0
    %3203 = vperm.xlu0 %3202, %v3091
    %v3204 = vpop.permute.xlu0 %3203
    %3207 = vset.pattern.permute.xlu0 0
    %3208 = vperm.xlu0 %3207, %v3092
    %v3209 = vpop.permute.xlu0 %3208
    %3212 = vset.pattern.permute.xlu0 0
    %3213 = vperm.xlu0 %3212, %v3094
    %v3214 = vpop.permute.xlu0 %3213
    %3217 = vset.pattern.permute.xlu0 0
    %3218 = vperm.xlu0 %3217, %v3095
    %v3219 = vpop.permute.xlu0 %3218
    %3222 = vset.pattern.permute.xlu0 0
    %3223 = vperm.xlu0 %3222, %v3097
    %v3224 = vpop.permute.xlu0 %3223
    %3227 = vset.pattern.permute.xlu0 0
    %3228 = vperm.xlu0 %3227, %v3098
    %v3229 = vpop.permute.xlu0 %3228
    %3232 = vset.pattern.permute.xlu0 0
    %3233 = vperm.xlu0 %3232, %v3100
    %v3234 = vpop.permute.xlu0 %3233
    %3237 = vset.pattern.permute.xlu0 0
    %3238 = vperm.xlu0 %3237, %v3101
    %v3239 = vpop.permute.xlu0 %3238
    %3242 = vset.pattern.permute.xlu0 0
    %3243 = vperm.xlu0 %3242, %v3103
    %v3244 = vpop.permute.xlu0 %3243
    %3247 = vset.pattern.permute.xlu0 0
    %3248 = vperm.xlu0 %3247, %v3104
    %v3249 = vpop.permute.xlu0 %3248
    %3252 = vset.pattern.permute.xlu0 0
    %3253 = vperm.xlu0 %3252, %v3106
    %v3254 = vpop.permute.xlu0 %3253
    %3257 = vset.pattern.permute.xlu0 0
    %3258 = vperm.xlu0 %3257, %v3107
    %v3259 = vpop.permute.xlu0 %3258
    %3262 = vset.pattern.permute.xlu0 0
    %3263 = vperm.xlu0 %3262, %v3109
    %v3264 = vpop.permute.xlu0 %3263
    %3267 = vset.pattern.permute.xlu0 0
    %3268 = vperm.xlu0 %3267, %v3110
    %v3269 = vpop.permute.xlu0 %3268
    %v3271 = vmul.f32 %v3114, %v1433
    %v3272 = vmul.f32 %v3119, %v1434
    %v3273 = vmul.f32 %v3124, %v1435
    %v3274 = vmul.f32 %v3129, %v1436
    %v3275 = vmul.f32 %v3134, %v1437
    %v3276 = vmul.f32 %v3139, %v1438
    %v3277 = vmul.f32 %v3144, %v1439
    %v3278 = vmul.f32 %v3149, %v1440
    %v3279 = vmul.f32 %v3154, %v1441
    %v3280 = vmul.f32 %v3159, %v1442
    %v3281 = vmul.f32 %v3164, %v1443
    %v3282 = vmul.f32 %v3169, %v1444
    %v3283 = vmul.f32 %v3174, %v1445
    %v3284 = vmul.f32 %v3179, %v1446
    %v3285 = vmul.f32 %v3184, %v1447
    %v3286 = vmul.f32 %v3189, %v1448
    %v3287 = vmul.f32 %v3194, %v1449
    %v3288 = vmul.f32 %v3199, %v1450
    %v3289 = vmul.f32 %v3204, %v1451
    %v3290 = vmul.f32 %v3209, %v1452
    %v3291 = vmul.f32 %v3214, %v1453
    %v3292 = vmul.f32 %v3219, %v1454
    %v3293 = vmul.f32 %v3224, %v1455
    %v3294 = vmul.f32 %v3229, %v1456
    %v3295 = vmul.f32 %v3234, %v1457
    %v3296 = vmul.f32 %v3239, %v1458
    %v3297 = vmul.f32 %v3244, %v1459
    %v3298 = vmul.f32 %v3249, %v1460
    %v3299 = vmul.f32 %v3254, %v1461
    %v3300 = vmul.f32 %v3259, %v1462
    %v3301 = vmul.f32 %v3264, %v1463
    %v3302 = vmul.f32 %v3269, %v1464
    %v3303 = vsel %vm174, %v3271, 0.0
    %v3304 = vsel %vm174, %v3272, 0.0
    %v3305 = vadd.f32 %v3303, %v3304
    %v3306 = vrot.slane %v3305, 4
    %v3307 = vadd.f32 %v3305, %v3306
    %v3308 = vrot.slane %v3307, 2
    %v3309 = vadd.f32 %v3307, %v3308
    %v3310 = vrot.slane %v3309, 1
    %v3311 = vadd.f32 %v3309, %v3310
    %v3312 = vsel %vm174, %v3273, 0.0
    %v3313 = vsel %vm174, %v3274, 0.0
    %v3314 = vadd.f32 %v3312, %v3313
    %v3315 = vrot.slane %v3314, 4
    %v3316 = vadd.f32 %v3314, %v3315
    %v3317 = vrot.slane %v3316, 2
    %v3318 = vadd.f32 %v3316, %v3317
    %v3319 = vrot.slane %v3318, 1
    %v3320 = vadd.f32 %v3318, %v3319
    %v3321 = vsel %vm174, %v3275, 0.0
    %v3322 = vsel %vm174, %v3276, 0.0
    %v3323 = vadd.f32 %v3321, %v3322
    %v3324 = vrot.slane %v3323, 4
    %v3325 = vadd.f32 %v3323, %v3324
    %v3326 = vrot.slane %v3325, 2
    %v3327 = vadd.f32 %v3325, %v3326
    %v3328 = vrot.slane %v3327, 1
    %v3329 = vadd.f32 %v3327, %v3328
    %v3330 = vsel %vm174, %v3277, 0.0
    %v3331 = vsel %vm174, %v3278, 0.0
    %v3332 = vadd.f32 %v3330, %v3331
    %v3333 = vrot.slane %v3332, 4
    %v3334 = vadd.f32 %v3332, %v3333
    %v3335 = vrot.slane %v3334, 2
    %v3336 = vadd.f32 %v3334, %v3335
    %v3337 = vrot.slane %v3336, 1
    %v3338 = vadd.f32 %v3336, %v3337
    %v3339 = vsel %vm174, %v3279, 0.0
    %v3340 = vsel %vm174, %v3280, 0.0
    %v3341 = vadd.f32 %v3339, %v3340
    %v3342 = vrot.slane %v3341, 4
    %v3343 = vadd.f32 %v3341, %v3342
    %v3344 = vrot.slane %v3343, 2
    %v3345 = vadd.f32 %v3343, %v3344
    %v3346 = vrot.slane %v3345, 1
    %v3347 = vadd.f32 %v3345, %v3346
    %v3348 = vsel %vm174, %v3281, 0.0
    %v3349 = vsel %vm174, %v3282, 0.0
    %v3350 = vadd.f32 %v3348, %v3349
    %v3351 = vrot.slane %v3350, 4
    %v3352 = vadd.f32 %v3350, %v3351
    %v3353 = vrot.slane %v3352, 2
    %v3354 = vadd.f32 %v3352, %v3353
    %v3355 = vrot.slane %v3354, 1
    %v3356 = vadd.f32 %v3354, %v3355
    %v3357 = vsel %vm174, %v3283, 0.0
    %v3358 = vsel %vm174, %v3284, 0.0
    %v3359 = vadd.f32 %v3357, %v3358
    %v3360 = vrot.slane %v3359, 4
    %v3361 = vadd.f32 %v3359, %v3360
    %v3362 = vrot.slane %v3361, 2
    %v3363 = vadd.f32 %v3361, %v3362
    %v3364 = vrot.slane %v3363, 1
    %v3365 = vadd.f32 %v3363, %v3364
    %v3366 = vsel %vm174, %v3285, 0.0
    %v3367 = vsel %vm174, %v3286, 0.0
    %v3368 = vadd.f32 %v3366, %v3367
    %v3369 = vrot.slane %v3368, 4
    %v3370 = vadd.f32 %v3368, %v3369
    %v3371 = vrot.slane %v3370, 2
    %v3372 = vadd.f32 %v3370, %v3371
    %v3373 = vrot.slane %v3372, 1
    %v3374 = vadd.f32 %v3372, %v3373
    %v3375 = vsel %vm174, %v3287, 0.0
    %v3376 = vsel %vm174, %v3288, 0.0
    %v3377 = vadd.f32 %v3375, %v3376
    %v3378 = vrot.slane %v3377, 4
    %v3379 = vadd.f32 %v3377, %v3378
    %v3380 = vrot.slane %v3379, 2
    %v3381 = vadd.f32 %v3379, %v3380
    %v3382 = vrot.slane %v3381, 1
    %v3383 = vadd.f32 %v3381, %v3382
    %v3384 = vsel %vm174, %v3289, 0.0
    %v3385 = vsel %vm174, %v3290, 0.0
    %v3386 = vadd.f32 %v3384, %v3385
    %v3387 = vrot.slane %v3386, 4
    %v3388 = vadd.f32 %v3386, %v3387
    %v3389 = vrot.slane %v3388, 2
    %v3390 = vadd.f32 %v3388, %v3389
    %v3391 = vrot.slane %v3390, 1
    %v3392 = vadd.f32 %v3390, %v3391
    %v3393 = vsel %vm174, %v3291, 0.0
    %v3394 = vsel %vm174, %v3292, 0.0
    %v3395 = vadd.f32 %v3393, %v3394
    %v3396 = vrot.slane %v3395, 4
    %v3397 = vadd.f32 %v3395, %v3396
    %v3398 = vrot.slane %v3397, 2
    %v3399 = vadd.f32 %v3397, %v3398
    %v3400 = vrot.slane %v3399, 1
    %v3401 = vadd.f32 %v3399, %v3400
    %v3402 = vsel %vm174, %v3293, 0.0
    %v3403 = vsel %vm174, %v3294, 0.0
    %v3404 = vadd.f32 %v3402, %v3403
    %v3405 = vrot.slane %v3404, 4
    %v3406 = vadd.f32 %v3404, %v3405
    %v3407 = vrot.slane %v3406, 2
    %v3408 = vadd.f32 %v3406, %v3407
    %v3409 = vrot.slane %v3408, 1
    %v3410 = vadd.f32 %v3408, %v3409
    %v3411 = vsel %vm174, %v3295, 0.0
    %v3412 = vsel %vm174, %v3296, 0.0
    %v3413 = vadd.f32 %v3411, %v3412
    %v3414 = vrot.slane %v3413, 4
    %v3415 = vadd.f32 %v3413, %v3414
    %v3416 = vrot.slane %v3415, 2
    %v3417 = vadd.f32 %v3415, %v3416
    %v3418 = vrot.slane %v3417, 1
    %v3419 = vadd.f32 %v3417, %v3418
    %v3420 = vsel %vm174, %v3297, 0.0
    %v3421 = vsel %vm174, %v3298, 0.0
    %v3422 = vadd.f32 %v3420, %v3421
    %v3423 = vrot.slane %v3422, 4
    %v3424 = vadd.f32 %v3422, %v3423
    %v3425 = vrot.slane %v3424, 2
    %v3426 = vadd.f32 %v3424, %v3425
    %v3427 = vrot.slane %v3426, 1
    %v3428 = vadd.f32 %v3426, %v3427
    %v3429 = vsel %vm174, %v3299, 0.0
    %v3430 = vsel %vm174, %v3300, 0.0
    %v3431 = vadd.f32 %v3429, %v3430
    %v3432 = vrot.slane %v3431, 4
    %v3433 = vadd.f32 %v3431, %v3432
    %v3434 = vrot.slane %v3433, 2
    %v3435 = vadd.f32 %v3433, %v3434
    %v3436 = vrot.slane %v3435, 1
    %v3437 = vadd.f32 %v3435, %v3436
    %v3438 = vsel %vm174, %v3301, 0.0
    %v3439 = vsel %vm174, %v3302, 0.0
    %v3440 = vadd.f32 %v3438, %v3439
    %v3441 = vrot.slane %v3440, 4
    %v3442 = vadd.f32 %v3440, %v3441
    %v3443 = vrot.slane %v3442, 2
    %v3444 = vadd.f32 %v3442, %v3443
    %v3445 = vrot.slane %v3444, 1
    %v3446 = vadd.f32 %v3444, %v3445
    %v3447 = vld [vmem:[#allocation5 + $0x80] sm:$0xff]
    %v3448 = vld [vmem:[#allocation5 + $0x88] sm:$0xff]
    %v3449 = vld [vmem:[#allocation5 + $0x90] sm:$0xff]
    %v3450 = vld [vmem:[#allocation5 + $0x98] sm:$0xff]
    %v3451 = vld [vmem:[%s4 + $0x4] sm:$0x1]
    %v3452 = vlaneseq
    %v3453 = vshrl.u32 %v3452, 7
    %v3454 = vsub.s32 0, %v3453
    %v3455 = vrot.slane %v3451, %v3454
    %v3472 = vsel %vm2479, %v3320, %v3311
    %v3473 = vsel %vm2481, %v3329, %v3472
    %v3474 = vsel %vm2483, %v3338, %v3473
    %v3475 = vsel %vm2485, %v3347, %v3474
    %v3476 = vsel %vm2487, %v3356, %v3475
    %v3477 = vsel %vm2489, %v3365, %v3476
    %v3478 = vsel %vm2491, %v3374, %v3477
    %v3479 = vsel %vm2479, %v3392, %v3383
    %v3480 = vsel %vm2481, %v3401, %v3479
    %v3481 = vsel %vm2483, %v3410, %v3480
    %v3482 = vsel %vm2485, %v3419, %v3481
    %v3483 = vsel %vm2487, %v3428, %v3482
    %v3484 = vsel %vm2489, %v3437, %v3483
    %v3485 = vsel %vm2491, %v3446, %v3484
    %v3486 = vsel %vm174, %v3478, 0
    %v3488 = vsel %vm174, %v3485, 0
    %3490 = vmatprep.subr.mxu0 0.0
    %3491 = vmatpush1.msra.mxu0 0.0
    %3492 = vmatprep.subr.mxu0 0.0
    %3493 = vmatpush1.msra.mxu0 0.0
    %3494 = vmatprep.subr.mxu0 0.0
    %3495 = vmatpush1.msra.mxu0 0.0
    %3496 = vmatprep.subr.mxu0 0.0
    %3497 = vmatpush1.msra.mxu0 0.0
    %3498 = vmatprep.subr.mxu0 0.0
    %3499 = vmatpush1.msra.mxu0 0.0
    %3500 = vmatprep.subr.mxu0 0.0
    %3501 = vmatpush1.msra.mxu0 0.0
    %3502 = vmatprep.subr.mxu0 0.0
    %3503 = vmatpush1.msra.mxu0 0.0
    %3504 = vmatprep.subr.mxu0 0.0
    %3505 = vmatpush1.msra.mxu0 0.0
    %3506 = vmatprep.subr.mxu0 0.0
    %3507 = vmatpush1.msra.mxu0 0.0
    %3508 = vmatprep.subr.mxu0 0.0
    %3509 = vmatpush1.msra.mxu0 0.0
    %3510 = vmatprep.subr.mxu0 0.0
    %3511 = vmatpush1.msra.mxu0 0.0
    %3512 = vmatprep.subr.mxu0 0.0
    %3513 = vmatpush1.msra.mxu0 0.0
    %3514 = vmatprep.subr.mxu0 0.0
    %3515 = vmatpush1.msra.mxu0 %v3450
    %3516 = vmatprep.subr.mxu0 0.0
    %3517 = vmatpush1.msra.mxu0 %v3449
    %3518 = vmatprep.subr.mxu0 0.0
    %3519 = vmatpush1.msra.mxu0 %v3448
    %3520 = vmatprep.subr.mxu0 0.0
    %3521 = vmatpush1.msra.mxu0 %v3447
    %3522 = vmatprep.subr.mxu0 0.0
    %3523 = vmatpush2.msra.mxu0 0.0
    %3524 = vmatprep.subr.mxu0 0.0
    %3525 = vmatpush2.msra.mxu0 0.0
    %3526 = vmatprep.subr.mxu0 0.0
    %3527 = vmatpush2.msra.mxu0 0.0
    %3528 = vmatprep.subr.mxu0 0.0
    %3529 = vmatpush2.msra.mxu0 0.0
    %3530 = vmatprep.subr.mxu0 0.0
    %3531 = vmatpush2.msra.mxu0 0.0
    %3532 = vmatprep.subr.mxu0 0.0
    %3533 = vmatpush2.msra.mxu0 0.0
    %3534 = vmatprep.subr.mxu0 0.0
    %3535 = vmatpush2.msra.mxu0 0.0
    %3536 = vmatprep.subr.mxu0 0.0
    %3537 = vmatpush2.msra.mxu0 0.0
    %3538 = vmatprep.subr.mxu0 0.0
    %3539 = vmatpush2.msra.mxu0 0.0
    %3540 = vmatprep.subr.mxu0 0.0
    %3541 = vmatpush2.msra.mxu0 0.0
    %3542 = vmatprep.subr.mxu0 0.0
    %3543 = vmatpush2.msra.mxu0 0.0
    %3544 = vmatprep.subr.mxu0 0.0
    %3545 = vmatpush2.msra.mxu0 0.0
    %3546 = vmatprep.subr.mxu0 0.0
    %3547 = vmatpush2.msra.mxu0 0.0
    %3548 = vmatprep.subr.mxu0 0.0
    %3549 = vmatpush2.msra.mxu0 0.0
    %3550 = vmatprep.subr.mxu0 0.0
    %3551 = vmatpush2.msra.mxu0 0.0
    %3552 = vmatprep.subr.mxu0 0.0
    %3553 = vmatpush2.msra.mxu0 0.0
    %3554 = vmatprep.mubr.f32.mxu0 0.0
    %3555 = vmatmul.mubr.f32.gmra.mxu0 %v3486
    %v3556 = vpop.f32.mrf.mxu0
    %v3557 = vadd.f32 %v3455, %v3556
    %v3558 = vpop.f32.mrf.mxu0
    %3559 = vmatprep.mubr.f32.mxu0 0.0
    %3560 = vmatmul.mubr.f32.gmra.mxu0 %v3488
    %v3561 = vpop.f32.mrf.mxu0
    %v3562 = vadd.f32 %v3455, %v3561
    %v3563 = vpop.f32.mrf.mxu0
    %3564 = vdwg.mxu0
    %v3565 = vmax.f32 %v3557, 0.0
    %v3566 = vmax.f32 %v3562, 0.0
    %3567 = vrot.lane.b32.xlu0 %v1917, 96
    %v3568 = vpop.permute.xlu0 %3567
    %3569 = vrot.lane.b32.xlu0 %v1918, 96
    %v3570 = vpop.permute.xlu0 %3569
    %v3573 = vmul.f32 %v3565, %v3568
    %v3574 = vmul.f32 %v3566, %v3570
    %v3575 = vld [vmem:[#allocation5 + $0xa0] sm:$0xff]
    %v3576 = vld [vmem:[#allocation5 + $0xa8] sm:$0xff]
    %v3577 = vld [vmem:[#allocation5 + $0xb0] sm:$0xff]
    %v3578 = vld [vmem:[#allocation5 + $0xb8] sm:$0xff]
    %v3579 = vld [vmem:[%s4 + $0x5] sm:$0x1]
    %v3580 = vlaneseq
    %v3581 = vshrl.u32 %v3580, 7
    %v3582 = vsub.s32 0, %v3581
    %v3583 = vrot.slane %v3579, %v3582
    %v3585 = vsel %vm174, %v3573, 0
    %v3588 = vsel %vm174, %v3574, 0
    %3590 = vmatprep.subr.mxu0 0.0
    %3591 = vmatpush1.msra.mxu0 0.0
    %3592 = vmatprep.subr.mxu0 0.0
    %3593 = vmatpush1.msra.mxu0 0.0
    %3594 = vmatprep.subr.mxu0 0.0
    %3595 = vmatpush1.msra.mxu0 0.0
    %3596 = vmatprep.subr.mxu0 0.0
    %3597 = vmatpush1.msra.mxu0 0.0
    %3598 = vmatprep.subr.mxu0 0.0
    %3599 = vmatpush1.msra.mxu0 0.0
    %3600 = vmatprep.subr.mxu0 0.0
    %3601 = vmatpush1.msra.mxu0 0.0
    %3602 = vmatprep.subr.mxu0 0.0
    %3603 = vmatpush1.msra.mxu0 0.0
    %3604 = vmatprep.subr.mxu0 0.0
    %3605 = vmatpush1.msra.mxu0 0.0
    %3606 = vmatprep.subr.mxu0 0.0
    %3607 = vmatpush1.msra.mxu0 0.0
    %3608 = vmatprep.subr.mxu0 0.0
    %3609 = vmatpush1.msra.mxu0 0.0
    %3610 = vmatprep.subr.mxu0 0.0
    %3611 = vmatpush1.msra.mxu0 0.0
    %3612 = vmatprep.subr.mxu0 0.0
    %3613 = vmatpush1.msra.mxu0 0.0
    %3614 = vmatprep.subr.mxu0 0.0
    %3615 = vmatpush1.msra.mxu0 %v3578
    %3616 = vmatprep.subr.mxu0 0.0
    %3617 = vmatpush1.msra.mxu0 %v3577
    %3618 = vmatprep.subr.mxu0 0.0
    %3619 = vmatpush1.msra.mxu0 %v3576
    %3620 = vmatprep.subr.mxu0 0.0
    %3621 = vmatpush1.msra.mxu0 %v3575
    %3622 = vmatprep.subr.mxu0 0.0
    %3623 = vmatpush2.msra.mxu0 0.0
    %3624 = vmatprep.subr.mxu0 0.0
    %3625 = vmatpush2.msra.mxu0 0.0
    %3626 = vmatprep.subr.mxu0 0.0
    %3627 = vmatpush2.msra.mxu0 0.0
    %3628 = vmatprep.subr.mxu0 0.0
    %3629 = vmatpush2.msra.mxu0 0.0
    %3630 = vmatprep.subr.mxu0 0.0
    %3631 = vmatpush2.msra.mxu0 0.0
    %3632 = vmatprep.subr.mxu0 0.0
    %3633 = vmatpush2.msra.mxu0 0.0
    %3634 = vmatprep.subr.mxu0 0.0
    %3635 = vmatpush2.msra.mxu0 0.0
    %3636 = vmatprep.subr.mxu0 0.0
    %3637 = vmatpush2.msra.mxu0 0.0
    %3638 = vmatprep.subr.mxu0 0.0
    %3639 = vmatpush2.msra.mxu0 0.0
    %3640 = vmatprep.subr.mxu0 0.0
    %3641 = vmatpush2.msra.mxu0 0.0
    %3642 = vmatprep.subr.mxu0 0.0
    %3643 = vmatpush2.msra.mxu0 0.0
    %3644 = vmatprep.subr.mxu0 0.0
    %3645 = vmatpush2.msra.mxu0 0.0
    %3646 = vmatprep.subr.mxu0 0.0
    %3647 = vmatpush2.msra.mxu0 0.0
    %3648 = vmatprep.subr.mxu0 0.0
    %3649 = vmatpush2.msra.mxu0 0.0
    %3650 = vmatprep.subr.mxu0 0.0
    %3651 = vmatpush2.msra.mxu0 0.0
    %3652 = vmatprep.subr.mxu0 0.0
    %3653 = vmatpush2.msra.mxu0 0.0
    %3654 = vmatprep.mubr.f32.mxu0 0.0
    %3655 = vmatmul.mubr.f32.gmra.mxu0 %v3585
    %v3656 = vpop.f32.mrf.mxu0
    %v3657 = vadd.f32 %v3583, %v3656
    %v3658 = vpop.f32.mrf.mxu0
    %3659 = vmatprep.mubr.f32.mxu0 0.0
    %3660 = vmatmul.mubr.f32.gmra.mxu0 %v3588
    %v3661 = vpop.f32.mrf.mxu0
    %v3662 = vadd.f32 %v3583, %v3661
    %v3663 = vpop.f32.mrf.mxu0
    %3664 = vdwg.mxu0
    %v3665 = vmax.f32 %v3657, 0.0
    %v3666 = vmax.f32 %v3662, 0.0
    %v3667 = vld [vmem:[#allocation5 + $0xc0] sm:$0xff]
    %v3668 = vld [vmem:[#allocation5 + $0xc8] sm:$0xff]
    %v3669 = vld [vmem:[#allocation5 + $0xd0] sm:$0xff]
    %v3670 = vld [vmem:[#allocation5 + $0xd8] sm:$0xff]
    %v3671 = vld [vmem:[#allocation5 + $0xe0] sm:$0xff]
    %v3672 = vld [vmem:[#allocation5 + $0xe8] sm:$0xff]
    %v3673 = vld [vmem:[#allocation5 + $0xf0] sm:$0xff]
    %v3674 = vld [vmem:[#allocation5 + $0xf8] sm:$0xff]
    %v3675 = vld [vmem:[%s4 + $0x6] sm:$0x1]
    %v3676 = vlaneseq
    %v3677 = vshrl.u32 %v3676, 7
    %v3678 = vsub.s32 0, %v3677
    %v3679 = vrot.slane %v3675, %v3678
    %vm3680 = vcmask 523264
    %v3682 = vsel %vm3680, %v3665, 0
    %v3685 = vsel %vm3680, %v3666, 0
    %3687 = vmatprep.subr.mxu0 0.0
    %3688 = vmatpush1.msra.mxu0 0.0
    %3689 = vmatprep.subr.mxu0 0.0
    %3690 = vmatpush1.msra.mxu0 0.0
    %3691 = vmatprep.subr.mxu0 0.0
    %3692 = vmatpush1.msra.mxu0 0.0
    %3693 = vmatprep.subr.mxu0 0.0
    %3694 = vmatpush1.msra.mxu0 0.0
    %3695 = vmatprep.subr.mxu0 0.0
    %3696 = vmatpush1.msra.mxu0 0.0
    %3697 = vmatprep.subr.mxu0 0.0
    %3698 = vmatpush1.msra.mxu0 0.0
    %3699 = vmatprep.subr.mxu0 0.0
    %3700 = vmatpush1.msra.mxu0 0.0
    %3701 = vmatprep.subr.mxu0 0.0
    %3702 = vmatpush1.msra.mxu0 0.0
    %3703 = vmatprep.subr.mxu0 0.0
    %3704 = vmatpush1.msra.mxu0 %v3674
    %3705 = vmatprep.subr.mxu0 0.0
    %3706 = vmatpush1.msra.mxu0 %v3673
    %3707 = vmatprep.subr.mxu0 0.0
    %3708 = vmatpush1.msra.mxu0 %v3672
    %3709 = vmatprep.subr.mxu0 0.0
    %3710 = vmatpush1.msra.mxu0 %v3671
    %3711 = vmatprep.subr.mxu0 0.0
    %3712 = vmatpush1.msra.mxu0 %v3670
    %3713 = vmatprep.subr.mxu0 0.0
    %3714 = vmatpush1.msra.mxu0 %v3669
    %3715 = vmatprep.subr.mxu0 0.0
    %3716 = vmatpush1.msra.mxu0 %v3668
    %3717 = vmatprep.subr.mxu0 0.0
    %3718 = vmatpush1.msra.mxu0 %v3667
    %3719 = vmatprep.subr.mxu0 0.0
    %3720 = vmatpush2.msra.mxu0 0.0
    %3721 = vmatprep.subr.mxu0 0.0
    %3722 = vmatpush2.msra.mxu0 0.0
    %3723 = vmatprep.subr.mxu0 0.0
    %3724 = vmatpush2.msra.mxu0 0.0
    %3725 = vmatprep.subr.mxu0 0.0
    %3726 = vmatpush2.msra.mxu0 0.0
    %3727 = vmatprep.subr.mxu0 0.0
    %3728 = vmatpush2.msra.mxu0 0.0
    %3729 = vmatprep.subr.mxu0 0.0
    %3730 = vmatpush2.msra.mxu0 0.0
    %3731 = vmatprep.subr.mxu0 0.0
    %3732 = vmatpush2.msra.mxu0 0.0
    %3733 = vmatprep.subr.mxu0 0.0
    %3734 = vmatpush2.msra.mxu0 0.0
    %3735 = vmatprep.subr.mxu0 0.0
    %3736 = vmatpush2.msra.mxu0 0.0
    %3737 = vmatprep.subr.mxu0 0.0
    %3738 = vmatpush2.msra.mxu0 0.0
    %3739 = vmatprep.subr.mxu0 0.0
    %3740 = vmatpush2.msra.mxu0 0.0
    %3741 = vmatprep.subr.mxu0 0.0
    %3742 = vmatpush2.msra.mxu0 0.0
    %3743 = vmatprep.subr.mxu0 0.0
    %3744 = vmatpush2.msra.mxu0 0.0
    %3745 = vmatprep.subr.mxu0 0.0
    %3746 = vmatpush2.msra.mxu0 0.0
    %3747 = vmatprep.subr.mxu0 0.0
    %3748 = vmatpush2.msra.mxu0 0.0
    %3749 = vmatprep.subr.mxu0 0.0
    %3750 = vmatpush2.msra.mxu0 0.0
    %3751 = vmatprep.mubr.f32.mxu0 0.0
    %3752 = vmatmul.mubr.f32.gmra.mxu0 %v3682
    %v3753 = vpop.f32.mrf.mxu0
    %v3754 = vadd.f32 %v3679, %v3753
    %v3755 = vpop.f32.mrf.mxu0
    %3756 = vmatprep.mubr.f32.mxu0 0.0
    %3757 = vmatmul.mubr.f32.gmra.mxu0 %v3685
    %v3758 = vpop.f32.mrf.mxu0
    %v3759 = vadd.f32 %v3679, %v3758
    %v3760 = vpop.f32.mrf.mxu0
    %3761 = vdwg.mxu0
    %v3762 = vadd.s32 %v68, 4294967280
    %v3763 = vlaneseq
    %v3764 = vshrl.u32 %v3763, 7
    %v3765 = vsub.s32 %v3762, %v3764
    %v3766 = vrot.slane %v3114, %v3765
    %v3767 = vadd.s32 %v68, 4294967272
    %v3768 = vlaneseq
    %v3769 = vshrl.u32 %v3768, 7
    %v3770 = vsub.s32 %v3767, %v3769
    %v3771 = vrot.slane %v3119, %v3770
    %vm3772 = vcmask 261312
    %v3773 = vsel %vm3772, %v3771, %v3766
    %v3774 = vlaneseq
    %v3775 = vshrl.u32 %v3774, 7
    %v3776 = vsub.s32 %v3762, %v3775
    %v3777 = vrot.slane %v3124, %v3776
    %v3778 = vlaneseq
    %v3779 = vshrl.u32 %v3778, 7
    %v3780 = vsub.s32 %v3767, %v3779
    %v3781 = vrot.slane %v3129, %v3780
    %v3782 = vsel %vm3772, %v3781, %v3777
    %v3783 = vlaneseq
    %v3784 = vshrl.u32 %v3783, 7
    %v3785 = vsub.s32 %v3762, %v3784
    %v3786 = vrot.slane %v3134, %v3785
    %v3787 = vlaneseq
    %v3788 = vshrl.u32 %v3787, 7
    %v3789 = vsub.s32 %v3767, %v3788
    %v3790 = vrot.slane %v3139, %v3789
    %v3791 = vsel %vm3772, %v3790, %v3786
    %v3792 = vlaneseq
    %v3793 = vshrl.u32 %v3792, 7
    %v3794 = vsub.s32 %v3762, %v3793
    %v3795 = vrot.slane %v3144, %v3794
    %v3796 = vlaneseq
    %v3797 = vshrl.u32 %v3796, 7
    %v3798 = vsub.s32 %v3767, %v3797
    %v3799 = vrot.slane %v3149, %v3798
    %v3800 = vsel %vm3772, %v3799, %v3795
    %v3801 = vlaneseq
    %v3802 = vshrl.u32 %v3801, 7
    %v3803 = vsub.s32 %v3762, %v3802
    %v3804 = vrot.slane %v3154, %v3803
    %v3805 = vlaneseq
    %v3806 = vshrl.u32 %v3805, 7
    %v3807 = vsub.s32 %v3767, %v3806
    %v3808 = vrot.slane %v3159, %v3807
    %v3809 = vsel %vm3772, %v3808, %v3804
    %v3810 = vlaneseq
    %v3811 = vshrl.u32 %v3810, 7
    %v3812 = vsub.s32 %v3762, %v3811
    %v3813 = vrot.slane %v3164, %v3812
    %v3814 = vlaneseq
    %v3815 = vshrl.u32 %v3814, 7
    %v3816 = vsub.s32 %v3767, %v3815
    %v3817 = vrot.slane %v3169, %v3816
    %v3818 = vsel %vm3772, %v3817, %v3813
    %v3819 = vlaneseq
    %v3820 = vshrl.u32 %v3819, 7
    %v3821 = vsub.s32 %v3762, %v3820
    %v3822 = vrot.slane %v3174, %v3821
    %v3823 = vlaneseq
    %v3824 = vshrl.u32 %v3823, 7
    %v3825 = vsub.s32 %v3767, %v3824
    %v3826 = vrot.slane %v3179, %v3825
    %v3827 = vsel %vm3772, %v3826, %v3822
    %v3828 = vlaneseq
    %v3829 = vshrl.u32 %v3828, 7
    %v3830 = vsub.s32 %v3762, %v3829
    %v3831 = vrot.slane %v3184, %v3830
    %v3832 = vlaneseq
    %v3833 = vshrl.u32 %v3832, 7
    %v3834 = vsub.s32 %v3767, %v3833
    %v3835 = vrot.slane %v3189, %v3834
    %v3836 = vsel %vm3772, %v3835, %v3831
    %v3837 = vlaneseq
    %v3838 = vshrl.u32 %v3837, 7
    %v3839 = vsub.s32 %v3762, %v3838
    %v3840 = vrot.slane %v3194, %v3839
    %v3841 = vlaneseq
    %v3842 = vshrl.u32 %v3841, 7
    %v3843 = vsub.s32 %v3767, %v3842
    %v3844 = vrot.slane %v3199, %v3843
    %v3845 = vsel %vm3772, %v3844, %v3840
    %v3846 = vlaneseq
    %v3847 = vshrl.u32 %v3846, 7
    %v3848 = vsub.s32 %v3762, %v3847
    %v3849 = vrot.slane %v3204, %v3848
    %v3850 = vlaneseq
    %v3851 = vshrl.u32 %v3850, 7
    %v3852 = vsub.s32 %v3767, %v3851
    %v3853 = vrot.slane %v3209, %v3852
    %v3854 = vsel %vm3772, %v3853, %v3849
    %v3855 = vlaneseq
    %v3856 = vshrl.u32 %v3855, 7
    %v3857 = vsub.s32 %v3762, %v3856
    %v3858 = vrot.slane %v3214, %v3857
    %v3859 = vlaneseq
    %v3860 = vshrl.u32 %v3859, 7
    %v3861 = vsub.s32 %v3767, %v3860
    %v3862 = vrot.slane %v3219, %v3861
    %v3863 = vsel %vm3772, %v3862, %v3858
    %v3864 = vlaneseq
    %v3865 = vshrl.u32 %v3864, 7
    %v3866 = vsub.s32 %v3762, %v3865
    %v3867 = vrot.slane %v3224, %v3866
    %v3868 = vlaneseq
    %v3869 = vshrl.u32 %v3868, 7
    %v3870 = vsub.s32 %v3767, %v3869
    %v3871 = vrot.slane %v3229, %v3870
    %v3872 = vsel %vm3772, %v3871, %v3867
    %v3873 = vlaneseq
    %v3874 = vshrl.u32 %v3873, 7
    %v3875 = vsub.s32 %v3762, %v3874
    %v3876 = vrot.slane %v3234, %v3875
    %v3877 = vlaneseq
    %v3878 = vshrl.u32 %v3877, 7
    %v3879 = vsub.s32 %v3767, %v3878
    %v3880 = vrot.slane %v3239, %v3879
    %v3881 = vsel %vm3772, %v3880, %v3876
    %v3882 = vlaneseq
    %v3883 = vshrl.u32 %v3882, 7
    %v3884 = vsub.s32 %v3762, %v3883
    %v3885 = vrot.slane %v3244, %v3884
    %v3886 = vlaneseq
    %v3887 = vshrl.u32 %v3886, 7
    %v3888 = vsub.s32 %v3767, %v3887
    %v3889 = vrot.slane %v3249, %v3888
    %v3890 = vsel %vm3772, %v3889, %v3885
    %v3891 = vlaneseq
    %v3892 = vshrl.u32 %v3891, 7
    %v3893 = vsub.s32 %v3762, %v3892
    %v3894 = vrot.slane %v3254, %v3893
    %v3895 = vlaneseq
    %v3896 = vshrl.u32 %v3895, 7
    %v3897 = vsub.s32 %v3767, %v3896
    %v3898 = vrot.slane %v3259, %v3897
    %v3899 = vsel %vm3772, %v3898, %v3894
    %v3900 = vlaneseq
    %v3901 = vshrl.u32 %v3900, 7
    %v3902 = vsub.s32 %v3762, %v3901
    %v3903 = vrot.slane %v3264, %v3902
    %v3904 = vlaneseq
    %v3905 = vshrl.u32 %v3904, 7
    %v3906 = vsub.s32 %v3767, %v3905
    %v3907 = vrot.slane %v3269, %v3906
    %v3908 = vsel %vm3772, %v3907, %v3903
    %v3909 = vsel %vm2479, %v3782, %v3773
    %v3910 = vsel %vm2481, %v3791, %v3909
    %v3911 = vsel %vm2483, %v3800, %v3910
    %v3912 = vsel %vm2485, %v3809, %v3911
    %v3913 = vsel %vm2487, %v3818, %v3912
    %v3914 = vsel %vm2489, %v3827, %v3913
    %v3915 = vsel %vm2491, %v3836, %v3914
    %v3916 = vsel %vm2479, %v3854, %v3845
    %v3917 = vsel %vm2481, %v3863, %v3916
    %v3918 = vsel %vm2483, %v3872, %v3917
    %v3919 = vsel %vm2485, %v3881, %v3918
    %v3920 = vsel %vm2487, %v3890, %v3919
    %v3921 = vsel %vm2489, %v3899, %v3920
    %v3922 = vsel %vm2491, %v3908, %v3921
    %v3925 = vsel %vm2502, %v3754, %v3915
    %v3926 = vsel %vm2502, %v3759, %v3922
    %3927 = vst.msk [vmem:[%s5] sm:$0xff] %vm174, %v3925
    %3928 = vst.msk [vmem:[%s5 + $0x8] sm:$0xff] %vm174, %v3926
    %v3929 = vld [vmem:[%s2] sm:$0xff]
    %v3930 = vld [vmem:[%s2 + $0x8] sm:$0xff]
    %v3931 = vmax.f32 %v3754, 0.0
    %v3932 = vmax.f32 %v3759, 0.0
    %v3933 = vmul.f32 %v3754, %v3929
    %v3934 = vmul.f32 %v3759, %v3930
    %v3935 = vsub.f32 %v3931, %v3933
    %v3936 = vsub.f32 %v3932, %v3934
    %v3937 = vand.u32 2147483647, %v3754
    %v3938 = vand.u32 2147483647, %v3759
    %v3939 = vsub.f32 0.0, %v3937
    %v3940 = vsub.f32 0.0, %v3938
    %v3941 = vmul.f32 %v3939, 1.442695
    %v3942 = vpow.pop %v3941
    %v3943 = vmul.f32 %v3940, 1.442695
    %v3944 = vpow.pop %v3943
    %v3945 = vadd.f32 %v3942, 1.0
    %v3946 = vadd.f32 %v3944, 1.0
    %v3947 = vlog2.pop %v3945
    %v3948 = vmul.f32 %v3947, 0.6931472
    %v3949 = vlog2.pop %v3946
    %v3950 = vmul.f32 %v3949, 0.6931472
    %v3951 = vadd.f32 %v3935, %v3948
    %v3952 = vadd.f32 %v3936, %v3950
    %v3953 = vsel %vm2502, %v3951, 0.0
    %v3954 = vsel %vm2502, %v3952, 0.0
    %v3955 = vadd.f32 %v3953, %v3954
    %3956 = vadd.xlane.f32.xlu0 %v3955
    %v3957 = vpop.xlane.xlu0 %3956
    %v3958 = vrot.slane %v3957, 4
    %v3959 = vadd.f32 %v3957, %v3958
    %v3960 = vrot.slane %v3959, 2
    %v3961 = vadd.f32 %v3959, %v3960
    %v3962 = vrot.slane %v3961, 1
    %v3963 = vadd.f32 %v3961, %v3962
    %s3964 = vtos %v3963
    %s3965 = smul.f32 %s3964, 0.0625
    %s3966 = scalar_lea.smem [#allocation7], 0
    %3967 = sst [smem:[%s3966]] %s3965
    // Predicated region
    $region30: #{run_base_model.1} parent=1 // pred_check
      _
    $region31: #{run_base_model.1} parent=1 // pred_check_branch
      %3969 = sbr.rel (0) target = $region33
    $region32: #{run_base_model.1} parent=1 // pred_region
      _
    $region33: #{run_base_model.1} parent=1 // pred_fallthru
      _
    // Predicated region
    $region34: #{run_base_model.1} parent=1 // pred_check
      _
    $region35: #{run_base_model.1} parent=1 // pred_check_branch
      %3971 = sbr.rel (0) target = $region37
    $region36: #{run_base_model.1} parent=1 // pred_region
      %s3973 = ssub.s32 16, 16
      %3974 = vsyncadd [#allocation4], %s3973
      %3977 = dma.smem_to_hbm [#allocation7], 16, %s6, [#allocation4]
    $region37: #{run_base_model.1} parent=1 // pred_fallthru
      _
    // Predicated region
    $region38: #{run_base_model.1} parent=1 // pred_check
      _
    $region39: #{run_base_model.1} parent=1 // pred_check_branch
      %3979 = sbr.rel (0) target = $region41
    $region40: #{run_base_model.1} parent=1 // pred_region
      _
    $region41: #{run_base_model.1} parent=1 // pred_fallthru
      _
    // Predicated region
    $region42: #{run_base_model.1} parent=1 // pred_check
      _
    $region43: #{run_base_model.1} parent=1 // pred_check_branch
      %3981 = sbr.rel (0) target = $region45
    $region44: #{run_base_model.1} parent=1 // pred_region
      %3982 = dma.done [#allocation4], 16
    $region45: #{run_base_model.1} parent=1 // pred_fallthru
      _
    %3983 = sfence
    %3984 = vsyncpa [#allocation3], 1
    %3985 = vsyncpa [#allocation6], 1
    %3986 = vsyncpa [#allocation4], 1

</llo_original>
